<compile_context>
chip_gen: v6e
topology: v6e:2x2x1
jax: 0.10.0
libtpu: 0.0.40
codegen_flags: <defaults>
</compile_context>

<pallas_src>
import functools

import jax
import jax.numpy as jnp
from jax import lax
from jax.experimental import pallas as pl
from jax.experimental.pallas import tpu as pltpu


_LANE = 128


def _vmem_limit_bytes():
    """Generation-aware scoped-VMEM budget (leave headroom for compiler scratch)."""
    cap = None
    try:
        info = pltpu.get_tpu_info()
        cap = getattr(info, "vmem_capacity_bytes", None)
    except Exception:
        cap = None
    if not cap:
        cap = 128 * 1024 * 1024
    # ~15% headroom; never request more than ~100 MiB even on 128-MiB parts.
    return int(min(100 * 1024 * 1024, cap * 0.85))


def _pick_btile(batch, n_tokens):
    """Largest divisor of `batch` whose Btile*N fills the MXU M dim (~512 rows),
    keeping the logits block's second-to-last dim legal (== batch or 8-aligned)."""
    target = max(1, 512 // max(n_tokens, 1))
    for cand in range(min(batch, target), 0, -1):
        if batch % cand == 0 and (cand == batch or cand % 8 == 0):
            return cand
    return 1


# ----------------------------------------------------------------------------
# In-kernel helpers
# ----------------------------------------------------------------------------
def _ln(x, g, b, eps=1e-5):
    """LayerNorm over last axis (PyTorch nn.LayerNorm semantics, eps=1e-5)."""
    mu = jnp.mean(x, axis=-1, keepdims=True)
    var = jnp.mean((x - mu) ** 2, axis=-1, keepdims=True)
    return (x - mu) * jax.lax.rsqrt(var + eps) * g + b


def _bf16(x):
    return x.astype(jnp.bfloat16)


# ----------------------------------------------------------------------------
# Single fused kernel: patch embed (l==0) -> encoder layer l -> head (l==last)
# Activations for Btile*N tokens stay resident in a VMEM scratch across depth.
# ----------------------------------------------------------------------------
def vit_kernel(patches_ref,
               ln1g_ref, ln1b_ref, wp_ref, bp_ref, ln2g_ref, ln2b_ref, pos_ref,
               lnag_ref, lnab_ref, wqkv_ref, bqkv_ref, wo_ref, bo_ref,
               lnfg_ref, lnfb_ref, w1_ref, b1_ref, w2_ref, b2_ref,
               lnhg_ref, lnhb_ref, wh_ref, bh_ref,
               logits_ref, x_scr,
               *, heads, btile, n):
    l = pl.program_id(1)
    dim = x_scr.shape[-1]
    dh = dim // heads
    scale = 1.0 / (dh ** 0.5)
    m_rows = btile * n

    # ---- layer 0: patch_to_embedding = LN -> Linear -> LN, then +pos_emb ----
    @pl.when(l == 0)
    def _():
        p = patches_ref[...].reshape(m_rows, -1)               # (M, patch_dim) f32
        y = _ln(p, ln1g_ref[...], ln1b_ref[...])
        h = jnp.dot(_bf16(y), wp_ref[...],                     # bf16 x bf16 -> f32
                    preferred_element_type=jnp.float32) + bp_ref[...]
        h = _ln(h, ln2g_ref[...], ln2b_ref[...])
        h = h.reshape(btile, n, dim) + pos_ref[...]            # broadcast pos per image
        x_scr[...] = h.reshape(m_rows, dim)

    x = x_scr[...]                                             # (M, dim) f32

    # ---- multi-head self-attention (pre-LN); QKV dot over all M tokens ----
    h = _ln(x, lnag_ref[...], lnab_ref[...])
    qkv = jnp.dot(_bf16(h), wqkv_ref[...],
                  preferred_element_type=jnp.float32) + bqkv_ref[...]
    wo = wo_ref[...]                                           # (dim, dim) bf16

    attn_rows = []
    for img in range(btile):                                   # static unroll
        r0 = img * n
        acc = None
        for hh in range(heads):                                # static unroll, 2-D dots
            c0 = hh * dh
            q = _bf16(qkv[r0:r0 + n, c0:c0 + dh] * scale)      # scale folded into q
            k = _bf16(qkv[r0:r0 + n, dim + c0:dim + c0 + dh])
            v = _bf16(qkv[r0:r0 + n, 2 * dim + c0:2 * dim + c0 + dh])
            s = lax.dot_general(q, k, (((1,), (1,)), ((), ())),
                                preferred_element_type=jnp.float32)   # (n, n)
            m = jnp.max(s, axis=-1, keepdims=True)
            e = jnp.exp(s - m)
            a = e * pl.reciprocal(jnp.sum(e, axis=-1, keepdims=True), approx=True)
            oh = jnp.dot(_bf16(a), v, preferred_element_type=jnp.float32)  # (n, dh)
            # Contract this head's output with its W_o rows and accumulate:
            # no head-output concat / lane relayout.
            c = jnp.dot(_bf16(oh), wo[c0:c0 + dh, :],
                        preferred_element_type=jnp.float32)               # (n, dim)
            acc = c if acc is None else acc + c
        attn_rows.append(acc)
    attn = attn_rows[0] if btile == 1 else jnp.concatenate(attn_rows, axis=0)
    x = x + attn + bo_ref[...]

    # ---- feed-forward ----
    h2 = _ln(x, lnfg_ref[...], lnfb_ref[...])
    ff = jnp.dot(_bf16(h2), w1_ref[...],
                 preferred_element_type=jnp.float32) + b1_ref[...]
    ff = jax.nn.gelu(ff, approximate=True)
    ff = jnp.dot(_bf16(ff), w2_ref[...],
                 preferred_element_type=jnp.float32) + b2_ref[...]
    x = x + ff
    x_scr[...] = x

    # ---- last layer: final encoder LN -> mean-pool over tokens -> mlp_head ----
    @pl.when(l == pl.num_programs(1) - 1)
    def _():
        y = _ln(x, lnhg_ref[...], lnhb_ref[...])
        pooled = jnp.mean(y.reshape(btile, n, dim), axis=1)    # (btile, dim)
        logits_ref[...] = (jnp.dot(_bf16(pooled), wh_ref[...],
                                   preferred_element_type=jnp.float32)
                           + bh_ref[...])


def vit_fused_call(patches, params, *, heads, btile):
    B, N, patch_dim = patches.shape
    dim = params["w_patch"].shape[1]
    enc = params["enc"]
    depth = enc["w_qkv"].shape[0]
    padded_classes = params["w_head"].shape[1]                 # multiple of 128

    full = lambda a: pl.BlockSpec(a.shape, lambda b, l, nd=None, _n=a.ndim: (0,) * _n)
    stacked = lambda a: pl.BlockSpec((None,) + a.shape[1:], lambda b, l: (l, 0, 0))

    patch_params = (params["ln1_g"], params["ln1_b"], params["w_patch"],
                    params["b_patch"], params["ln2_g"], params["ln2_b"],
                    params["pos_emb"])
    enc_names = ("ln_a_g", "ln_a_b", "w_qkv", "b_qkv", "w_o", "b_o",
                 "ln_f_g", "ln_f_b", "w_1", "b_1", "w_2", "b_2")
    enc_params = tuple(enc[nm] for nm in enc_names)
    head_params = (params["ln_h_g"], params["ln_h_b"],
                   params["w_head"], params["b_head"])

    kernel = functools.partial(vit_kernel, heads=heads, btile=btile, n=N)
    return pl.pallas_call(
        kernel,
        out_shape=jax.ShapeDtypeStruct((B, padded_classes), jnp.float32),
        grid=(B // btile, depth),
        in_specs=[pl.BlockSpec((btile, N, patch_dim), lambda b, l: (b, 0, 0))]
                 + [full(a) for a in patch_params]
                 + [stacked(a) for a in enc_params]
                 + [full(a) for a in head_params],
        out_specs=pl.BlockSpec((btile, padded_classes), lambda b, l: (b, 0)),
        scratch_shapes=[pltpu.VMEM((btile * N, dim), jnp.float32)],
        compiler_params=pltpu.CompilerParams(
            dimension_semantics=("parallel", "arbitrary"),
            vmem_limit_bytes=_vmem_limit_bytes()),
    )(patches, *patch_params, *enc_params, *head_params)


# ----------------------------------------------------------------------------
# Plain-JAX glue
# ----------------------------------------------------------------------------
def extract_patches(img, p):
    """'b c (h p1) (w p2) -> b (h w) (p1 p2 c)'."""
    B, C, H, W = img.shape
    h, w = H // p, W // p
    x = img.reshape(B, C, h, p, w, p)
    x = jnp.transpose(x, (0, 2, 4, 3, 5, 1))                   # (B, h, w, p1, p2, C)
    return x.reshape(B, h * w, p * p * C)


def init_params(key, *, image_size, patch_size, channels, dim, depth, heads,
                mlp_dim, num_classes):
    num_patches = (image_size // patch_size) ** 2
    patch_dim = channels * patch_size ** 2
    ks = iter(jax.random.split(key, 8))
    nrm = lambda k, shape, s=0.02: (s * jax.random.normal(k, shape)).astype(jnp.float32)

    padded_classes = ((num_classes + _LANE - 1) // _LANE) * _LANE
    w_head = nrm(next(ks), (dim, num_classes))
    w_head = jnp.pad(w_head, ((0, 0), (0, padded_classes - num_classes)))

    params = {
        "pos_emb": jax.random.normal(next(ks), (num_patches, dim), jnp.float32),
        "ln1_g": jnp.ones((1, patch_dim), jnp.float32),
        "ln1_b": jnp.zeros((1, patch_dim), jnp.float32),
        "w_patch": nrm(next(ks), (patch_dim, dim)).astype(jnp.bfloat16),
        "b_patch": jnp.zeros((1, dim), jnp.float32),
        "ln2_g": jnp.ones((1, dim), jnp.float32),
        "ln2_b": jnp.zeros((1, dim), jnp.float32),
        # final norm of the encoder (x-transformers Encoder final LayerNorm)
        "ln_h_g": jnp.ones((1, dim), jnp.float32),
        "ln_h_b": jnp.zeros((1, dim), jnp.float32),
        "w_head": w_head.astype(jnp.bfloat16),                 # lane-padded
        "b_head": jnp.zeros((1, padded_classes), jnp.float32),
        # --- encoder stack: weights stacked along a leading depth axis ---
        "enc": {
            "ln_a_g": jnp.ones((depth, 1, dim), jnp.float32),
            "ln_a_b": jnp.zeros((depth, 1, dim), jnp.float32),
            "w_qkv": nrm(next(ks), (depth, dim, 3 * dim)).astype(jnp.bfloat16),
            "b_qkv": jnp.zeros((depth, 1, 3 * dim), jnp.float32),
            "w_o": nrm(next(ks), (depth, dim, dim)).astype(jnp.bfloat16),
            "b_o": jnp.zeros((depth, 1, dim), jnp.float32),
            "ln_f_g": jnp.ones((depth, 1, dim), jnp.float32),
            "ln_f_b": jnp.zeros((depth, 1, dim), jnp.float32),
            "w_1": nrm(next(ks), (depth, dim, mlp_dim)).astype(jnp.bfloat16),
            "b_1": jnp.zeros((depth, 1, mlp_dim), jnp.float32),
            "w_2": nrm(next(ks), (depth, mlp_dim, dim)).astype(jnp.bfloat16),
            "b_2": jnp.zeros((depth, 1, dim), jnp.float32),
        },
    }
    return params


@functools.partial(jax.jit,
                   static_argnames=("patch_size", "heads", "num_classes", "btile"))
def vit_forward(img, params, *, patch_size, heads, num_classes, btile):
    patches = extract_patches(img, patch_size)                 # (B, N, patch_dim)
    # post_emb_norm = Identity, dropout (eval) = Identity
    logits = vit_fused_call(patches, params, heads=heads, btile=btile)
    return logits[:, :num_classes]                             # slice off lane padding


# ----------------------------------------------------------------------------
if __name__ == "__main__":
    B, C = 2, 4
    image_size, patch_size = 16, 4
    dim, depth, heads, mlp_dim, num_classes = 32, 2, 2, 64, 10

    key = jax.random.PRNGKey(0)
    k_img, k_par = jax.random.split(key)
    img = jax.random.normal(k_img, (B, C, image_size, image_size), jnp.float32)
    params = init_params(k_par, image_size=image_size, patch_size=patch_size,
                         channels=C, dim=dim, depth=depth, heads=heads,
                         mlp_dim=mlp_dim, num_classes=num_classes)

    num_patches = (image_size // patch_size) ** 2
    btile = _pick_btile(B, num_patches)

    out = vit_forward(img, params, patch_size=patch_size, heads=heads,
                      num_classes=num_classes, btile=btile)
    out = jax.block_until_ready(out)

    assert out.shape == (B, num_classes), out.shape
    assert bool(jnp.all(jnp.isfinite(out)))
    print("KERNEL_OK")
</pallas_src>

<mosaic_0001>
module attributes {stable_mosaic.version = 11 : i64} {
  func.func @vit_kernel(%arg0: i32, %arg1: i32, %arg2: memref<2x16x64xf32, #tpu.memory_space<vmem>>, %arg3: memref<1x64xf32, #tpu.memory_space<vmem>>, %arg4: memref<1x64xf32, #tpu.memory_space<vmem>>, %arg5: memref<64x32xbf16, #tpu.memory_space<vmem>>, %arg6: memref<1x32xf32, #tpu.memory_space<vmem>>, %arg7: memref<1x32xf32, #tpu.memory_space<vmem>>, %arg8: memref<1x32xf32, #tpu.memory_space<vmem>>, %arg9: memref<16x32xf32, #tpu.memory_space<vmem>>, %arg10: memref<1x1x32xf32, #tpu.memory_space<vmem>>, %arg11: memref<1x1x32xf32, #tpu.memory_space<vmem>>, %arg12: memref<1x32x96xbf16, #tpu.memory_space<vmem>>, %arg13: memref<1x1x96xf32, #tpu.memory_space<vmem>>, %arg14: memref<1x32x32xbf16, #tpu.memory_space<vmem>>, %arg15: memref<1x1x32xf32, #tpu.memory_space<vmem>>, %arg16: memref<1x1x32xf32, #tpu.memory_space<vmem>>, %arg17: memref<1x1x32xf32, #tpu.memory_space<vmem>>, %arg18: memref<1x32x64xbf16, #tpu.memory_space<vmem>>, %arg19: memref<1x1x64xf32, #tpu.memory_space<vmem>>, %arg20: memref<1x64x32xbf16, #tpu.memory_space<vmem>>, %arg21: memref<1x1x32xf32, #tpu.memory_space<vmem>>, %arg22: memref<1x32xf32, #tpu.memory_space<vmem>>, %arg23: memref<1x32xf32, #tpu.memory_space<vmem>>, %arg24: memref<32x128xbf16, #tpu.memory_space<vmem>>, %arg25: memref<1x128xf32, #tpu.memory_space<vmem>>, %arg26: memref<2x128xf32, #tpu.memory_space<vmem>>, %arg27: memref<32x32xf32, #tpu.memory_space<vmem>>) attributes {dimension_semantics = [#tpu.dimension_semantics<parallel>, #tpu.dimension_semantics<arbitrary>], iteration_bounds = array<i64: 1, 2>, scalar_prefetch = 0 : i64, scratch_operands = 1 : i64, tpu.core_type = #tpu.core_type<tc>, window_params = [{transform_indices = @transform_0, window_bounds = array<i64: 2, 16, 64>}, {pipeline_mode = #tpu.pipeline_mode<synchronous>, transform_indices = @transform_1, window_bounds = array<i64: 1, 64>}, {pipeline_mode = #tpu.pipeline_mode<synchronous>, transform_indices = @transform_2, window_bounds = array<i64: 1, 64>}, {pipeline_mode = #tpu.pipeline_mode<synchronous>, transform_indices = @transform_3, window_bounds = array<i64: 64, 32>}, {pipeline_mode = #tpu.pipeline_mode<synchronous>, transform_indices = @transform_4, window_bounds = array<i64: 1, 32>}, {pipeline_mode = #tpu.pipeline_mode<synchronous>, transform_indices = @transform_5, window_bounds = array<i64: 1, 32>}, {pipeline_mode = #tpu.pipeline_mode<synchronous>, transform_indices = @transform_6, window_bounds = array<i64: 1, 32>}, {pipeline_mode = #tpu.pipeline_mode<synchronous>, transform_indices = @transform_7, window_bounds = array<i64: 16, 32>}, {transform_indices = @transform_8, window_bounds = array<i64: 1, 1, 32>}, {transform_indices = @transform_9, window_bounds = array<i64: 1, 1, 32>}, {transform_indices = @transform_10, window_bounds = array<i64: 1, 32, 96>}, {transform_indices = @transform_11, window_bounds = array<i64: 1, 1, 96>}, {transform_indices = @transform_12, window_bounds = array<i64: 1, 32, 32>}, {transform_indices = @transform_13, window_bounds = array<i64: 1, 1, 32>}, {transform_indices = @transform_14, window_bounds = array<i64: 1, 1, 32>}, {transform_indices = @transform_15, window_bounds = array<i64: 1, 1, 32>}, {transform_indices = @transform_16, window_bounds = array<i64: 1, 32, 64>}, {transform_indices = @transform_17, window_bounds = array<i64: 1, 1, 64>}, {transform_indices = @transform_18, window_bounds = array<i64: 1, 64, 32>}, {transform_indices = @transform_19, window_bounds = array<i64: 1, 1, 32>}, {pipeline_mode = #tpu.pipeline_mode<synchronous>, transform_indices = @transform_20, window_bounds = array<i64: 1, 32>}, {pipeline_mode = #tpu.pipeline_mode<synchronous>, transform_indices = @transform_21, window_bounds = array<i64: 1, 32>}, {pipeline_mode = #tpu.pipeline_mode<synchronous>, transform_indices = @transform_22, window_bounds = array<i64: 32, 128>}, {pipeline_mode = #tpu.pipeline_mode<synchronous>, transform_indices = @transform_23, window_bounds = array<i64: 1, 128>}, {transform_indices = @transform_24, window_bounds = array<i64: 2, 128>}]} {
    %c0_i32 = arith.constant 0 : i32
    %0 = arith.cmpi eq, %arg1, %c0_i32 : i32
    %1 = arith.extui %0 : i1 to i32
    %c0_i32_0 = arith.constant 0 : i32
    %2 = arith.cmpi ne, %1, %c0_i32_0 : i32
    scf.if %2 {
      %c0_81 = arith.constant 0 : index
      %c0_82 = arith.constant 0 : index
      %c0_83 = arith.constant 0 : index
      %204 = vector.load %arg2[%c0_81, %c0_82, %c0_83] : memref<2x16x64xf32, #tpu.memory_space<vmem>>, vector<2x16x64xf32>
      %205 = vector.shape_cast %204 : vector<2x16x64xf32> to vector<32x64xf32>
      %c0_84 = arith.constant 0 : index
      %c0_85 = arith.constant 0 : index
      %206 = vector.load %arg3[%c0_84, %c0_85] : memref<1x64xf32, #tpu.memory_space<vmem>>, vector<1x64xf32>
      %c0_86 = arith.constant 0 : index
      %c0_87 = arith.constant 0 : index
      %207 = vector.load %arg4[%c0_86, %c0_87] : memref<1x64xf32, #tpu.memory_space<vmem>>, vector<1x64xf32>
      %cst_88 = arith.constant dense<0.000000e+00> : vector<32xf32>
      %208 = vector.multi_reduction <add>, %205, %cst_88 [1] : vector<32x64xf32> to vector<32xf32>
      %209 = vector.shape_cast %208 : vector<32xf32> to vector<32x1xf32>
      %cst_89 = arith.constant 6.400000e+01 : f32
      %210 = vector.broadcast %cst_89 : f32 to vector<32x1xf32>
      %211 = arith.divf %209, %210 : vector<32x1xf32>
      %212 = vector.broadcast %211 : vector<32x1xf32> to vector<32x64xf32>
      %213 = arith.subf %205, %212 : vector<32x64xf32>
      %214 = arith.mulf %213, %213 : vector<32x64xf32>
      %cst_90 = arith.constant dense<0.000000e+00> : vector<32xf32>
      %215 = vector.multi_reduction <add>, %214, %cst_90 [1] : vector<32x64xf32> to vector<32xf32>
      %216 = vector.shape_cast %215 : vector<32xf32> to vector<32x1xf32>
      %cst_91 = arith.constant 6.400000e+01 : f32
      %217 = vector.broadcast %cst_91 : f32 to vector<32x1xf32>
      %218 = arith.divf %216, %217 : vector<32x1xf32>
      %219 = vector.broadcast %211 : vector<32x1xf32> to vector<32x64xf32>
      %220 = arith.subf %205, %219 : vector<32x64xf32>
      %cst_92 = arith.constant 9.99999974E-6 : f32
      %221 = vector.broadcast %cst_92 : f32 to vector<32x1xf32>
      %222 = arith.addf %218, %221 : vector<32x1xf32>
      %223 = math.rsqrt %222 : vector<32x1xf32>
      %224 = vector.broadcast %223 : vector<32x1xf32> to vector<32x64xf32>
      %225 = arith.mulf %220, %224 : vector<32x64xf32>
      %226 = vector.broadcast %206 : vector<1x64xf32> to vector<32x64xf32>
      %227 = arith.mulf %225, %226 : vector<32x64xf32>
      %228 = vector.broadcast %207 : vector<1x64xf32> to vector<32x64xf32>
      %229 = arith.addf %227, %228 : vector<32x64xf32>
      %230 = arith.truncf %229 : vector<32x64xf32> to vector<32x64xbf16>
      %c0_93 = arith.constant 0 : index
      %c0_94 = arith.constant 0 : index
      %231 = vector.load %arg5[%c0_93, %c0_94] : memref<64x32xbf16, #tpu.memory_space<vmem>>, vector<64x32xbf16>
      %cst_95 = arith.constant dense<0.000000e+00> : vector<32x32xf32>
      %232 = tpu.matmul %230, %231, %cst_95 {dimension_numbers = #tpu.dot_dimension_numbers<[1], [0], [0], [1], [0, 0, 1, 1], [], []>} : vector<32x64xbf16>, vector<64x32xbf16>, vector<32x32xf32> -> vector<32x32xf32>
      %c0_96 = arith.constant 0 : index
      %c0_97 = arith.constant 0 : index
      %233 = vector.load %arg6[%c0_96, %c0_97] : memref<1x32xf32, #tpu.memory_space<vmem>>, vector<1x32xf32>
      %234 = vector.broadcast %233 : vector<1x32xf32> to vector<32x32xf32>
      %235 = arith.addf %232, %234 : vector<32x32xf32>
      %c0_98 = arith.constant 0 : index
      %c0_99 = arith.constant 0 : index
      %236 = vector.load %arg7[%c0_98, %c0_99] : memref<1x32xf32, #tpu.memory_space<vmem>>, vector<1x32xf32>
      %c0_100 = arith.constant 0 : index
      %c0_101 = arith.constant 0 : index
      %237 = vector.load %arg8[%c0_100, %c0_101] : memref<1x32xf32, #tpu.memory_space<vmem>>, vector<1x32xf32>
      %cst_102 = arith.constant dense<0.000000e+00> : vector<32xf32>
      %238 = vector.multi_reduction <add>, %235, %cst_102 [1] : vector<32x32xf32> to vector<32xf32>
      %239 = vector.shape_cast %238 : vector<32xf32> to vector<32x1xf32>
      %cst_103 = arith.constant 3.200000e+01 : f32
      %240 = vector.broadcast %cst_103 : f32 to vector<32x1xf32>
      %241 = arith.divf %239, %240 : vector<32x1xf32>
      %242 = vector.broadcast %241 : vector<32x1xf32> to vector<32x32xf32>
      %243 = arith.subf %235, %242 : vector<32x32xf32>
      %244 = arith.mulf %243, %243 : vector<32x32xf32>
      %cst_104 = arith.constant dense<0.000000e+00> : vector<32xf32>
      %245 = vector.multi_reduction <add>, %244, %cst_104 [1] : vector<32x32xf32> to vector<32xf32>
      %246 = vector.shape_cast %245 : vector<32xf32> to vector<32x1xf32>
      %cst_105 = arith.constant 3.200000e+01 : f32
      %247 = vector.broadcast %cst_105 : f32 to vector<32x1xf32>
      %248 = arith.divf %246, %247 : vector<32x1xf32>
      %249 = vector.broadcast %241 : vector<32x1xf32> to vector<32x32xf32>
      %250 = arith.subf %235, %249 : vector<32x32xf32>
      %cst_106 = arith.constant 9.99999974E-6 : f32
      %251 = vector.broadcast %cst_106 : f32 to vector<32x1xf32>
      %252 = arith.addf %248, %251 : vector<32x1xf32>
      %253 = math.rsqrt %252 : vector<32x1xf32>
      %254 = vector.broadcast %253 : vector<32x1xf32> to vector<32x32xf32>
      %255 = arith.mulf %250, %254 : vector<32x32xf32>
      %256 = vector.broadcast %236 : vector<1x32xf32> to vector<32x32xf32>
      %257 = arith.mulf %255, %256 : vector<32x32xf32>
      %258 = vector.broadcast %237 : vector<1x32xf32> to vector<32x32xf32>
      %259 = arith.addf %257, %258 : vector<32x32xf32>
      %260 = vector.shape_cast %259 : vector<32x32xf32> to vector<2x16x32xf32>
      %c0_107 = arith.constant 0 : index
      %c0_108 = arith.constant 0 : index
      %261 = vector.load %arg9[%c0_107, %c0_108] : memref<16x32xf32, #tpu.memory_space<vmem>>, vector<16x32xf32>
      %262 = vector.shape_cast %261 : vector<16x32xf32> to vector<1x16x32xf32>
      %263 = vector.broadcast %262 : vector<1x16x32xf32> to vector<2x16x32xf32>
      %264 = arith.addf %260, %263 : vector<2x16x32xf32>
      %265 = vector.shape_cast %264 : vector<2x16x32xf32> to vector<32x32xf32>
      %c0_109 = arith.constant 0 : index
      %c0_110 = arith.constant 0 : index
      %266 = vector.load %arg27[%c0_109, %c0_110] : memref<32x32xf32, #tpu.memory_space<vmem>>, vector<32x32xf32>
      tpu.vector_store %arg27[%c0_109, %c0_110], %265 {strides = array<i32>} : memref<32x32xf32, #tpu.memory_space<vmem>>, vector<32x32xf32>,
    } else {
    }
    %c0 = arith.constant 0 : index
    %c0_1 = arith.constant 0 : index
    %3 = vector.load %arg27[%c0, %c0_1] : memref<32x32xf32, #tpu.memory_space<vmem>>, vector<32x32xf32>
    %c0_2 = arith.constant 0 : index
    %c0_3 = arith.constant 0 : index
    %c0_4 = arith.constant 0 : index
    %4 = vector.load %arg10[%c0_2, %c0_3, %c0_4] : memref<1x1x32xf32, #tpu.memory_space<vmem>>, vector<1x1x32xf32>
    %5 = vector.shape_cast %4 : vector<1x1x32xf32> to vector<1x32xf32>
    %c0_5 = arith.constant 0 : index
    %c0_6 = arith.constant 0 : index
    %c0_7 = arith.constant 0 : index
    %6 = vector.load %arg11[%c0_5, %c0_6, %c0_7] : memref<1x1x32xf32, #tpu.memory_space<vmem>>, vector<1x1x32xf32>
    %7 = vector.shape_cast %6 : vector<1x1x32xf32> to vector<1x32xf32>
    %cst = arith.constant dense<0.000000e+00> : vector<32xf32>
    %8 = vector.multi_reduction <add>, %3, %cst [1] : vector<32x32xf32> to vector<32xf32>
    %9 = vector.shape_cast %8 : vector<32xf32> to vector<32x1xf32>
    %cst_8 = arith.constant 3.200000e+01 : f32
    %10 = vector.broadcast %cst_8 : f32 to vector<32x1xf32>
    %11 = arith.divf %9, %10 : vector<32x1xf32>
    %12 = vector.broadcast %11 : vector<32x1xf32> to vector<32x32xf32>
    %13 = arith.subf %3, %12 : vector<32x32xf32>
    %14 = arith.mulf %13, %13 : vector<32x32xf32>
    %cst_9 = arith.constant dense<0.000000e+00> : vector<32xf32>
    %15 = vector.multi_reduction <add>, %14, %cst_9 [1] : vector<32x32xf32> to vector<32xf32>
    %16 = vector.shape_cast %15 : vector<32xf32> to vector<32x1xf32>
    %cst_10 = arith.constant 3.200000e+01 : f32
    %17 = vector.broadcast %cst_10 : f32 to vector<32x1xf32>
    %18 = arith.divf %16, %17 : vector<32x1xf32>
    %19 = vector.broadcast %11 : vector<32x1xf32> to vector<32x32xf32>
    %20 = arith.subf %3, %19 : vector<32x32xf32>
    %cst_11 = arith.constant 9.99999974E-6 : f32
    %21 = vector.broadcast %cst_11 : f32 to vector<32x1xf32>
    %22 = arith.addf %18, %21 : vector<32x1xf32>
    %23 = math.rsqrt %22 : vector<32x1xf32>
    %24 = vector.broadcast %23 : vector<32x1xf32> to vector<32x32xf32>
    %25 = arith.mulf %20, %24 : vector<32x32xf32>
    %26 = vector.broadcast %5 : vector<1x32xf32> to vector<32x32xf32>
    %27 = arith.mulf %25, %26 : vector<32x32xf32>
    %28 = vector.broadcast %7 : vector<1x32xf32> to vector<32x32xf32>
    %29 = arith.addf %27, %28 : vector<32x32xf32>
    %30 = arith.truncf %29 : vector<32x32xf32> to vector<32x32xbf16>
    %c0_12 = arith.constant 0 : index
    %c0_13 = arith.constant 0 : index
    %c0_14 = arith.constant 0 : index
    %31 = vector.load %arg12[%c0_12, %c0_13, %c0_14] : memref<1x32x96xbf16, #tpu.memory_space<vmem>>, vector<1x32x96xbf16>
    %32 = vector.shape_cast %31 : vector<1x32x96xbf16> to vector<32x96xbf16>
    %cst_15 = arith.constant dense<0.000000e+00> : vector<32x96xf32>
    %33 = tpu.matmul %30, %32, %cst_15 {dimension_numbers = #tpu.dot_dimension_numbers<[1], [0], [0], [1], [0, 0, 1, 1], [], []>} : vector<32x32xbf16>, vector<32x96xbf16>, vector<32x96xf32> -> vector<32x96xf32>
    %c0_16 = arith.constant 0 : index
    %c0_17 = arith.constant 0 : index
    %c0_18 = arith.constant 0 : index
    %34 = vector.load %arg13[%c0_16, %c0_17, %c0_18] : memref<1x1x96xf32, #tpu.memory_space<vmem>>, vector<1x1x96xf32>
    %35 = vector.shape_cast %34 : vector<1x1x96xf32> to vector<1x96xf32>
    %36 = vector.broadcast %35 : vector<1x96xf32> to vector<32x96xf32>
    %37 = arith.addf %33, %36 : vector<32x96xf32>
    %c0_19 = arith.constant 0 : index
    %c0_20 = arith.constant 0 : index
    %c0_21 = arith.constant 0 : index
    %38 = vector.load %arg14[%c0_19, %c0_20, %c0_21] : memref<1x32x32xbf16, #tpu.memory_space<vmem>>, vector<1x32x32xbf16>
    %39 = vector.shape_cast %38 : vector<1x32x32xbf16> to vector<32x32xbf16>
    %40 = vector.extract_strided_slice %37 {offsets = [0, 0], sizes = [16, 16], strides = [1, 1]} : vector<32x96xf32> to vector<16x16xf32>
    %cst_22 = arith.constant 2.500000e-01 : f32
    %41 = vector.broadcast %cst_22 : f32 to vector<16x16xf32>
    %42 = arith.mulf %40, %41 : vector<16x16xf32>
    %43 = arith.truncf %42 : vector<16x16xf32> to vector<16x16xbf16>
    %44 = vector.extract_strided_slice %37 {offsets = [0, 32], sizes = [16, 16], strides = [1, 1]} : vector<32x96xf32> to vector<16x16xf32>
    %45 = arith.truncf %44 : vector<16x16xf32> to vector<16x16xbf16>
    %46 = vector.extract_strided_slice %37 {offsets = [0, 64], sizes = [16, 16], strides = [1, 1]} : vector<32x96xf32> to vector<16x16xf32>
    %47 = arith.truncf %46 : vector<16x16xf32> to vector<16x16xbf16>
    %cst_23 = arith.constant dense<0.000000e+00> : vector<16x16xf32>
    %48 = tpu.matmul %43, %45, %cst_23 {dimension_numbers = #tpu.dot_dimension_numbers<[1], [1], [0], [0], [0, 0, 1, 0], [], []>} : vector<16x16xbf16>, vector<16x16xbf16>, vector<16x16xf32> -> vector<16x16xf32>
    %cst_24 = arith.constant dense<0xFF800000> : vector<16xf32>
    %49 = vector.multi_reduction <maximumf>, %48, %cst_24 [1] : vector<16x16xf32> to vector<16xf32>
    %50 = vector.shape_cast %49 : vector<16xf32> to vector<16x1xf32>
    %51 = vector.broadcast %50 : vector<16x1xf32> to vector<16x16xf32>
    %52 = arith.subf %48, %51 : vector<16x16xf32>
    %53 = math.exp %52 : vector<16x16xf32>
    %cst_25 = arith.constant dense<0.000000e+00> : vector<16xf32>
    %54 = vector.multi_reduction <add>, %53, %cst_25 [1] : vector<16x16xf32> to vector<16xf32>
    %55 = vector.shape_cast %54 : vector<16xf32> to vector<16x1xf32>
    %56 = tpu.reciprocal %55 {approx = true} : vector<16x1xf32> -> vector<16x1xf32>
    %57 = vector.broadcast %56 : vector<16x1xf32> to vector<16x16xf32>
    %58 = arith.mulf %53, %57 : vector<16x16xf32>
    %59 = arith.truncf %58 : vector<16x16xf32> to vector<16x16xbf16>
    %cst_26 = arith.constant dense<0.000000e+00> : vector<16x16xf32>
    %60 = tpu.matmul %59, %47, %cst_26 {dimension_numbers = #tpu.dot_dimension_numbers<[1], [0], [0], [1], [0, 0, 1, 1], [], []>} : vector<16x16xbf16>, vector<16x16xbf16>, vector<16x16xf32> -> vector<16x16xf32>
    %61 = arith.truncf %60 : vector<16x16xf32> to vector<16x16xbf16>
    %62 = vector.extract_strided_slice %39 {offsets = [0, 0], sizes = [16, 32], strides = [1, 1]} : vector<32x32xbf16> to vector<16x32xbf16>
    %cst_27 = arith.constant dense<0.000000e+00> : vector<16x32xf32>
    %63 = tpu.matmul %61, %62, %cst_27 {dimension_numbers = #tpu.dot_dimension_numbers<[1], [0], [0], [1], [0, 0, 1, 1], [], []>} : vector<16x16xbf16>, vector<16x32xbf16>, vector<16x32xf32> -> vector<16x32xf32>
    %64 = vector.extract_strided_slice %37 {offsets = [0, 16], sizes = [16, 16], strides = [1, 1]} : vector<32x96xf32> to vector<16x16xf32>
    %cst_28 = arith.constant 2.500000e-01 : f32
    %65 = vector.broadcast %cst_28 : f32 to vector<16x16xf32>
    %66 = arith.mulf %64, %65 : vector<16x16xf32>
    %67 = arith.truncf %66 : vector<16x16xf32> to vector<16x16xbf16>
    %68 = vector.extract_strided_slice %37 {offsets = [0, 48], sizes = [16, 16], strides = [1, 1]} : vector<32x96xf32> to vector<16x16xf32>
    %69 = arith.truncf %68 : vector<16x16xf32> to vector<16x16xbf16>
    %70 = vector.extract_strided_slice %37 {offsets = [0, 80], sizes = [16, 16], strides = [1, 1]} : vector<32x96xf32> to vector<16x16xf32>
    %71 = arith.truncf %70 : vector<16x16xf32> to vector<16x16xbf16>
    %cst_29 = arith.constant dense<0.000000e+00> : vector<16x16xf32>
    %72 = tpu.matmul %67, %69, %cst_29 {dimension_numbers = #tpu.dot_dimension_numbers<[1], [1], [0], [0], [0, 0, 1, 0], [], []>} : vector<16x16xbf16>, vector<16x16xbf16>, vector<16x16xf32> -> vector<16x16xf32>
    %cst_30 = arith.constant dense<0xFF800000> : vector<16xf32>
    %73 = vector.multi_reduction <maximumf>, %72, %cst_30 [1] : vector<16x16xf32> to vector<16xf32>
    %74 = vector.shape_cast %73 : vector<16xf32> to vector<16x1xf32>
    %75 = vector.broadcast %74 : vector<16x1xf32> to vector<16x16xf32>
    %76 = arith.subf %72, %75 : vector<16x16xf32>
    %77 = math.exp %76 : vector<16x16xf32>
    %cst_31 = arith.constant dense<0.000000e+00> : vector<16xf32>
    %78 = vector.multi_reduction <add>, %77, %cst_31 [1] : vector<16x16xf32> to vector<16xf32>
    %79 = vector.shape_cast %78 : vector<16xf32> to vector<16x1xf32>
    %80 = tpu.reciprocal %79 {approx = true} : vector<16x1xf32> -> vector<16x1xf32>
    %81 = vector.broadcast %80 : vector<16x1xf32> to vector<16x16xf32>
    %82 = arith.mulf %77, %81 : vector<16x16xf32>
    %83 = arith.truncf %82 : vector<16x16xf32> to vector<16x16xbf16>
    %cst_32 = arith.constant dense<0.000000e+00> : vector<16x16xf32>
    %84 = tpu.matmul %83, %71, %cst_32 {dimension_numbers = #tpu.dot_dimension_numbers<[1], [0], [0], [1], [0, 0, 1, 1], [], []>} : vector<16x16xbf16>, vector<16x16xbf16>, vector<16x16xf32> -> vector<16x16xf32>
    %85 = arith.truncf %84 : vector<16x16xf32> to vector<16x16xbf16>
    %86 = vector.extract_strided_slice %39 {offsets = [16, 0], sizes = [16, 32], strides = [1, 1]} : vector<32x32xbf16> to vector<16x32xbf16>
    %cst_33 = arith.constant dense<0.000000e+00> : vector<16x32xf32>
    %87 = tpu.matmul %85, %86, %cst_33 {dimension_numbers = #tpu.dot_dimension_numbers<[1], [0], [0], [1], [0, 0, 1, 1], [], []>} : vector<16x16xbf16>, vector<16x32xbf16>, vector<16x32xf32> -> vector<16x32xf32>
    %88 = arith.addf %63, %87 : vector<16x32xf32>
    %89 = vector.extract_strided_slice %37 {offsets = [16, 0], sizes = [16, 16], strides = [1, 1]} : vector<32x96xf32> to vector<16x16xf32>
    %cst_34 = arith.constant 2.500000e-01 : f32
    %90 = vector.broadcast %cst_34 : f32 to vector<16x16xf32>
    %91 = arith.mulf %89, %90 : vector<16x16xf32>
    %92 = arith.truncf %91 : vector<16x16xf32> to vector<16x16xbf16>
    %93 = vector.extract_strided_slice %37 {offsets = [16, 32], sizes = [16, 16], strides = [1, 1]} : vector<32x96xf32> to vector<16x16xf32>
    %94 = arith.truncf %93 : vector<16x16xf32> to vector<16x16xbf16>
    %95 = vector.extract_strided_slice %37 {offsets = [16, 64], sizes = [16, 16], strides = [1, 1]} : vector<32x96xf32> to vector<16x16xf32>
    %96 = arith.truncf %95 : vector<16x16xf32> to vector<16x16xbf16>
    %cst_35 = arith.constant dense<0.000000e+00> : vector<16x16xf32>
    %97 = tpu.matmul %92, %94, %cst_35 {dimension_numbers = #tpu.dot_dimension_numbers<[1], [1], [0], [0], [0, 0, 1, 0], [], []>} : vector<16x16xbf16>, vector<16x16xbf16>, vector<16x16xf32> -> vector<16x16xf32>
    %cst_36 = arith.constant dense<0xFF800000> : vector<16xf32>
    %98 = vector.multi_reduction <maximumf>, %97, %cst_36 [1] : vector<16x16xf32> to vector<16xf32>
    %99 = vector.shape_cast %98 : vector<16xf32> to vector<16x1xf32>
    %100 = vector.broadcast %99 : vector<16x1xf32> to vector<16x16xf32>
    %101 = arith.subf %97, %100 : vector<16x16xf32>
    %102 = math.exp %101 : vector<16x16xf32>
    %cst_37 = arith.constant dense<0.000000e+00> : vector<16xf32>
    %103 = vector.multi_reduction <add>, %102, %cst_37 [1] : vector<16x16xf32> to vector<16xf32>
    %104 = vector.shape_cast %103 : vector<16xf32> to vector<16x1xf32>
    %105 = tpu.reciprocal %104 {approx = true} : vector<16x1xf32> -> vector<16x1xf32>
    %106 = vector.broadcast %105 : vector<16x1xf32> to vector<16x16xf32>
    %107 = arith.mulf %102, %106 : vector<16x16xf32>
    %108 = arith.truncf %107 : vector<16x16xf32> to vector<16x16xbf16>
    %cst_38 = arith.constant dense<0.000000e+00> : vector<16x16xf32>
    %109 = tpu.matmul %108, %96, %cst_38 {dimension_numbers = #tpu.dot_dimension_numbers<[1], [0], [0], [1], [0, 0, 1, 1], [], []>} : vector<16x16xbf16>, vector<16x16xbf16>, vector<16x16xf32> -> vector<16x16xf32>
    %110 = arith.truncf %109 : vector<16x16xf32> to vector<16x16xbf16>
    %111 = vector.extract_strided_slice %39 {offsets = [0, 0], sizes = [16, 32], strides = [1, 1]} : vector<32x32xbf16> to vector<16x32xbf16>
    %cst_39 = arith.constant dense<0.000000e+00> : vector<16x32xf32>
    %112 = tpu.matmul %110, %111, %cst_39 {dimension_numbers = #tpu.dot_dimension_numbers<[1], [0], [0], [1], [0, 0, 1, 1], [], []>} : vector<16x16xbf16>, vector<16x32xbf16>, vector<16x32xf32> -> vector<16x32xf32>
    %113 = vector.extract_strided_slice %37 {offsets = [16, 16], sizes = [16, 16], strides = [1, 1]} : vector<32x96xf32> to vector<16x16xf32>
    %cst_40 = arith.constant 2.500000e-01 : f32
    %114 = vector.broadcast %cst_40 : f32 to vector<16x16xf32>
    %115 = arith.mulf %113, %114 : vector<16x16xf32>
    %116 = arith.truncf %115 : vector<16x16xf32> to vector<16x16xbf16>
    %117 = vector.extract_strided_slice %37 {offsets = [16, 48], sizes = [16, 16], strides = [1, 1]} : vector<32x96xf32> to vector<16x16xf32>
    %118 = arith.truncf %117 : vector<16x16xf32> to vector<16x16xbf16>
    %119 = vector.extract_strided_slice %37 {offsets = [16, 80], sizes = [16, 16], strides = [1, 1]} : vector<32x96xf32> to vector<16x16xf32>
    %120 = arith.truncf %119 : vector<16x16xf32> to vector<16x16xbf16>
    %cst_41 = arith.constant dense<0.000000e+00> : vector<16x16xf32>
    %121 = tpu.matmul %116, %118, %cst_41 {dimension_numbers = #tpu.dot_dimension_numbers<[1], [1], [0], [0], [0, 0, 1, 0], [], []>} : vector<16x16xbf16>, vector<16x16xbf16>, vector<16x16xf32> -> vector<16x16xf32>
    %cst_42 = arith.constant dense<0xFF800000> : vector<16xf32>
    %122 = vector.multi_reduction <maximumf>, %121, %cst_42 [1] : vector<16x16xf32> to vector<16xf32>
    %123 = vector.shape_cast %122 : vector<16xf32> to vector<16x1xf32>
    %124 = vector.broadcast %123 : vector<16x1xf32> to vector<16x16xf32>
    %125 = arith.subf %121, %124 : vector<16x16xf32>
    %126 = math.exp %125 : vector<16x16xf32>
    %cst_43 = arith.constant dense<0.000000e+00> : vector<16xf32>
    %127 = vector.multi_reduction <add>, %126, %cst_43 [1] : vector<16x16xf32> to vector<16xf32>
    %128 = vector.shape_cast %127 : vector<16xf32> to vector<16x1xf32>
    %129 = tpu.reciprocal %128 {approx = true} : vector<16x1xf32> -> vector<16x1xf32>
    %130 = vector.broadcast %129 : vector<16x1xf32> to vector<16x16xf32>
    %131 = arith.mulf %126, %130 : vector<16x16xf32>
    %132 = arith.truncf %131 : vector<16x16xf32> to vector<16x16xbf16>
    %cst_44 = arith.constant dense<0.000000e+00> : vector<16x16xf32>
    %133 = tpu.matmul %132, %120, %cst_44 {dimension_numbers = #tpu.dot_dimension_numbers<[1], [0], [0], [1], [0, 0, 1, 1], [], []>} : vector<16x16xbf16>, vector<16x16xbf16>, vector<16x16xf32> -> vector<16x16xf32>
    %134 = arith.truncf %133 : vector<16x16xf32> to vector<16x16xbf16>
    %135 = vector.extract_strided_slice %39 {offsets = [16, 0], sizes = [16, 32], strides = [1, 1]} : vector<32x32xbf16> to vector<16x32xbf16>
    %cst_45 = arith.constant dense<0.000000e+00> : vector<16x32xf32>
    %136 = tpu.matmul %134, %135, %cst_45 {dimension_numbers = #tpu.dot_dimension_numbers<[1], [0], [0], [1], [0, 0, 1, 1], [], []>} : vector<16x16xbf16>, vector<16x32xbf16>, vector<16x32xf32> -> vector<16x32xf32>
    %137 = arith.addf %112, %136 : vector<16x32xf32>
    %138 = tpu.concatenate %88, %137 in 0 : vector<16x32xf32>, vector<16x32xf32> -> vector<32x32xf32>
    %139 = arith.addf %3, %138 : vector<32x32xf32>
    %c0_46 = arith.constant 0 : index
    %c0_47 = arith.constant 0 : index
    %c0_48 = arith.constant 0 : index
    %140 = vector.load %arg15[%c0_46, %c0_47, %c0_48] : memref<1x1x32xf32, #tpu.memory_space<vmem>>, vector<1x1x32xf32>
    %141 = vector.shape_cast %140 : vector<1x1x32xf32> to vector<1x32xf32>
    %142 = vector.broadcast %141 : vector<1x32xf32> to vector<32x32xf32>
    %143 = arith.addf %139, %142 : vector<32x32xf32>
    %c0_49 = arith.constant 0 : index
    %c0_50 = arith.constant 0 : index
    %c0_51 = arith.constant 0 : index
    %144 = vector.load %arg16[%c0_49, %c0_50, %c0_51] : memref<1x1x32xf32, #tpu.memory_space<vmem>>, vector<1x1x32xf32>
    %145 = vector.shape_cast %144 : vector<1x1x32xf32> to vector<1x32xf32>
    %c0_52 = arith.constant 0 : index
    %c0_53 = arith.constant 0 : index
    %c0_54 = arith.constant 0 : index
    %146 = vector.load %arg17[%c0_52, %c0_53, %c0_54] : memref<1x1x32xf32, #tpu.memory_space<vmem>>, vector<1x1x32xf32>
    %147 = vector.shape_cast %146 : vector<1x1x32xf32> to vector<1x32xf32>
    %cst_55 = arith.constant dense<0.000000e+00> : vector<32xf32>
    %148 = vector.multi_reduction <add>, %143, %cst_55 [1] : vector<32x32xf32> to vector<32xf32>
    %149 = vector.shape_cast %148 : vector<32xf32> to vector<32x1xf32>
    %cst_56 = arith.constant 3.200000e+01 : f32
    %150 = vector.broadcast %cst_56 : f32 to vector<32x1xf32>
    %151 = arith.divf %149, %150 : vector<32x1xf32>
    %152 = vector.broadcast %151 : vector<32x1xf32> to vector<32x32xf32>
    %153 = arith.subf %143, %152 : vector<32x32xf32>
    %154 = arith.mulf %153, %153 : vector<32x32xf32>
    %cst_57 = arith.constant dense<0.000000e+00> : vector<32xf32>
    %155 = vector.multi_reduction <add>, %154, %cst_57 [1] : vector<32x32xf32> to vector<32xf32>
    %156 = vector.shape_cast %155 : vector<32xf32> to vector<32x1xf32>
    %cst_58 = arith.constant 3.200000e+01 : f32
    %157 = vector.broadcast %cst_58 : f32 to vector<32x1xf32>
    %158 = arith.divf %156, %157 : vector<32x1xf32>
    %159 = vector.broadcast %151 : vector<32x1xf32> to vector<32x32xf32>
    %160 = arith.subf %143, %159 : vector<32x32xf32>
    %cst_59 = arith.constant 9.99999974E-6 : f32
    %161 = vector.broadcast %cst_59 : f32 to vector<32x1xf32>
    %162 = arith.addf %158, %161 : vector<32x1xf32>
    %163 = math.rsqrt %162 : vector<32x1xf32>
    %164 = vector.broadcast %163 : vector<32x1xf32> to vector<32x32xf32>
    %165 = arith.mulf %160, %164 : vector<32x32xf32>
    %166 = vector.broadcast %145 : vector<1x32xf32> to vector<32x32xf32>
    %167 = arith.mulf %165, %166 : vector<32x32xf32>
    %168 = vector.broadcast %147 : vector<1x32xf32> to vector<32x32xf32>
    %169 = arith.addf %167, %168 : vector<32x32xf32>
    %170 = arith.truncf %169 : vector<32x32xf32> to vector<32x32xbf16>
    %c0_60 = arith.constant 0 : index
    %c0_61 = arith.constant 0 : index
    %c0_62 = arith.constant 0 : index
    %171 = vector.load %arg18[%c0_60, %c0_61, %c0_62] : memref<1x32x64xbf16, #tpu.memory_space<vmem>>, vector<1x32x64xbf16>
    %172 = vector.shape_cast %171 : vector<1x32x64xbf16> to vector<32x64xbf16>
    %cst_63 = arith.constant dense<0.000000e+00> : vector<32x64xf32>
    %173 = tpu.matmul %170, %172, %cst_63 {dimension_numbers = #tpu.dot_dimension_numbers<[1], [0], [0], [1], [0, 0, 1, 1], [], []>} : vector<32x32xbf16>, vector<32x64xbf16>, vector<32x64xf32> -> vector<32x64xf32>
    %c0_64 = arith.constant 0 : index
    %c0_65 = arith.constant 0 : index
    %c0_66 = arith.constant 0 : index
    %174 = vector.load %arg19[%c0_64, %c0_65, %c0_66] : memref<1x1x64xf32, #tpu.memory_space<vmem>>, vector<1x1x64xf32>
    %175 = vector.shape_cast %174 : vector<1x1x64xf32> to vector<1x64xf32>
    %176 = vector.broadcast %175 : vector<1x64xf32> to vector<32x64xf32>
    %177 = arith.addf %173, %176 : vector<32x64xf32>
    %178 = arith.mulf %177, %177 : vector<32x64xf32>
    %179 = arith.mulf %177, %178 : vector<32x64xf32>
    %cst_67 = arith.constant 4.471500e-02 : f32
    %180 = vector.broadcast %cst_67 : f32 to vector<32x64xf32>
    %181 = arith.mulf %180, %179 : vector<32x64xf32>
    %182 = arith.addf %177, %181 : vector<32x64xf32>
    %cst_68 = arith.constant 0.797884583 : f32
    %183 = vector.broadcast %cst_68 : f32 to vector<32x64xf32>
    %184 = arith.mulf %183, %182 : vector<32x64xf32>
    %185 = math.tanh %184 : vector<32x64xf32>
    %cst_69 = arith.constant 1.000000e+00 : f32
    %186 = vector.broadcast %cst_69 : f32 to vector<32x64xf32>
    %187 = arith.addf %186, %185 : vector<32x64xf32>
    %cst_70 = arith.constant 5.000000e-01 : f32
    %188 = vector.broadcast %cst_70 : f32 to vector<32x64xf32>
    %189 = arith.mulf %188, %187 : vector<32x64xf32>
    %190 = arith.mulf %177, %189 : vector<32x64xf32>
    %191 = arith.truncf %190 : vector<32x64xf32> to vector<32x64xbf16>
    %c0_71 = arith.constant 0 : index
    %c0_72 = arith.constant 0 : index
    %c0_73 = arith.constant 0 : index
    %192 = vector.load %arg20[%c0_71, %c0_72, %c0_73] : memref<1x64x32xbf16, #tpu.memory_space<vmem>>, vector<1x64x32xbf16>
    %193 = vector.shape_cast %192 : vector<1x64x32xbf16> to vector<64x32xbf16>
    %cst_74 = arith.constant dense<0.000000e+00> : vector<32x32xf32>
    %194 = tpu.matmul %191, %193, %cst_74 {dimension_numbers = #tpu.dot_dimension_numbers<[1], [0], [0], [1], [0, 0, 1, 1], [], []>} : vector<32x64xbf16>, vector<64x32xbf16>, vector<32x32xf32> -> vector<32x32xf32>
    %c0_75 = arith.constant 0 : index
    %c0_76 = arith.constant 0 : index
    %c0_77 = arith.constant 0 : index
    %195 = vector.load %arg21[%c0_75, %c0_76, %c0_77] : memref<1x1x32xf32, #tpu.memory_space<vmem>>, vector<1x1x32xf32>
    %196 = vector.shape_cast %195 : vector<1x1x32xf32> to vector<1x32xf32>
    %197 = vector.broadcast %196 : vector<1x32xf32> to vector<32x32xf32>
    %198 = arith.addf %194, %197 : vector<32x32xf32>
    %199 = arith.addf %143, %198 : vector<32x32xf32>
    %c0_78 = arith.constant 0 : index
    %c0_79 = arith.constant 0 : index
    %200 = vector.load %arg27[%c0_78, %c0_79] : memref<32x32xf32, #tpu.memory_space<vmem>>, vector<32x32xf32>
    tpu.vector_store %arg27[%c0_78, %c0_79], %199 {strides = array<i32>} : memref<32x32xf32, #tpu.memory_space<vmem>>, vector<32x32xf32>,
    %c1_i32 = arith.constant 1 : i32
    %201 = arith.cmpi eq, %arg1, %c1_i32 : i32
    %202 = arith.extui %201 : i1 to i32
    %c0_i32_80 = arith.constant 0 : i32
    %203 = arith.cmpi ne, %202, %c0_i32_80 : i32
    scf.if %203 {
      %c0_81 = arith.constant 0 : index
      %c0_82 = arith.constant 0 : index
      %204 = vector.load %arg22[%c0_81, %c0_82] : memref<1x32xf32, #tpu.memory_space<vmem>>, vector<1x32xf32>
      %c0_83 = arith.constant 0 : index
      %c0_84 = arith.constant 0 : index
      %205 = vector.load %arg23[%c0_83, %c0_84] : memref<1x32xf32, #tpu.memory_space<vmem>>, vector<1x32xf32>
      %cst_85 = arith.constant dense<0.000000e+00> : vector<32xf32>
      %206 = vector.multi_reduction <add>, %199, %cst_85 [1] : vector<32x32xf32> to vector<32xf32>
      %207 = vector.shape_cast %206 : vector<32xf32> to vector<32x1xf32>
      %cst_86 = arith.constant 3.200000e+01 : f32
      %208 = vector.broadcast %cst_86 : f32 to vector<32x1xf32>
      %209 = arith.divf %207, %208 : vector<32x1xf32>
      %210 = vector.broadcast %209 : vector<32x1xf32> to vector<32x32xf32>
      %211 = arith.subf %199, %210 : vector<32x32xf32>
      %212 = arith.mulf %211, %211 : vector<32x32xf32>
      %cst_87 = arith.constant dense<0.000000e+00> : vector<32xf32>
      %213 = vector.multi_reduction <add>, %212, %cst_87 [1] : vector<32x32xf32> to vector<32xf32>
      %214 = vector.shape_cast %213 : vector<32xf32> to vector<32x1xf32>
      %cst_88 = arith.constant 3.200000e+01 : f32
      %215 = vector.broadcast %cst_88 : f32 to vector<32x1xf32>
      %216 = arith.divf %214, %215 : vector<32x1xf32>
      %217 = vector.broadcast %209 : vector<32x1xf32> to vector<32x32xf32>
      %218 = arith.subf %199, %217 : vector<32x32xf32>
      %cst_89 = arith.constant 9.99999974E-6 : f32
      %219 = vector.broadcast %cst_89 : f32 to vector<32x1xf32>
      %220 = arith.addf %216, %219 : vector<32x1xf32>
      %221 = math.rsqrt %220 : vector<32x1xf32>
      %222 = vector.broadcast %221 : vector<32x1xf32> to vector<32x32xf32>
      %223 = arith.mulf %218, %222 : vector<32x32xf32>
      %224 = vector.broadcast %204 : vector<1x32xf32> to vector<32x32xf32>
      %225 = arith.mulf %223, %224 : vector<32x32xf32>
      %226 = vector.broadcast %205 : vector<1x32xf32> to vector<32x32xf32>
      %227 = arith.addf %225, %226 : vector<32x32xf32>
      %228 = vector.shape_cast %227 : vector<32x32xf32> to vector<2x16x32xf32>
      %cst_90 = arith.constant dense<0.000000e+00> : vector<2x32xf32>
      %229 = vector.multi_reduction <add>, %228, %cst_90 [1] : vector<2x16x32xf32> to vector<2x32xf32>
      %cst_91 = arith.constant 1.600000e+01 : f32
      %230 = vector.broadcast %cst_91 : f32 to vector<2x32xf32>
      %231 = arith.divf %229, %230 : vector<2x32xf32>
      %232 = arith.truncf %231 : vector<2x32xf32> to vector<2x32xbf16>
      %c0_92 = arith.constant 0 : index
      %c0_93 = arith.constant 0 : index
      %233 = vector.load %arg24[%c0_92, %c0_93] : memref<32x128xbf16, #tpu.memory_space<vmem>>, vector<32x128xbf16>
      %cst_94 = arith.constant dense<0.000000e+00> : vector<2x128xf32>
      %234 = tpu.matmul %232, %233, %cst_94 {dimension_numbers = #tpu.dot_dimension_numbers<[1], [0], [0], [1], [0, 0, 1, 1], [], []>} : vector<2x32xbf16>, vector<32x128xbf16>, vector<2x128xf32> -> vector<2x128xf32>
      %c0_95 = arith.constant 0 : index
      %c0_96 = arith.constant 0 : index
      %235 = vector.load %arg25[%c0_95, %c0_96] : memref<1x128xf32, #tpu.memory_space<vmem>>, vector<1x128xf32>
      %236 = vector.broadcast %235 : vector<1x128xf32> to vector<2x128xf32>
      %237 = arith.addf %234, %236 : vector<2x128xf32>
      %c0_97 = arith.constant 0 : index
      %c0_98 = arith.constant 0 : index
      %238 = vector.load %arg26[%c0_97, %c0_98] : memref<2x128xf32, #tpu.memory_space<vmem>>, vector<2x128xf32>
      tpu.vector_store %arg26[%c0_97, %c0_98], %237 {strides = array<i32>} : memref<2x128xf32, #tpu.memory_space<vmem>>, vector<2x128xf32>,
    } else {
    }
    return
  }
  func.func @transform_0(%arg0: i32, %arg1: i32) -> (i32, i32, i32) {
    %c0_i32 = arith.constant 0 : i32
    %c0_i32_0 = arith.constant 0 : i32
    %c0_i32_1 = arith.constant 0 : i32
    return %arg0, %c0_i32, %c0_i32_0 : i32, i32, i32
  }
  func.func @transform_1(%arg0: i32, %arg1: i32) -> (i32, i32) {
    %c0_i32 = arith.constant 0 : i32
    %c0_i32_0 = arith.constant 0 : i32
    %c0_i32_1 = arith.constant 0 : i32
    return %c0_i32, %c0_i32_0 : i32, i32
  }
  func.func @transform_2(%arg0: i32, %arg1: i32) -> (i32, i32) {
    %c0_i32 = arith.constant 0 : i32
    %c0_i32_0 = arith.constant 0 : i32
    %c0_i32_1 = arith.constant 0 : i32
    return %c0_i32, %c0_i32_0 : i32, i32
  }
  func.func @transform_3(%arg0: i32, %arg1: i32) -> (i32, i32) {
    %c0_i32 = arith.constant 0 : i32
    %c0_i32_0 = arith.constant 0 : i32
    %c0_i32_1 = arith.constant 0 : i32
    return %c0_i32, %c0_i32_0 : i32, i32
  }
  func.func @transform_4(%arg0: i32, %arg1: i32) -> (i32, i32) {
    %c0_i32 = arith.constant 0 : i32
    %c0_i32_0 = arith.constant 0 : i32
    %c0_i32_1 = arith.constant 0 : i32
    return %c0_i32, %c0_i32_0 : i32, i32
  }
  func.func @transform_5(%arg0: i32, %arg1: i32) -> (i32, i32) {
    %c0_i32 = arith.constant 0 : i32
    %c0_i32_0 = arith.constant 0 : i32
    %c0_i32_1 = arith.constant 0 : i32
    return %c0_i32, %c0_i32_0 : i32, i32
  }
  func.func @transform_6(%arg0: i32, %arg1: i32) -> (i32, i32) {
    %c0_i32 = arith.constant 0 : i32
    %c0_i32_0 = arith.constant 0 : i32
    %c0_i32_1 = arith.constant 0 : i32
    return %c0_i32, %c0_i32_0 : i32, i32
  }
  func.func @transform_7(%arg0: i32, %arg1: i32) -> (i32, i32) {
    %c0_i32 = arith.constant 0 : i32
    %c0_i32_0 = arith.constant 0 : i32
    %c0_i32_1 = arith.constant 0 : i32
    return %c0_i32, %c0_i32_0 : i32, i32
  }
  func.func @transform_8(%arg0: i32, %arg1: i32) -> (i32, i32, i32) {
    %c0_i32 = arith.constant 0 : i32
    %c0_i32_0 = arith.constant 0 : i32
    %c0_i32_1 = arith.constant 0 : i32
    return %arg1, %c0_i32, %c0_i32_0 : i32, i32, i32
  }
  func.func @transform_9(%arg0: i32, %arg1: i32) -> (i32, i32, i32) {
    %c0_i32 = arith.constant 0 : i32
    %c0_i32_0 = arith.constant 0 : i32
    %c0_i32_1 = arith.constant 0 : i32
    return %arg1, %c0_i32, %c0_i32_0 : i32, i32, i32
  }
  func.func @transform_10(%arg0: i32, %arg1: i32) -> (i32, i32, i32) {
    %c0_i32 = arith.constant 0 : i32
    %c0_i32_0 = arith.constant 0 : i32
    %c0_i32_1 = arith.constant 0 : i32
    return %arg1, %c0_i32, %c0_i32_0 : i32, i32, i32
  }
  func.func @transform_11(%arg0: i32, %arg1: i32) -> (i32, i32, i32) {
    %c0_i32 = arith.constant 0 : i32
    %c0_i32_0 = arith.constant 0 : i32
    %c0_i32_1 = arith.constant 0 : i32
    return %arg1, %c0_i32, %c0_i32_0 : i32, i32, i32
  }
  func.func @transform_12(%arg0: i32, %arg1: i32) -> (i32, i32, i32) {
    %c0_i32 = arith.constant 0 : i32
    %c0_i32_0 = arith.constant 0 : i32
    %c0_i32_1 = arith.constant 0 : i32
    return %arg1, %c0_i32, %c0_i32_0 : i32, i32, i32
  }
  func.func @transform_13(%arg0: i32, %arg1: i32) -> (i32, i32, i32) {
    %c0_i32 = arith.constant 0 : i32
    %c0_i32_0 = arith.constant 0 : i32
    %c0_i32_1 = arith.constant 0 : i32
    return %arg1, %c0_i32, %c0_i32_0 : i32, i32, i32
  }
  func.func @transform_14(%arg0: i32, %arg1: i32) -> (i32, i32, i32) {
    %c0_i32 = arith.constant 0 : i32
    %c0_i32_0 = arith.constant 0 : i32
    %c0_i32_1 = arith.constant 0 : i32
    return %arg1, %c0_i32, %c0_i32_0 : i32, i32, i32
  }
  func.func @transform_15(%arg0: i32, %arg1: i32) -> (i32, i32, i32) {
    %c0_i32 = arith.constant 0 : i32
    %c0_i32_0 = arith.constant 0 : i32
    %c0_i32_1 = arith.constant 0 : i32
    return %arg1, %c0_i32, %c0_i32_0 : i32, i32, i32
  }
  func.func @transform_16(%arg0: i32, %arg1: i32) -> (i32, i32, i32) {
    %c0_i32 = arith.constant 0 : i32
    %c0_i32_0 = arith.constant 0 : i32
    %c0_i32_1 = arith.constant 0 : i32
    return %arg1, %c0_i32, %c0_i32_0 : i32, i32, i32
  }
  func.func @transform_17(%arg0: i32, %arg1: i32) -> (i32, i32, i32) {
    %c0_i32 = arith.constant 0 : i32
    %c0_i32_0 = arith.constant 0 : i32
    %c0_i32_1 = arith.constant 0 : i32
    return %arg1, %c0_i32, %c0_i32_0 : i32, i32, i32
  }
  func.func @transform_18(%arg0: i32, %arg1: i32) -> (i32, i32, i32) {
    %c0_i32 = arith.constant 0 : i32
    %c0_i32_0 = arith.constant 0 : i32
    %c0_i32_1 = arith.constant 0 : i32
    return %arg1, %c0_i32, %c0_i32_0 : i32, i32, i32
  }
  func.func @transform_19(%arg0: i32, %arg1: i32) -> (i32, i32, i32) {
    %c0_i32 = arith.constant 0 : i32
    %c0_i32_0 = arith.constant 0 : i32
    %c0_i32_1 = arith.constant 0 : i32
    return %arg1, %c0_i32, %c0_i32_0 : i32, i32, i32
  }
  func.func @transform_20(%arg0: i32, %arg1: i32) -> (i32, i32) {
    %c0_i32 = arith.constant 0 : i32
    %c0_i32_0 = arith.constant 0 : i32
    %c0_i32_1 = arith.constant 0 : i32
    return %c0_i32, %c0_i32_0 : i32, i32
  }
  func.func @transform_21(%arg0: i32, %arg1: i32) -> (i32, i32) {
    %c0_i32 = arith.constant 0 : i32
    %c0_i32_0 = arith.constant 0 : i32
    %c0_i32_1 = arith.constant 0 : i32
    return %c0_i32, %c0_i32_0 : i32, i32
  }
  func.func @transform_22(%arg0: i32, %arg1: i32) -> (i32, i32) {
    %c0_i32 = arith.constant 0 : i32
    %c0_i32_0 = arith.constant 0 : i32
    %c0_i32_1 = arith.constant 0 : i32
    return %c0_i32, %c0_i32_0 : i32, i32
  }
  func.func @transform_23(%arg0: i32, %arg1: i32) -> (i32, i32) {
    %c0_i32 = arith.constant 0 : i32
    %c0_i32_0 = arith.constant 0 : i32
    %c0_i32_1 = arith.constant 0 : i32
    return %c0_i32, %c0_i32_0 : i32, i32
  }
  func.func @transform_24(%arg0: i32, %arg1: i32) -> (i32, i32) {
    %c0_i32 = arith.constant 0 : i32
    %c0_i32_0 = arith.constant 0 : i32
    return %arg0, %c0_i32 : i32, i32
  }
}

</mosaic_0001>

<llo_original>
// kernel: vit_forward.1
$region0: #{vit_forward.1}
  #allocation0 [shape = 'u32[]', space=smem, size = 0x4, offset = 0x4, fixed_abs, tag = 'smem constant byte address 0x4 - core index']
  #allocation1 [shape = 'u32[144,128]{1,0:T(1,128)}', space=vmem, size = 0x12000, scoped, tag = 'internal scratch']
  #allocation2 [shape = 'f32[32,32]{1,0:T(8,128)}', space=vmem, size = 0x4000, scoped, tag = 'scratch operand']
  %s0 = inlined_call_operand.vmem [shape: f32[2,16,64], index: 0, kind: input, shape index: {}]
  %s1 = inlined_call_operand.vmem [shape: f32[1,64], index: 1, kind: input, shape index: {}]
  %s2 = inlined_call_operand.vmem [shape: f32[1,64], index: 2, kind: input, shape index: {}]
  %s3 = inlined_call_operand.vmem [shape: bf16[64,32], index: 3, kind: input, shape index: {}]
  %s4 = inlined_call_operand.vmem [shape: f32[1,32], index: 4, kind: input, shape index: {}]
  %s5 = inlined_call_operand.vmem [shape: f32[1,32], index: 5, kind: input, shape index: {}]
  %s6 = inlined_call_operand.vmem [shape: f32[1,32], index: 6, kind: input, shape index: {}]
  %s7 = inlined_call_operand.vmem [shape: f32[16,32], index: 7, kind: input, shape index: {}]
  %s8 = inlined_call_operand.vmem [shape: f32[2,1,32], index: 8, kind: input, shape index: {}]
  %s9 = inlined_call_operand.vmem [shape: f32[2,1,32], index: 9, kind: input, shape index: {}]
  %s10 = inlined_call_operand.vmem [shape: bf16[2,32,96], index: 10, kind: input, shape index: {}]
  %s11 = inlined_call_operand.vmem [shape: f32[2,1,96], index: 11, kind: input, shape index: {}]
  %s12 = inlined_call_operand.vmem [shape: bf16[2,32,32], index: 12, kind: input, shape index: {}]
  %s13 = inlined_call_operand.vmem [shape: f32[2,1,32], index: 13, kind: input, shape index: {}]
  %s14 = inlined_call_operand.vmem [shape: f32[2,1,32], index: 14, kind: input, shape index: {}]
  %s15 = inlined_call_operand.vmem [shape: f32[2,1,32], index: 15, kind: input, shape index: {}]
  %s16 = inlined_call_operand.vmem [shape: bf16[2,32,64], index: 16, kind: input, shape index: {}]
  %s17 = inlined_call_operand.vmem [shape: f32[2,1,64], index: 17, kind: input, shape index: {}]
  %s18 = inlined_call_operand.vmem [shape: bf16[2,64,32], index: 18, kind: input, shape index: {}]
  %s19 = inlined_call_operand.vmem [shape: f32[2,1,32], index: 19, kind: input, shape index: {}]
  %s20 = inlined_call_operand.vmem [shape: f32[1,32], index: 20, kind: input, shape index: {}]
  %s21 = inlined_call_operand.vmem [shape: f32[1,32], index: 21, kind: input, shape index: {}]
  %s22 = inlined_call_operand.vmem [shape: bf16[32,128], index: 22, kind: input, shape index: {}]
  %s23 = inlined_call_operand.vmem [shape: f32[1,128], index: 23, kind: input, shape index: {}]
  %s24 = inlined_call_operand.hbm [shape: f32[2,128], index: 24, kind: output, shape index: {}]
  %s25 = sld [smem:[#allocation0]]
  $region137: #{vit_forward.1} parent=0
    _
  %s27 = ssub.s32 1, %s25
  %s28 = scalar_select 0, %s27, %s25
  $region1: #{vit_forward.1} parent=0
    #allocation3 [shape = 'u8[1024]{0}', space=vmem, size = 0x400, scoped, tag = 'output window, operand 0, single buffered']
    #allocation4 [shape = 's32[2]{0}', space=sflag, size = 0x8, scoped, tag = 'scoped memory for vit_forward.1']
    %29 = vsyncpa [#allocation4], 0
    loop: start=0, step=1, limit=4
    $region2: #{vit_forward.1} parent=1 // loop_pre_header
      _
    $region3: #{vit_forward.1} parent=1 // loop_header
      %s31 = sphi 0, %s35
      %p32 = scmp.ge.s32.totalorder %s31, 4
      %s38 = sphi 0, %s50
      %s39 = sphi 0, %s46
      %s40 = sphi 0, %s38
      %s41 = sphi 0, %s39
      %s42 = sphi 0, %s40
      %s43 = sphi 0, %s41
      %s53 = sphi 0, %s55
      %s56 = sphi 0, %s53
      %s57 = sphi 0, %s56
      %s73 = sphi 0, %s57
      %s77 = sphi 0, %s77
      %s79 = sphi 0, %s77
      %s80 = sphi 0, %s79
      %s94 = sphi 0, %s80
      %s98 = sphi 0, %s98
      %s100 = sphi 0, %s98
      %s101 = sphi 0, %s100
      %s115 = sphi 0, %s101
      %s119 = sphi 0, %s119
      %s121 = sphi 0, %s119
      %s122 = sphi 0, %s121
      %s136 = sphi 0, %s122
      %s140 = sphi 0, %s140
      %s142 = sphi 0, %s140
      %s143 = sphi 0, %s142
      %s157 = sphi 0, %s143
      %s161 = sphi 0, %s161
      %s163 = sphi 0, %s161
      %s164 = sphi 0, %s163
      %s178 = sphi 0, %s164
      %s182 = sphi 0, %s182
      %s184 = sphi 0, %s182
      %s185 = sphi 0, %s184
      %s199 = sphi 0, %s185
      %s203 = sphi 0, %s203
      %s205 = sphi 0, %s203
      %s206 = sphi 0, %s205
      %s220 = sphi 0, %s206
      %s226 = sphi 0, %s228
      %s229 = sphi 0, %s226
      %s230 = sphi 0, %s229
      %s246 = sphi 0, %s230
      %s252 = sphi 0, %s254
      %s255 = sphi 0, %s252
      %s256 = sphi 0, %s255
      %s272 = sphi 0, %s256
      %s278 = sphi 0, %s280
      %s281 = sphi 0, %s278
      %s282 = sphi 0, %s281
      %s298 = sphi 0, %s282
      %s304 = sphi 0, %s306
      %s307 = sphi 0, %s304
      %s308 = sphi 0, %s307
      %s324 = sphi 0, %s308
      %s330 = sphi 0, %s332
      %s333 = sphi 0, %s330
      %s334 = sphi 0, %s333
      %s350 = sphi 0, %s334
      %s356 = sphi 0, %s358
      %s359 = sphi 0, %s356
      %s360 = sphi 0, %s359
      %s376 = sphi 0, %s360
      %s382 = sphi 0, %s384
      %s385 = sphi 0, %s382
      %s386 = sphi 0, %s385
      %s402 = sphi 0, %s386
      %s408 = sphi 0, %s410
      %s411 = sphi 0, %s408
      %s412 = sphi 0, %s411
      %s428 = sphi 0, %s412
      %s434 = sphi 0, %s436
      %s437 = sphi 0, %s434
      %s438 = sphi 0, %s437
      %s454 = sphi 0, %s438
      %s460 = sphi 0, %s462
      %s463 = sphi 0, %s460
      %s464 = sphi 0, %s463
      %s480 = sphi 0, %s464
      %s486 = sphi 0, %s488
      %s489 = sphi 0, %s486
      %s490 = sphi 0, %s489
      %s506 = sphi 0, %s490
      %s512 = sphi 0, %s514
      %s515 = sphi 0, %s512
      %s516 = sphi 0, %s515
      %s532 = sphi 0, %s516
      %s536 = sphi 0, %s536
      %s538 = sphi 0, %s536
      %s539 = sphi 0, %s538
      %s553 = sphi 0, %s539
      %s557 = sphi 0, %s557
      %s559 = sphi 0, %s557
      %s560 = sphi 0, %s559
      %s574 = sphi 0, %s560
      %s578 = sphi 0, %s578
      %s580 = sphi 0, %s578
      %s581 = sphi 0, %s580
      %s595 = sphi 0, %s581
      %s599 = sphi 0, %s599
      %s601 = sphi 0, %s599
      %s602 = sphi 0, %s601
      %s616 = sphi 0, %s602
      %s622 = sphi 0, %s624
      %s625 = sphi 0, %s622
      %s626 = sphi 0, %s625
      %s642 = sphi 0, %s626
    $region4: #{vit_forward.1} parent=1 // loop_header_branch
      %34 = sbr.rel (%p32) target = $region8
    $region5: #{vit_forward.1} parent=1 // loop_body
      %s36 = ssub.s32 %s31, 1
      %s37 = ssub.s32 %s31, 2
      %s44 = sadd.s32 1, %s39
      %p45 = scmp.ge.s32.totalorder %s44, 2
      %s46 = scalar_select %p45, 0, %s44
      %s47 = sadd.s32 1, %s38
      %s48 = scalar_select %p45, %s47, %s38
      %p49 = scmp.ge.s32.totalorder %s48, 1
      %s50 = scalar_select %p49, 0, %s48
      %s51 = ssub.s32 %s38, %s50
      %p52 = scmp.eq.s32.totalorder %s51, 0
      %s54 = sadd.s32 %s53, 1
      %s55 = scalar_select %p52, %s53, %s54
      %p58 = pneg %p52
      %p59 = scmp.eq.s32.totalorder %s31, 1
      %p60 = por %p58, %p59
      %p61 = scmp.ne.s32.totalorder %s53, %s56
      %p62 = scmp.eq.s32.totalorder %s31, 0
      %p63 = por %p61, %p62
      %p64 = scmp.ne.s32.totalorder %s53, %s56
      %p65 = scmp.eq.s32.totalorder %s36, 1
      %p66 = por %p64, %p65
      %p67 = scmp.ne.s32.totalorder %s56, %s57
      %p68 = scmp.eq.s32.totalorder %s36, 0
      %p69 = por %p67, %p68
      %p70 = scmp.ne.s32.totalorder %s56, %s57
      %p71 = scmp.eq.s32.totalorder %s37, 1
      %p72 = por %p70, %p71
      %p74 = scmp.ne.s32.totalorder %s57, %s73
      %p75 = scmp.eq.s32.totalorder %s37, 0
      %p76 = por %p74, %p75
      %s78 = sadd.s32 %s77, 1
      %p81 = scmp.eq.s32.totalorder %s31, 1
      %p82 = scmp.ne.s32.totalorder %s77, %s79
      %p83 = scmp.eq.s32.totalorder %s31, 0
      %p84 = por %p82, %p83
      %p85 = scmp.ne.s32.totalorder %s77, %s79
      %p86 = scmp.eq.s32.totalorder %s36, 1
      %p87 = por %p85, %p86
      %p88 = scmp.ne.s32.totalorder %s79, %s80
      %p89 = scmp.eq.s32.totalorder %s36, 0
      %p90 = por %p88, %p89
      %p91 = scmp.ne.s32.totalorder %s79, %s80
      %p92 = scmp.eq.s32.totalorder %s37, 1
      %p93 = por %p91, %p92
      %p95 = scmp.ne.s32.totalorder %s80, %s94
      %p96 = scmp.eq.s32.totalorder %s37, 0
      %p97 = por %p95, %p96
      %s99 = sadd.s32 %s98, 1
      %p102 = scmp.eq.s32.totalorder %s31, 1
      %p103 = scmp.ne.s32.totalorder %s98, %s100
      %p104 = scmp.eq.s32.totalorder %s31, 0
      %p105 = por %p103, %p104
      %p106 = scmp.ne.s32.totalorder %s98, %s100
      %p107 = scmp.eq.s32.totalorder %s36, 1
      %p108 = por %p106, %p107
      %p109 = scmp.ne.s32.totalorder %s100, %s101
      %p110 = scmp.eq.s32.totalorder %s36, 0
      %p111 = por %p109, %p110
      %p112 = scmp.ne.s32.totalorder %s100, %s101
      %p113 = scmp.eq.s32.totalorder %s37, 1
      %p114 = por %p112, %p113
      %p116 = scmp.ne.s32.totalorder %s101, %s115
      %p117 = scmp.eq.s32.totalorder %s37, 0
      %p118 = por %p116, %p117
      %s120 = sadd.s32 %s119, 1
      %p123 = scmp.eq.s32.totalorder %s31, 1
      %p124 = scmp.ne.s32.totalorder %s119, %s121
      %p125 = scmp.eq.s32.totalorder %s31, 0
      %p126 = por %p124, %p125
      %p127 = scmp.ne.s32.totalorder %s119, %s121
      %p128 = scmp.eq.s32.totalorder %s36, 1
      %p129 = por %p127, %p128
      %p130 = scmp.ne.s32.totalorder %s121, %s122
      %p131 = scmp.eq.s32.totalorder %s36, 0
      %p132 = por %p130, %p131
      %p133 = scmp.ne.s32.totalorder %s121, %s122
      %p134 = scmp.eq.s32.totalorder %s37, 1
      %p135 = por %p133, %p134
      %p137 = scmp.ne.s32.totalorder %s122, %s136
      %p138 = scmp.eq.s32.totalorder %s37, 0
      %p139 = por %p137, %p138
      %s141 = sadd.s32 %s140, 1
      %p144 = scmp.eq.s32.totalorder %s31, 1
      %p145 = scmp.ne.s32.totalorder %s140, %s142
      %p146 = scmp.eq.s32.totalorder %s31, 0
      %p147 = por %p145, %p146
      %p148 = scmp.ne.s32.totalorder %s140, %s142
      %p149 = scmp.eq.s32.totalorder %s36, 1
      %p150 = por %p148, %p149
      %p151 = scmp.ne.s32.totalorder %s142, %s143
      %p152 = scmp.eq.s32.totalorder %s36, 0
      %p153 = por %p151, %p152
      %p154 = scmp.ne.s32.totalorder %s142, %s143
      %p155 = scmp.eq.s32.totalorder %s37, 1
      %p156 = por %p154, %p155
      %p158 = scmp.ne.s32.totalorder %s143, %s157
      %p159 = scmp.eq.s32.totalorder %s37, 0
      %p160 = por %p158, %p159
      %s162 = sadd.s32 %s161, 1
      %p165 = scmp.eq.s32.totalorder %s31, 1
      %p166 = scmp.ne.s32.totalorder %s161, %s163
      %p167 = scmp.eq.s32.totalorder %s31, 0
      %p168 = por %p166, %p167
      %p169 = scmp.ne.s32.totalorder %s161, %s163
      %p170 = scmp.eq.s32.totalorder %s36, 1
      %p171 = por %p169, %p170
      %p172 = scmp.ne.s32.totalorder %s163, %s164
      %p173 = scmp.eq.s32.totalorder %s36, 0
      %p174 = por %p172, %p173
      %p175 = scmp.ne.s32.totalorder %s163, %s164
      %p176 = scmp.eq.s32.totalorder %s37, 1
      %p177 = por %p175, %p176
      %p179 = scmp.ne.s32.totalorder %s164, %s178
      %p180 = scmp.eq.s32.totalorder %s37, 0
      %p181 = por %p179, %p180
      %s183 = sadd.s32 %s182, 1
      %p186 = scmp.eq.s32.totalorder %s31, 1
      %p187 = scmp.ne.s32.totalorder %s182, %s184
      %p188 = scmp.eq.s32.totalorder %s31, 0
      %p189 = por %p187, %p188
      %p190 = scmp.ne.s32.totalorder %s182, %s184
      %p191 = scmp.eq.s32.totalorder %s36, 1
      %p192 = por %p190, %p191
      %p193 = scmp.ne.s32.totalorder %s184, %s185
      %p194 = scmp.eq.s32.totalorder %s36, 0
      %p195 = por %p193, %p194
      %p196 = scmp.ne.s32.totalorder %s184, %s185
      %p197 = scmp.eq.s32.totalorder %s37, 1
      %p198 = por %p196, %p197
      %p200 = scmp.ne.s32.totalorder %s185, %s199
      %p201 = scmp.eq.s32.totalorder %s37, 0
      %p202 = por %p200, %p201
      %s204 = sadd.s32 %s203, 1
      %p207 = scmp.eq.s32.totalorder %s31, 1
      %p208 = scmp.ne.s32.totalorder %s203, %s205
      %p209 = scmp.eq.s32.totalorder %s31, 0
      %p210 = por %p208, %p209
      %p211 = scmp.ne.s32.totalorder %s203, %s205
      %p212 = scmp.eq.s32.totalorder %s36, 1
      %p213 = por %p211, %p212
      %p214 = scmp.ne.s32.totalorder %s205, %s206
      %p215 = scmp.eq.s32.totalorder %s36, 0
      %p216 = por %p214, %p215
      %p217 = scmp.ne.s32.totalorder %s205, %s206
      %p218 = scmp.eq.s32.totalorder %s37, 1
      %p219 = por %p217, %p218
      %p221 = scmp.ne.s32.totalorder %s206, %s220
      %p222 = scmp.eq.s32.totalorder %s37, 0
      %p223 = por %p221, %p222
      %s224 = ssub.s32 %s39, %s46
      %p225 = scmp.eq.s32.totalorder %s224, 0
      %s227 = sadd.s32 %s226, 1
      %s228 = scalar_select %p225, %s226, %s227
      %p231 = pneg %p225
      %p232 = scmp.eq.s32.totalorder %s31, 1
      %p233 = por %p231, %p232
      %p234 = scmp.ne.s32.totalorder %s226, %s229
      %p235 = scmp.eq.s32.totalorder %s31, 0
      %p236 = por %p234, %p235
      %p237 = scmp.ne.s32.totalorder %s226, %s229
      %p238 = scmp.eq.s32.totalorder %s36, 1
      %p239 = por %p237, %p238
      %p240 = scmp.ne.s32.totalorder %s229, %s230
      %p241 = scmp.eq.s32.totalorder %s36, 0
      %p242 = por %p240, %p241
      %p243 = scmp.ne.s32.totalorder %s229, %s230
      %p244 = scmp.eq.s32.totalorder %s37, 1
      %p245 = por %p243, %p244
      %p247 = scmp.ne.s32.totalorder %s230, %s246
      %p248 = scmp.eq.s32.totalorder %s37, 0
      %p249 = por %p247, %p248
      %s250 = ssub.s32 %s39, %s46
      %p251 = scmp.eq.s32.totalorder %s250, 0
      %s253 = sadd.s32 %s252, 1
      %s254 = scalar_select %p251, %s252, %s253
      %p257 = pneg %p251
      %p258 = scmp.eq.s32.totalorder %s31, 1
      %p259 = por %p257, %p258
      %p260 = scmp.ne.s32.totalorder %s252, %s255
      %p261 = scmp.eq.s32.totalorder %s31, 0
      %p262 = por %p260, %p261
      %p263 = scmp.ne.s32.totalorder %s252, %s255
      %p264 = scmp.eq.s32.totalorder %s36, 1
      %p265 = por %p263, %p264
      %p266 = scmp.ne.s32.totalorder %s255, %s256
      %p267 = scmp.eq.s32.totalorder %s36, 0
      %p268 = por %p266, %p267
      %p269 = scmp.ne.s32.totalorder %s255, %s256
      %p270 = scmp.eq.s32.totalorder %s37, 1
      %p271 = por %p269, %p270
      %p273 = scmp.ne.s32.totalorder %s256, %s272
      %p274 = scmp.eq.s32.totalorder %s37, 0
      %p275 = por %p273, %p274
      %s276 = ssub.s32 %s39, %s46
      %p277 = scmp.eq.s32.totalorder %s276, 0
      %s279 = sadd.s32 %s278, 1
      %s280 = scalar_select %p277, %s278, %s279
      %p283 = pneg %p277
      %p284 = scmp.eq.s32.totalorder %s31, 1
      %p285 = por %p283, %p284
      %p286 = scmp.ne.s32.totalorder %s278, %s281
      %p287 = scmp.eq.s32.totalorder %s31, 0
      %p288 = por %p286, %p287
      %p289 = scmp.ne.s32.totalorder %s278, %s281
      %p290 = scmp.eq.s32.totalorder %s36, 1
      %p291 = por %p289, %p290
      %p292 = scmp.ne.s32.totalorder %s281, %s282
      %p293 = scmp.eq.s32.totalorder %s36, 0
      %p294 = por %p292, %p293
      %p295 = scmp.ne.s32.totalorder %s281, %s282
      %p296 = scmp.eq.s32.totalorder %s37, 1
      %p297 = por %p295, %p296
      %p299 = scmp.ne.s32.totalorder %s282, %s298
      %p300 = scmp.eq.s32.totalorder %s37, 0
      %p301 = por %p299, %p300
      %s302 = ssub.s32 %s39, %s46
      %p303 = scmp.eq.s32.totalorder %s302, 0
      %s305 = sadd.s32 %s304, 1
      %s306 = scalar_select %p303, %s304, %s305
      %p309 = pneg %p303
      %p310 = scmp.eq.s32.totalorder %s31, 1
      %p311 = por %p309, %p310
      %p312 = scmp.ne.s32.totalorder %s304, %s307
      %p313 = scmp.eq.s32.totalorder %s31, 0
      %p314 = por %p312, %p313
      %p315 = scmp.ne.s32.totalorder %s304, %s307
      %p316 = scmp.eq.s32.totalorder %s36, 1
      %p317 = por %p315, %p316
      %p318 = scmp.ne.s32.totalorder %s307, %s308
      %p319 = scmp.eq.s32.totalorder %s36, 0
      %p320 = por %p318, %p319
      %p321 = scmp.ne.s32.totalorder %s307, %s308
      %p322 = scmp.eq.s32.totalorder %s37, 1
      %p323 = por %p321, %p322
      %p325 = scmp.ne.s32.totalorder %s308, %s324
      %p326 = scmp.eq.s32.totalorder %s37, 0
      %p327 = por %p325, %p326
      %s328 = ssub.s32 %s39, %s46
      %p329 = scmp.eq.s32.totalorder %s328, 0
      %s331 = sadd.s32 %s330, 1
      %s332 = scalar_select %p329, %s330, %s331
      %p335 = pneg %p329
      %p336 = scmp.eq.s32.totalorder %s31, 1
      %p337 = por %p335, %p336
      %p338 = scmp.ne.s32.totalorder %s330, %s333
      %p339 = scmp.eq.s32.totalorder %s31, 0
      %p340 = por %p338, %p339
      %p341 = scmp.ne.s32.totalorder %s330, %s333
      %p342 = scmp.eq.s32.totalorder %s36, 1
      %p343 = por %p341, %p342
      %p344 = scmp.ne.s32.totalorder %s333, %s334
      %p345 = scmp.eq.s32.totalorder %s36, 0
      %p346 = por %p344, %p345
      %p347 = scmp.ne.s32.totalorder %s333, %s334
      %p348 = scmp.eq.s32.totalorder %s37, 1
      %p349 = por %p347, %p348
      %p351 = scmp.ne.s32.totalorder %s334, %s350
      %p352 = scmp.eq.s32.totalorder %s37, 0
      %p353 = por %p351, %p352
      %s354 = ssub.s32 %s39, %s46
      %p355 = scmp.eq.s32.totalorder %s354, 0
      %s357 = sadd.s32 %s356, 1
      %s358 = scalar_select %p355, %s356, %s357
      %p361 = pneg %p355
      %p362 = scmp.eq.s32.totalorder %s31, 1
      %p363 = por %p361, %p362
      %p364 = scmp.ne.s32.totalorder %s356, %s359
      %p365 = scmp.eq.s32.totalorder %s31, 0
      %p366 = por %p364, %p365
      %p367 = scmp.ne.s32.totalorder %s356, %s359
      %p368 = scmp.eq.s32.totalorder %s36, 1
      %p369 = por %p367, %p368
      %p370 = scmp.ne.s32.totalorder %s359, %s360
      %p371 = scmp.eq.s32.totalorder %s36, 0
      %p372 = por %p370, %p371
      %p373 = scmp.ne.s32.totalorder %s359, %s360
      %p374 = scmp.eq.s32.totalorder %s37, 1
      %p375 = por %p373, %p374
      %p377 = scmp.ne.s32.totalorder %s360, %s376
      %p378 = scmp.eq.s32.totalorder %s37, 0
      %p379 = por %p377, %p378
      %s380 = ssub.s32 %s39, %s46
      %p381 = scmp.eq.s32.totalorder %s380, 0
      %s383 = sadd.s32 %s382, 1
      %s384 = scalar_select %p381, %s382, %s383
      %p387 = pneg %p381
      %p388 = scmp.eq.s32.totalorder %s31, 1
      %p389 = por %p387, %p388
      %p390 = scmp.ne.s32.totalorder %s382, %s385
      %p391 = scmp.eq.s32.totalorder %s31, 0
      %p392 = por %p390, %p391
      %p393 = scmp.ne.s32.totalorder %s382, %s385
      %p394 = scmp.eq.s32.totalorder %s36, 1
      %p395 = por %p393, %p394
      %p396 = scmp.ne.s32.totalorder %s385, %s386
      %p397 = scmp.eq.s32.totalorder %s36, 0
      %p398 = por %p396, %p397
      %p399 = scmp.ne.s32.totalorder %s385, %s386
      %p400 = scmp.eq.s32.totalorder %s37, 1
      %p401 = por %p399, %p400
      %p403 = scmp.ne.s32.totalorder %s386, %s402
      %p404 = scmp.eq.s32.totalorder %s37, 0
      %p405 = por %p403, %p404
      %s406 = ssub.s32 %s39, %s46
      %p407 = scmp.eq.s32.totalorder %s406, 0
      %s409 = sadd.s32 %s408, 1
      %s410 = scalar_select %p407, %s408, %s409
      %p413 = pneg %p407
      %p414 = scmp.eq.s32.totalorder %s31, 1
      %p415 = por %p413, %p414
      %p416 = scmp.ne.s32.totalorder %s408, %s411
      %p417 = scmp.eq.s32.totalorder %s31, 0
      %p418 = por %p416, %p417
      %p419 = scmp.ne.s32.totalorder %s408, %s411
      %p420 = scmp.eq.s32.totalorder %s36, 1
      %p421 = por %p419, %p420
      %p422 = scmp.ne.s32.totalorder %s411, %s412
      %p423 = scmp.eq.s32.totalorder %s36, 0
      %p424 = por %p422, %p423
      %p425 = scmp.ne.s32.totalorder %s411, %s412
      %p426 = scmp.eq.s32.totalorder %s37, 1
      %p427 = por %p425, %p426
      %p429 = scmp.ne.s32.totalorder %s412, %s428
      %p430 = scmp.eq.s32.totalorder %s37, 0
      %p431 = por %p429, %p430
      %s432 = ssub.s32 %s39, %s46
      %p433 = scmp.eq.s32.totalorder %s432, 0
      %s435 = sadd.s32 %s434, 1
      %s436 = scalar_select %p433, %s434, %s435
      %p439 = pneg %p433
      %p440 = scmp.eq.s32.totalorder %s31, 1
      %p441 = por %p439, %p440
      %p442 = scmp.ne.s32.totalorder %s434, %s437
      %p443 = scmp.eq.s32.totalorder %s31, 0
      %p444 = por %p442, %p443
      %p445 = scmp.ne.s32.totalorder %s434, %s437
      %p446 = scmp.eq.s32.totalorder %s36, 1
      %p447 = por %p445, %p446
      %p448 = scmp.ne.s32.totalorder %s437, %s438
      %p449 = scmp.eq.s32.totalorder %s36, 0
      %p450 = por %p448, %p449
      %p451 = scmp.ne.s32.totalorder %s437, %s438
      %p452 = scmp.eq.s32.totalorder %s37, 1
      %p453 = por %p451, %p452
      %p455 = scmp.ne.s32.totalorder %s438, %s454
      %p456 = scmp.eq.s32.totalorder %s37, 0
      %p457 = por %p455, %p456
      %s458 = ssub.s32 %s39, %s46
      %p459 = scmp.eq.s32.totalorder %s458, 0
      %s461 = sadd.s32 %s460, 1
      %s462 = scalar_select %p459, %s460, %s461
      %p465 = pneg %p459
      %p466 = scmp.eq.s32.totalorder %s31, 1
      %p467 = por %p465, %p466
      %p468 = scmp.ne.s32.totalorder %s460, %s463
      %p469 = scmp.eq.s32.totalorder %s31, 0
      %p470 = por %p468, %p469
      %p471 = scmp.ne.s32.totalorder %s460, %s463
      %p472 = scmp.eq.s32.totalorder %s36, 1
      %p473 = por %p471, %p472
      %p474 = scmp.ne.s32.totalorder %s463, %s464
      %p475 = scmp.eq.s32.totalorder %s36, 0
      %p476 = por %p474, %p475
      %p477 = scmp.ne.s32.totalorder %s463, %s464
      %p478 = scmp.eq.s32.totalorder %s37, 1
      %p479 = por %p477, %p478
      %p481 = scmp.ne.s32.totalorder %s464, %s480
      %p482 = scmp.eq.s32.totalorder %s37, 0
      %p483 = por %p481, %p482
      %s484 = ssub.s32 %s39, %s46
      %p485 = scmp.eq.s32.totalorder %s484, 0
      %s487 = sadd.s32 %s486, 1
      %s488 = scalar_select %p485, %s486, %s487
      %p491 = pneg %p485
      %p492 = scmp.eq.s32.totalorder %s31, 1
      %p493 = por %p491, %p492
      %p494 = scmp.ne.s32.totalorder %s486, %s489
      %p495 = scmp.eq.s32.totalorder %s31, 0
      %p496 = por %p494, %p495
      %p497 = scmp.ne.s32.totalorder %s486, %s489
      %p498 = scmp.eq.s32.totalorder %s36, 1
      %p499 = por %p497, %p498
      %p500 = scmp.ne.s32.totalorder %s489, %s490
      %p501 = scmp.eq.s32.totalorder %s36, 0
      %p502 = por %p500, %p501
      %p503 = scmp.ne.s32.totalorder %s489, %s490
      %p504 = scmp.eq.s32.totalorder %s37, 1
      %p505 = por %p503, %p504
      %p507 = scmp.ne.s32.totalorder %s490, %s506
      %p508 = scmp.eq.s32.totalorder %s37, 0
      %p509 = por %p507, %p508
      %s510 = ssub.s32 %s39, %s46
      %p511 = scmp.eq.s32.totalorder %s510, 0
      %s513 = sadd.s32 %s512, 1
      %s514 = scalar_select %p511, %s512, %s513
      %p517 = pneg %p511
      %p518 = scmp.eq.s32.totalorder %s31, 1
      %p519 = por %p517, %p518
      %p520 = scmp.ne.s32.totalorder %s512, %s515
      %p521 = scmp.eq.s32.totalorder %s31, 0
      %p522 = por %p520, %p521
      %p523 = scmp.ne.s32.totalorder %s512, %s515
      %p524 = scmp.eq.s32.totalorder %s36, 1
      %p525 = por %p523, %p524
      %p526 = scmp.ne.s32.totalorder %s515, %s516
      %p527 = scmp.eq.s32.totalorder %s36, 0
      %p528 = por %p526, %p527
      %p529 = scmp.ne.s32.totalorder %s515, %s516
      %p530 = scmp.eq.s32.totalorder %s37, 1
      %p531 = por %p529, %p530
      %p533 = scmp.ne.s32.totalorder %s516, %s532
      %p534 = scmp.eq.s32.totalorder %s37, 0
      %p535 = por %p533, %p534
      %s537 = sadd.s32 %s536, 1
      %p540 = scmp.eq.s32.totalorder %s31, 1
      %p541 = scmp.ne.s32.totalorder %s536, %s538
      %p542 = scmp.eq.s32.totalorder %s31, 0
      %p543 = por %p541, %p542
      %p544 = scmp.ne.s32.totalorder %s536, %s538
      %p545 = scmp.eq.s32.totalorder %s36, 1
      %p546 = por %p544, %p545
      %p547 = scmp.ne.s32.totalorder %s538, %s539
      %p548 = scmp.eq.s32.totalorder %s36, 0
      %p549 = por %p547, %p548
      %p550 = scmp.ne.s32.totalorder %s538, %s539
      %p551 = scmp.eq.s32.totalorder %s37, 1
      %p552 = por %p550, %p551
      %p554 = scmp.ne.s32.totalorder %s539, %s553
      %p555 = scmp.eq.s32.totalorder %s37, 0
      %p556 = por %p554, %p555
      %s558 = sadd.s32 %s557, 1
      %p561 = scmp.eq.s32.totalorder %s31, 1
      %p562 = scmp.ne.s32.totalorder %s557, %s559
      %p563 = scmp.eq.s32.totalorder %s31, 0
      %p564 = por %p562, %p563
      %p565 = scmp.ne.s32.totalorder %s557, %s559
      %p566 = scmp.eq.s32.totalorder %s36, 1
      %p567 = por %p565, %p566
      %p568 = scmp.ne.s32.totalorder %s559, %s560
      %p569 = scmp.eq.s32.totalorder %s36, 0
      %p570 = por %p568, %p569
      %p571 = scmp.ne.s32.totalorder %s559, %s560
      %p572 = scmp.eq.s32.totalorder %s37, 1
      %p573 = por %p571, %p572
      %p575 = scmp.ne.s32.totalorder %s560, %s574
      %p576 = scmp.eq.s32.totalorder %s37, 0
      %p577 = por %p575, %p576
      %s579 = sadd.s32 %s578, 1
      %p582 = scmp.eq.s32.totalorder %s31, 1
      %p583 = scmp.ne.s32.totalorder %s578, %s580
      %p584 = scmp.eq.s32.totalorder %s31, 0
      %p585 = por %p583, %p584
      %p586 = scmp.ne.s32.totalorder %s578, %s580
      %p587 = scmp.eq.s32.totalorder %s36, 1
      %p588 = por %p586, %p587
      %p589 = scmp.ne.s32.totalorder %s580, %s581
      %p590 = scmp.eq.s32.totalorder %s36, 0
      %p591 = por %p589, %p590
      %p592 = scmp.ne.s32.totalorder %s580, %s581
      %p593 = scmp.eq.s32.totalorder %s37, 1
      %p594 = por %p592, %p593
      %p596 = scmp.ne.s32.totalorder %s581, %s595
      %p597 = scmp.eq.s32.totalorder %s37, 0
      %p598 = por %p596, %p597
      %s600 = sadd.s32 %s599, 1
      %p603 = scmp.eq.s32.totalorder %s31, 1
      %p604 = scmp.ne.s32.totalorder %s599, %s601
      %p605 = scmp.eq.s32.totalorder %s31, 0
      %p606 = por %p604, %p605
      %p607 = scmp.ne.s32.totalorder %s599, %s601
      %p608 = scmp.eq.s32.totalorder %s36, 1
      %p609 = por %p607, %p608
      %p610 = scmp.ne.s32.totalorder %s601, %s602
      %p611 = scmp.eq.s32.totalorder %s36, 0
      %p612 = por %p610, %p611
      %p613 = scmp.ne.s32.totalorder %s601, %s602
      %p614 = scmp.eq.s32.totalorder %s37, 1
      %p615 = por %p613, %p614
      %p617 = scmp.ne.s32.totalorder %s602, %s616
      %p618 = scmp.eq.s32.totalorder %s37, 0
      %p619 = por %p617, %p618
      %s620 = ssub.s32 %s38, %s50
      %p621 = scmp.eq.s32.totalorder %s620, 0
      %s623 = sadd.s32 %s622, 1
      %s624 = scalar_select %p621, %s622, %s623
      %p627 = pneg %p621
      %p628 = scmp.eq.s32.totalorder %s31, 1
      %p629 = por %p627, %p628
      %p630 = scmp.ne.s32.totalorder %s622, %s625
      %p631 = scmp.eq.s32.totalorder %s31, 0
      %p632 = por %p630, %p631
      %p633 = scmp.ne.s32.totalorder %s622, %s625
      %p634 = scmp.eq.s32.totalorder %s36, 1
      %p635 = por %p633, %p634
      %p636 = scmp.ne.s32.totalorder %s625, %s626
      %p637 = scmp.eq.s32.totalorder %s36, 0
      %p638 = por %p636, %p637
      %p639 = scmp.ne.s32.totalorder %s625, %s626
      %p640 = scmp.eq.s32.totalorder %s37, 1
      %p641 = por %p639, %p640
      %p643 = scmp.ne.s32.totalorder %s626, %s642
      %p644 = scmp.eq.s32.totalorder %s37, 0
      %p645 = por %p643, %p644
      %p646 = scmp.le.s32.totalorder 1, %s31
      %p647 = scmp.lt.s32.totalorder %s31, 3
      %p648 = pnand %p646, %p647
      %p649 = pneg %p648
      // Predicated region
      $region9: #{vit_forward.1} parent=5 // pred_check
        _
      $region10: #{vit_forward.1} parent=5 // pred_check_branch
        %651 = sbr.rel (%p648) target = $region12
      $region11: #{vit_forward.1} parent=5 // pred_region
        %s652 = ssub.s32 %s31, 1
        // Predicated region
        $region13: #{vit_forward.1} parent=11 // pred_check
          %p653 = pneg %p69
        $region14: #{vit_forward.1} parent=11 // pred_check_branch
          %655 = sbr.rel (%p653) target = $region16
        $region15: #{vit_forward.1} parent=11 // pred_region
          %s656 = smul.u32 2, %s40
          %p657 = scmp.lt.s32.totalorder %s656, 1
          %s658 = scalar_select %p657, %s656, 1
          %s659 = smul.addr %s658, 2
          %s660 = smul.addr %s659, 8
          %s661 = scalar_lea.vmem %s0, %s660
          %s662 = smul.u32 2, %s40
        $region16: #{vit_forward.1} parent=11 // pred_fallthru
          _
        // Predicated region
        $region17: #{vit_forward.1} parent=11 // pred_check
          %p663 = pneg %p90
        $region18: #{vit_forward.1} parent=11 // pred_check_branch
          %665 = sbr.rel (%p663) target = $region20
        $region19: #{vit_forward.1} parent=11 // pred_region
          _
        $region20: #{vit_forward.1} parent=11 // pred_fallthru
          _
        // Predicated region
        $region21: #{vit_forward.1} parent=11 // pred_check
          %p666 = pneg %p111
        $region22: #{vit_forward.1} parent=11 // pred_check_branch
          %668 = sbr.rel (%p666) target = $region24
        $region23: #{vit_forward.1} parent=11 // pred_region
          _
        $region24: #{vit_forward.1} parent=11 // pred_fallthru
          _
        // Predicated region
        $region25: #{vit_forward.1} parent=11 // pred_check
          %p669 = pneg %p132
        $region26: #{vit_forward.1} parent=11 // pred_check_branch
          %671 = sbr.rel (%p669) target = $region28
        $region27: #{vit_forward.1} parent=11 // pred_region
          _
        $region28: #{vit_forward.1} parent=11 // pred_fallthru
          _
        // Predicated region
        $region29: #{vit_forward.1} parent=11 // pred_check
          %p672 = pneg %p153
        $region30: #{vit_forward.1} parent=11 // pred_check_branch
          %674 = sbr.rel (%p672) target = $region32
        $region31: #{vit_forward.1} parent=11 // pred_region
          _
        $region32: #{vit_forward.1} parent=11 // pred_fallthru
          _
        // Predicated region
        $region33: #{vit_forward.1} parent=11 // pred_check
          %p675 = pneg %p174
        $region34: #{vit_forward.1} parent=11 // pred_check_branch
          %677 = sbr.rel (%p675) target = $region36
        $region35: #{vit_forward.1} parent=11 // pred_region
          _
        $region36: #{vit_forward.1} parent=11 // pred_fallthru
          _
        // Predicated region
        $region37: #{vit_forward.1} parent=11 // pred_check
          %p678 = pneg %p195
        $region38: #{vit_forward.1} parent=11 // pred_check_branch
          %680 = sbr.rel (%p678) target = $region40
        $region39: #{vit_forward.1} parent=11 // pred_region
          _
        $region40: #{vit_forward.1} parent=11 // pred_fallthru
          _
        // Predicated region
        $region41: #{vit_forward.1} parent=11 // pred_check
          %p681 = pneg %p216
        $region42: #{vit_forward.1} parent=11 // pred_check_branch
          %683 = sbr.rel (%p681) target = $region44
        $region43: #{vit_forward.1} parent=11 // pred_region
          _
        $region44: #{vit_forward.1} parent=11 // pred_fallthru
          _
        // Predicated region
        $region45: #{vit_forward.1} parent=11 // pred_check
          %p684 = pneg %p549
        $region46: #{vit_forward.1} parent=11 // pred_check_branch
          %686 = sbr.rel (%p684) target = $region48
        $region47: #{vit_forward.1} parent=11 // pred_region
          _
        $region48: #{vit_forward.1} parent=11 // pred_fallthru
          _
        // Predicated region
        $region49: #{vit_forward.1} parent=11 // pred_check
          %p687 = pneg %p570
        $region50: #{vit_forward.1} parent=11 // pred_check_branch
          %689 = sbr.rel (%p687) target = $region52
        $region51: #{vit_forward.1} parent=11 // pred_region
          _
        $region52: #{vit_forward.1} parent=11 // pred_fallthru
          _
        // Predicated region
        $region53: #{vit_forward.1} parent=11 // pred_check
          %p690 = pneg %p591
        $region54: #{vit_forward.1} parent=11 // pred_check_branch
          %692 = sbr.rel (%p690) target = $region56
        $region55: #{vit_forward.1} parent=11 // pred_region
          _
        $region56: #{vit_forward.1} parent=11 // pred_fallthru
          _
        // Predicated region
        $region57: #{vit_forward.1} parent=11 // pred_check
          %p693 = pneg %p612
        $region58: #{vit_forward.1} parent=11 // pred_check_branch
          %695 = sbr.rel (%p693) target = $region60
        $region59: #{vit_forward.1} parent=11 // pred_region
          _
        $region60: #{vit_forward.1} parent=11 // pred_fallthru
          _
      $region12: #{vit_forward.1} parent=5 // pred_fallthru
        _
      %p696 = scmp.lt.s32.totalorder %s31, 2
      // Predicated region
      $region61: #{vit_forward.1} parent=5 // pred_check
        %p697 = pneg %p696
      $region62: #{vit_forward.1} parent=5 // pred_check_branch
        %699 = sbr.rel (%p697) target = $region64
      $region63: #{vit_forward.1} parent=5 // pred_region
        // Predicated region
        $region65: #{vit_forward.1} parent=63 // pred_check
          %p700 = pneg %p236
        $region66: #{vit_forward.1} parent=63 // pred_check_branch
          %702 = sbr.rel (%p700) target = $region68
        $region67: #{vit_forward.1} parent=63 // pred_region
          %p703 = scmp.lt.s32.totalorder %s39, 1
          %s704 = scalar_select %p703, %s39, 1
          %s705 = scalar_lea.vmem %s8, %s704
        $region68: #{vit_forward.1} parent=63 // pred_fallthru
          _
        // Predicated region
        $region69: #{vit_forward.1} parent=63 // pred_check
          %p706 = pneg %p262
        $region70: #{vit_forward.1} parent=63 // pred_check_branch
          %708 = sbr.rel (%p706) target = $region72
        $region71: #{vit_forward.1} parent=63 // pred_region
          %p709 = scmp.lt.s32.totalorder %s39, 1
          %s710 = scalar_select %p709, %s39, 1
          %s711 = scalar_lea.vmem %s9, %s710
        $region72: #{vit_forward.1} parent=63 // pred_fallthru
          _
        // Predicated region
        $region73: #{vit_forward.1} parent=63 // pred_check
          %p712 = pneg %p288
        $region74: #{vit_forward.1} parent=63 // pred_check_branch
          %714 = sbr.rel (%p712) target = $region76
        $region75: #{vit_forward.1} parent=63 // pred_region
          %p715 = scmp.lt.s32.totalorder %s39, 1
          %s716 = scalar_select %p715, %s39, 1
          %s717 = smul.addr %s716, 4
          %s718 = smul.addr %s717, 4
          %s719 = scalar_lea.vmem %s10, %s718
        $region76: #{vit_forward.1} parent=63 // pred_fallthru
          _
        // Predicated region
        $region77: #{vit_forward.1} parent=63 // pred_check
          %p720 = pneg %p314
        $region78: #{vit_forward.1} parent=63 // pred_check_branch
          %722 = sbr.rel (%p720) target = $region80
        $region79: #{vit_forward.1} parent=63 // pred_region
          %p723 = scmp.lt.s32.totalorder %s39, 1
          %s724 = scalar_select %p723, %s39, 1
          %s725 = scalar_lea.vmem %s11, %s724
        $region80: #{vit_forward.1} parent=63 // pred_fallthru
          _
        // Predicated region
        $region81: #{vit_forward.1} parent=63 // pred_check
          %p726 = pneg %p340
        $region82: #{vit_forward.1} parent=63 // pred_check_branch
          %728 = sbr.rel (%p726) target = $region84
        $region83: #{vit_forward.1} parent=63 // pred_region
          %p729 = scmp.lt.s32.totalorder %s39, 1
          %s730 = scalar_select %p729, %s39, 1
          %s731 = smul.addr %s730, 4
          %s732 = smul.addr %s731, 4
          %s733 = scalar_lea.vmem %s12, %s732
        $region84: #{vit_forward.1} parent=63 // pred_fallthru
          _
        // Predicated region
        $region85: #{vit_forward.1} parent=63 // pred_check
          %p734 = pneg %p366
        $region86: #{vit_forward.1} parent=63 // pred_check_branch
          %736 = sbr.rel (%p734) target = $region88
        $region87: #{vit_forward.1} parent=63 // pred_region
          %p737 = scmp.lt.s32.totalorder %s39, 1
          %s738 = scalar_select %p737, %s39, 1
          %s739 = scalar_lea.vmem %s13, %s738
        $region88: #{vit_forward.1} parent=63 // pred_fallthru
          _
        // Predicated region
        $region89: #{vit_forward.1} parent=63 // pred_check
          %p740 = pneg %p392
        $region90: #{vit_forward.1} parent=63 // pred_check_branch
          %742 = sbr.rel (%p740) target = $region92
        $region91: #{vit_forward.1} parent=63 // pred_region
          %p743 = scmp.lt.s32.totalorder %s39, 1
          %s744 = scalar_select %p743, %s39, 1
          %s745 = scalar_lea.vmem %s14, %s744
        $region92: #{vit_forward.1} parent=63 // pred_fallthru
          _
        // Predicated region
        $region93: #{vit_forward.1} parent=63 // pred_check
          %p746 = pneg %p418
        $region94: #{vit_forward.1} parent=63 // pred_check_branch
          %748 = sbr.rel (%p746) target = $region96
        $region95: #{vit_forward.1} parent=63 // pred_region
          %p749 = scmp.lt.s32.totalorder %s39, 1
          %s750 = scalar_select %p749, %s39, 1
          %s751 = scalar_lea.vmem %s15, %s750
        $region96: #{vit_forward.1} parent=63 // pred_fallthru
          _
        // Predicated region
        $region97: #{vit_forward.1} parent=63 // pred_check
          %p752 = pneg %p444
        $region98: #{vit_forward.1} parent=63 // pred_check_branch
          %754 = sbr.rel (%p752) target = $region100
        $region99: #{vit_forward.1} parent=63 // pred_region
          %p755 = scmp.lt.s32.totalorder %s39, 1
          %s756 = scalar_select %p755, %s39, 1
          %s757 = smul.addr %s756, 4
          %s758 = smul.addr %s757, 4
          %s759 = scalar_lea.vmem %s16, %s758
        $region100: #{vit_forward.1} parent=63 // pred_fallthru
          _
        // Predicated region
        $region101: #{vit_forward.1} parent=63 // pred_check
          %p760 = pneg %p470
        $region102: #{vit_forward.1} parent=63 // pred_check_branch
          %762 = sbr.rel (%p760) target = $region104
        $region103: #{vit_forward.1} parent=63 // pred_region
          %p763 = scmp.lt.s32.totalorder %s39, 1
          %s764 = scalar_select %p763, %s39, 1
          %s765 = scalar_lea.vmem %s17, %s764
        $region104: #{vit_forward.1} parent=63 // pred_fallthru
          _
        // Predicated region
        $region105: #{vit_forward.1} parent=63 // pred_check
          %p766 = pneg %p496
        $region106: #{vit_forward.1} parent=63 // pred_check_branch
          %768 = sbr.rel (%p766) target = $region108
        $region107: #{vit_forward.1} parent=63 // pred_region
          %p769 = scmp.lt.s32.totalorder %s39, 1
          %s770 = scalar_select %p769, %s39, 1
          %s771 = smul.addr %s770, 8
          %s772 = smul.addr %s771, 4
          %s773 = scalar_lea.vmem %s18, %s772
        $region108: #{vit_forward.1} parent=63 // pred_fallthru
          _
        // Predicated region
        $region109: #{vit_forward.1} parent=63 // pred_check
          %p774 = pneg %p522
        $region110: #{vit_forward.1} parent=63 // pred_check_branch
          %776 = sbr.rel (%p774) target = $region112
        $region111: #{vit_forward.1} parent=63 // pred_region
          %p777 = scmp.lt.s32.totalorder %s39, 1
          %s778 = scalar_select %p777, %s39, 1
          %s779 = scalar_lea.vmem %s19, %s778
        $region112: #{vit_forward.1} parent=63 // pred_fallthru
          _
      $region64: #{vit_forward.1} parent=5 // pred_fallthru
        _
      %p780 = scmp.le.s32.totalorder 1, %s31
      %p781 = scmp.lt.s32.totalorder %s31, 3
      %p782 = pnand %p780, %p781
      %p783 = pneg %p782
      // Predicated region
      $region113: #{vit_forward.1} parent=5 // pred_check
        _
      $region114: #{vit_forward.1} parent=5 // pred_check_branch
        %785 = sbr.rel (%p782) target = $region116
      $region115: #{vit_forward.1} parent=5 // pred_region
        %s786 = ssub.s32 %s31, 1
        %s787 = smul.u32 2, %s40
        %p788 = scmp.lt.s32.totalorder %s787, 1
        %s789 = scalar_select %p788, %s787, 1
        %s790 = smul.addr %s789, 2
        %s791 = smul.addr %s790, 8
        %s792 = scalar_lea.vmem %s0, %s791
        %p793 = pneg %p69
        %p794 = pneg %p66
        %p795 = pneg %p90
        %p796 = pneg %p87
        %p797 = pneg %p111
        %p798 = pneg %p108
        %p799 = pneg %p132
        %p800 = pneg %p129
        %p801 = pneg %p153
        %p802 = pneg %p150
        %p803 = pneg %p174
        %p804 = pneg %p171
        %p805 = pneg %p195
        %p806 = pneg %p192
        %p807 = pneg %p216
        %p808 = pneg %p213
        %p809 = scmp.lt.s32.totalorder %s41, 1
        %s810 = scalar_select %p809, %s41, 1
        %s811 = scalar_lea.vmem %s8, %s810
        %p812 = pneg %p242
        %p813 = pneg %p239
        %p814 = scmp.lt.s32.totalorder %s41, 1
        %s815 = scalar_select %p814, %s41, 1
        %s816 = scalar_lea.vmem %s9, %s815
        %p817 = pneg %p268
        %p818 = pneg %p265
        %p819 = scmp.lt.s32.totalorder %s41, 1
        %s820 = scalar_select %p819, %s41, 1
        %s821 = smul.addr %s820, 4
        %s822 = smul.addr %s821, 4
        %s823 = scalar_lea.vmem %s10, %s822
        %p824 = pneg %p294
        %p825 = pneg %p291
        %p826 = scmp.lt.s32.totalorder %s41, 1
        %s827 = scalar_select %p826, %s41, 1
        %s828 = scalar_lea.vmem %s11, %s827
        %p829 = pneg %p320
        %p830 = pneg %p317
        %p831 = scmp.lt.s32.totalorder %s41, 1
        %s832 = scalar_select %p831, %s41, 1
        %s833 = smul.addr %s832, 4
        %s834 = smul.addr %s833, 4
        %s835 = scalar_lea.vmem %s12, %s834
        %p836 = pneg %p346
        %p837 = pneg %p343
        %p838 = scmp.lt.s32.totalorder %s41, 1
        %s839 = scalar_select %p838, %s41, 1
        %s840 = scalar_lea.vmem %s13, %s839
        %p841 = pneg %p372
        %p842 = pneg %p369
        %p843 = scmp.lt.s32.totalorder %s41, 1
        %s844 = scalar_select %p843, %s41, 1
        %s845 = scalar_lea.vmem %s14, %s844
        %p846 = pneg %p398
        %p847 = pneg %p395
        %p848 = scmp.lt.s32.totalorder %s41, 1
        %s849 = scalar_select %p848, %s41, 1
        %s850 = scalar_lea.vmem %s15, %s849
        %p851 = pneg %p424
        %p852 = pneg %p421
        %p853 = scmp.lt.s32.totalorder %s41, 1
        %s854 = scalar_select %p853, %s41, 1
        %s855 = smul.addr %s854, 4
        %s856 = smul.addr %s855, 4
        %s857 = scalar_lea.vmem %s16, %s856
        %p858 = pneg %p450
        %p859 = pneg %p447
        %p860 = scmp.lt.s32.totalorder %s41, 1
        %s861 = scalar_select %p860, %s41, 1
        %s862 = scalar_lea.vmem %s17, %s861
        %p863 = pneg %p476
        %p864 = pneg %p473
        %p865 = scmp.lt.s32.totalorder %s41, 1
        %s866 = scalar_select %p865, %s41, 1
        %s867 = smul.addr %s866, 8
        %s868 = smul.addr %s867, 4
        %s869 = scalar_lea.vmem %s18, %s868
        %p870 = pneg %p502
        %p871 = pneg %p499
        %p872 = scmp.lt.s32.totalorder %s41, 1
        %s873 = scalar_select %p872, %s41, 1
        %s874 = scalar_lea.vmem %s19, %s873
        %p875 = pneg %p528
        %p876 = pneg %p525
        %p877 = pneg %p549
        %p878 = pneg %p546
        %p879 = pneg %p570
        %p880 = pneg %p567
        %p881 = pneg %p591
        %p882 = pneg %p588
        %p883 = pneg %p612
        %p884 = pneg %p609
        %p885 = pneg %p638
        %p886 = pneg %p635
        %s887 = smul.u32 2, %s40
        %p888 = scmp.lt.s32.totalorder %s887, 1
        %s889 = scalar_select %p888, %s887, 1
        %s890 = smul.addr %s889, 2
        %s891 = smul.addr %s890, 8
        %s892 = scalar_lea.vmem %s0, %s891
        %s893 = smul.u32 2, %s40
        %p894 = scmp.lt.s32.totalorder %s41, 1
        %s895 = scalar_select %p894, %s41, 1
        %s896 = scalar_lea.vmem %s8, %s895
        %p897 = scmp.lt.s32.totalorder %s41, 1
        %s898 = scalar_select %p897, %s41, 1
        %s899 = scalar_lea.vmem %s9, %s898
        %p900 = scmp.lt.s32.totalorder %s41, 1
        %s901 = scalar_select %p900, %s41, 1
        %s902 = smul.addr %s901, 4
        %s903 = smul.addr %s902, 4
        %s904 = scalar_lea.vmem %s10, %s903
        %p905 = scmp.lt.s32.totalorder %s41, 1
        %s906 = scalar_select %p905, %s41, 1
        %s907 = scalar_lea.vmem %s11, %s906
        %p908 = scmp.lt.s32.totalorder %s41, 1
        %s909 = scalar_select %p908, %s41, 1
        %s910 = smul.addr %s909, 4
        %s911 = smul.addr %s910, 4
        %s912 = scalar_lea.vmem %s12, %s911
        %p913 = scmp.lt.s32.totalorder %s41, 1
        %s914 = scalar_select %p913, %s41, 1
        %s915 = scalar_lea.vmem %s13, %s914
        %p916 = scmp.lt.s32.totalorder %s41, 1
        %s917 = scalar_select %p916, %s41, 1
        %s918 = scalar_lea.vmem %s14, %s917
        %p919 = scmp.lt.s32.totalorder %s41, 1
        %s920 = scalar_select %p919, %s41, 1
        %s921 = scalar_lea.vmem %s15, %s920
        %p922 = scmp.lt.s32.totalorder %s41, 1
        %s923 = scalar_select %p922, %s41, 1
        %s924 = smul.addr %s923, 4
        %s925 = smul.addr %s924, 4
        %s926 = scalar_lea.vmem %s16, %s925
        %p927 = scmp.lt.s32.totalorder %s41, 1
        %s928 = scalar_select %p927, %s41, 1
        %s929 = scalar_lea.vmem %s17, %s928
        %p930 = scmp.lt.s32.totalorder %s41, 1
        %s931 = scalar_select %p930, %s41, 1
        %s932 = smul.addr %s931, 8
        %s933 = smul.addr %s932, 4
        %s934 = scalar_lea.vmem %s18, %s933
        %p935 = scmp.lt.s32.totalorder %s41, 1
        %s936 = scalar_select %p935, %s41, 1
        %s937 = scalar_lea.vmem %s19, %s936
        %p939 = scmp.eq.s32.totalorder %s41, 0
        // Predicated region
        $region117: #{vit_forward.1} parent=115 // pred_check
          %p940 = pneg %p939
        $region118: #{vit_forward.1} parent=115 // pred_check_branch
          %942 = sbr.rel (%p940) target = $region120
        $region119: #{vit_forward.1} parent=115 // pred_region
          %v943 = vld [vmem:[%s892] sm:$0xff]
          %v944 = vld [vmem:[%s892 + $0x8] sm:$0xff]
          %v945 = vld [vmem:[%s892 + $0x10] sm:$0xff]
          %v946 = vld [vmem:[%s892 + $0x18] sm:$0xff]
          %v947 = vld [vmem:[%s1] sm:$0x1]
          %v948 = vld [vmem:[%s2] sm:$0x1]
          %vm949 = vcmask 523264
          %v950 = vsel %vm949, %v943, 0.0
          %951 = vadd.xlane.f32.xlu0 %v950
          %v952 = vpop.xlane.xlu0 %951
          %v953 = vsel %vm949, %v944, 0.0
          %954 = vadd.xlane.f32.xlu0 %v953
          %v955 = vpop.xlane.xlu0 %954
          %v956 = vsel %vm949, %v945, 0.0
          %957 = vadd.xlane.f32.xlu0 %v956
          %v958 = vpop.xlane.xlu0 %957
          %v959 = vsel %vm949, %v946, 0.0
          %960 = vadd.xlane.f32.xlu0 %v959
          %v961 = vpop.xlane.xlu0 %960
          %v962 = vrcp.pop 64.0
          %v963 = vmul.f32 %v952, %v962
          %v964 = vmul.f32 %v955, %v962
          %v965 = vmul.f32 %v958, %v962
          %v966 = vmul.f32 %v961, %v962
          %v967 = vsub.f32 %v943, %v963
          %v968 = vsub.f32 %v944, %v964
          %v969 = vsub.f32 %v945, %v965
          %v970 = vsub.f32 %v946, %v966
          %v971 = vmul.f32 %v967, %v967
          %v972 = vmul.f32 %v968, %v968
          %v973 = vmul.f32 %v969, %v969
          %v974 = vmul.f32 %v970, %v970
          %v975 = vsel %vm949, %v971, 0.0
          %976 = vadd.xlane.f32.xlu0 %v975
          %v977 = vpop.xlane.xlu0 %976
          %v978 = vsel %vm949, %v972, 0.0
          %979 = vadd.xlane.f32.xlu0 %v978
          %v980 = vpop.xlane.xlu0 %979
          %v981 = vsel %vm949, %v973, 0.0
          %982 = vadd.xlane.f32.xlu0 %v981
          %v983 = vpop.xlane.xlu0 %982
          %v984 = vsel %vm949, %v974, 0.0
          %985 = vadd.xlane.f32.xlu0 %v984
          %v986 = vpop.xlane.xlu0 %985
          %v987 = vmul.f32 %v977, %v962
          %v988 = vmul.f32 %v980, %v962
          %v989 = vmul.f32 %v983, %v962
          %v990 = vmul.f32 %v986, %v962
          %v991 = vadd.f32 %v987, 1e-05
          %v992 = vadd.f32 %v988, 1e-05
          %v993 = vadd.f32 %v989, 1e-05
          %v994 = vadd.f32 %v990, 1e-05
          %v995 = vrsqrt.pop %v991
          %v996 = vrsqrt.pop %v992
          %v997 = vrsqrt.pop %v993
          %v998 = vrsqrt.pop %v994
          %v999 = vmul.f32 %v967, %v995
          %v1000 = vmul.f32 %v968, %v996
          %v1001 = vmul.f32 %v969, %v997
          %v1002 = vmul.f32 %v970, %v998
          %v1004 = vlaneseq
          %v1005 = vshrl.u32 %v1004, 7
          %v1006 = vsub.s32 0, %v1005
          %v1007 = vrot.slane %v947, %v1006
          %v1009 = vmul.f32 %v999, %v1007
          %v1010 = vmul.f32 %v1000, %v1007
          %v1011 = vmul.f32 %v1001, %v1007
          %v1012 = vmul.f32 %v1002, %v1007
          %v1014 = vlaneseq
          %v1015 = vshrl.u32 %v1014, 7
          %v1016 = vsub.s32 0, %v1015
          %v1017 = vrot.slane %v948, %v1016
          %v1019 = vadd.f32 %v1009, %v1017
          %v1020 = vadd.f32 %v1010, %v1017
          %v1021 = vadd.f32 %v1011, %v1017
          %v1022 = vadd.f32 %v1012, %v1017
          %v1023 = vpack.c.bf16 %v1020, %v1019
          %v1024 = vpack.c.bf16 %v1022, %v1021
          %v1025 = vld [vmem:[%s3] sm:$0xf]
          %v1026 = vld [vmem:[%s3 + $0x4] sm:$0xf]
          %v1027 = vld [vmem:[%s3 + $0x8] sm:$0xf]
          %v1028 = vld [vmem:[%s3 + $0xc] sm:$0xf]
          %v1029 = vld [vmem:[%s3 + $0x10] sm:$0xf]
          %v1030 = vld [vmem:[%s3 + $0x14] sm:$0xf]
          %v1031 = vld [vmem:[%s3 + $0x18] sm:$0xf]
          %v1032 = vld [vmem:[%s3 + $0x1c] sm:$0xf]
          %v1033 = vld [vmem:[%s4] sm:$0x1]
          %v1035 = vlaneseq
          %v1036 = vshrl.u32 %v1035, 7
          %v1037 = vsub.s32 0, %v1036
          %v1038 = vrot.slane %v1033, %v1037
          %v1048 = vunpack.c.l.b16 %v1025
          %v1049 = vunpack.c.l.b16 %v1026
          %v1050 = vunpack.c.l.b16 %v1027
          %v1051 = vunpack.c.l.b16 %v1028
          %v1052 = vunpack.c.l.b16 %v1029
          %v1053 = vunpack.c.l.b16 %v1030
          %v1054 = vunpack.c.l.b16 %v1031
          %v1055 = vunpack.c.l.b16 %v1032
          %v1056 = vpack.c.b16 %v1049, %v1048
          %v1057 = vpack.c.b16 %v1051, %v1050
          %v1058 = vpack.c.b16 %v1053, %v1052
          %v1059 = vpack.c.b16 %v1055, %v1054
          %v1065 = vsel %vm949, %v1023, 0
          %v1068 = vsel %vm949, %v1024, 0
          %1070 = vmatprep.subr.bf16.mxu0 0
          %1071 = vmatpush1.bf16.msra.mxu0 0
          %1072 = vmatprep.subr.bf16.mxu0 0
          %1073 = vmatpush1.bf16.msra.mxu0 0
          %1074 = vmatprep.subr.bf16.mxu0 0
          %1075 = vmatpush1.bf16.msra.mxu0 0
          %1076 = vmatprep.subr.bf16.mxu0 0
          %1077 = vmatpush1.bf16.msra.mxu0 0
          %1078 = vmatprep.subr.bf16.mxu0 0
          %1079 = vmatpush1.bf16.msra.mxu0 %v1059
          %1080 = vmatprep.subr.bf16.mxu0 0
          %1081 = vmatpush1.bf16.msra.mxu0 %v1058
          %1082 = vmatprep.subr.bf16.mxu0 0
          %1083 = vmatpush1.bf16.msra.mxu0 %v1057
          %1084 = vmatprep.subr.bf16.mxu0 0
          %1085 = vmatpush1.bf16.msra.mxu0 %v1056
          %1086 = vmatprep.subr.bf16.mxu0 0
          %1087 = vmatpush2.bf16.msra.mxu0 0
          %1088 = vmatprep.subr.bf16.mxu0 0
          %1089 = vmatpush2.bf16.msra.mxu0 0
          %1090 = vmatprep.subr.bf16.mxu0 0
          %1091 = vmatpush2.bf16.msra.mxu0 0
          %1092 = vmatprep.subr.bf16.mxu0 0
          %1093 = vmatpush2.bf16.msra.mxu0 0
          %1094 = vmatprep.subr.bf16.mxu0 0
          %1095 = vmatpush2.bf16.msra.mxu0 0
          %1096 = vmatprep.subr.bf16.mxu0 0
          %1097 = vmatpush2.bf16.msra.mxu0 0
          %1098 = vmatprep.subr.bf16.mxu0 0
          %1099 = vmatpush2.bf16.msra.mxu0 0
          %1100 = vmatprep.subr.bf16.mxu0 0
          %1101 = vmatpush2.bf16.msra.mxu0 0
          %1102 = vmatprep.mubr.bf16.mxu0 0
          %1103 = vmatmul.mubr.bf16.gmra.mxu0 %v1065
          %v1104 = vpop.f32.mrf.mxu0
          %v1105 = vadd.f32 %v1038, %v1104
          %v1106 = vpop.f32.mrf.mxu0
          %v1107 = vpop.f32.mrf.mxu0
          %v1108 = vadd.f32 %v1038, %v1107
          %v1109 = vpop.f32.mrf.mxu0
          %1110 = vmatprep.mubr.bf16.mxu0 0
          %1111 = vmatmul.mubr.bf16.gmra.mxu0 %v1068
          %v1112 = vpop.f32.mrf.mxu0
          %v1113 = vadd.f32 %v1038, %v1112
          %v1114 = vpop.f32.mrf.mxu0
          %v1115 = vpop.f32.mrf.mxu0
          %v1116 = vadd.f32 %v1038, %v1115
          %v1117 = vpop.f32.mrf.mxu0
          %1118 = vdwg.mxu0
          %v1119 = vld [vmem:[%s5] sm:$0x1]
          %v1120 = vld [vmem:[%s6] sm:$0x1]
          %vm1121 = vcmask 261120
          %v1122 = vsel %vm1121, %v1105, 0.0
          %1123 = vadd.xlane.f32.xlu0 %v1122
          %v1124 = vpop.xlane.xlu0 %1123
          %v1125 = vsel %vm1121, %v1108, 0.0
          %1126 = vadd.xlane.f32.xlu0 %v1125
          %v1127 = vpop.xlane.xlu0 %1126
          %v1128 = vsel %vm1121, %v1113, 0.0
          %1129 = vadd.xlane.f32.xlu0 %v1128
          %v1130 = vpop.xlane.xlu0 %1129
          %v1131 = vsel %vm1121, %v1116, 0.0
          %1132 = vadd.xlane.f32.xlu0 %v1131
          %v1133 = vpop.xlane.xlu0 %1132
          %v1134 = vrcp.pop 32.0
          %v1135 = vmul.f32 %v1124, %v1134
          %v1136 = vmul.f32 %v1127, %v1134
          %v1137 = vmul.f32 %v1130, %v1134
          %v1138 = vmul.f32 %v1133, %v1134
          %v1139 = vsub.f32 %v1105, %v1135
          %v1140 = vsub.f32 %v1108, %v1136
          %v1141 = vsub.f32 %v1113, %v1137
          %v1142 = vsub.f32 %v1116, %v1138
          %v1143 = vmul.f32 %v1139, %v1139
          %v1144 = vmul.f32 %v1140, %v1140
          %v1145 = vmul.f32 %v1141, %v1141
          %v1146 = vmul.f32 %v1142, %v1142
          %v1147 = vsel %vm1121, %v1143, 0.0
          %1148 = vadd.xlane.f32.xlu0 %v1147
          %v1149 = vpop.xlane.xlu0 %1148
          %v1150 = vsel %vm1121, %v1144, 0.0
          %1151 = vadd.xlane.f32.xlu0 %v1150
          %v1152 = vpop.xlane.xlu0 %1151
          %v1153 = vsel %vm1121, %v1145, 0.0
          %1154 = vadd.xlane.f32.xlu0 %v1153
          %v1155 = vpop.xlane.xlu0 %1154
          %v1156 = vsel %vm1121, %v1146, 0.0
          %1157 = vadd.xlane.f32.xlu0 %v1156
          %v1158 = vpop.xlane.xlu0 %1157
          %v1159 = vmul.f32 %v1149, %v1134
          %v1160 = vmul.f32 %v1152, %v1134
          %v1161 = vmul.f32 %v1155, %v1134
          %v1162 = vmul.f32 %v1158, %v1134
          %v1163 = vadd.f32 %v1159, 1e-05
          %v1164 = vadd.f32 %v1160, 1e-05
          %v1165 = vadd.f32 %v1161, 1e-05
          %v1166 = vadd.f32 %v1162, 1e-05
          %v1167 = vrsqrt.pop %v1163
          %v1168 = vrsqrt.pop %v1164
          %v1169 = vrsqrt.pop %v1165
          %v1170 = vrsqrt.pop %v1166
          %v1171 = vmul.f32 %v1139, %v1167
          %v1172 = vmul.f32 %v1140, %v1168
          %v1173 = vmul.f32 %v1141, %v1169
          %v1174 = vmul.f32 %v1142, %v1170
          %v1176 = vlaneseq
          %v1177 = vshrl.u32 %v1176, 7
          %v1178 = vsub.s32 0, %v1177
          %v1179 = vrot.slane %v1119, %v1178
          %v1181 = vmul.f32 %v1171, %v1179
          %v1182 = vmul.f32 %v1172, %v1179
          %v1183 = vmul.f32 %v1173, %v1179
          %v1184 = vmul.f32 %v1174, %v1179
          %v1186 = vlaneseq
          %v1187 = vshrl.u32 %v1186, 7
          %v1188 = vsub.s32 0, %v1187
          %v1189 = vrot.slane %v1120, %v1188
          %v1191 = vadd.f32 %v1181, %v1189
          %v1192 = vadd.f32 %v1182, %v1189
          %v1193 = vadd.f32 %v1183, %v1189
          %v1194 = vadd.f32 %v1184, %v1189
          %v1195 = vld [vmem:[%s7] sm:$0xff]
          %v1196 = vld [vmem:[%s7 + $0x8] sm:$0xff]
          %v1197 = vadd.f32 %v1191, %v1195
          %v1198 = vadd.f32 %v1192, %v1196
          %v1199 = vadd.f32 %v1193, %v1195
          %v1200 = vadd.f32 %v1194, %v1196
          %1201 = vst.msk [vmem:[#allocation2] sm:$0xff] %vm1121, %v1197
          %1202 = vst.msk [vmem:[#allocation2 + $0x8] sm:$0xff] %vm1121, %v1198
          %1203 = vst.msk [vmem:[#allocation2 + $0x10] sm:$0xff] %vm1121, %v1199
          %1204 = vst.msk [vmem:[#allocation2 + $0x18] sm:$0xff] %vm1121, %v1200
        $region120: #{vit_forward.1} parent=115 // pred_fallthru
          _
        %v1205 = vld [vmem:[#allocation2] sm:$0xff]
        %v1206 = vld [vmem:[#allocation2 + $0x8] sm:$0xff]
        %v1207 = vld [vmem:[#allocation2 + $0x10] sm:$0xff]
        %v1208 = vld [vmem:[#allocation2 + $0x18] sm:$0xff]
        %v1209 = vld [vmem:[%s896] sm:$0x1]
        %v1210 = vld [vmem:[%s899] sm:$0x1]
        %vm1211 = vcmask 261120
        %v1212 = vsel %vm1211, %v1205, 0.0
        %1213 = vadd.xlane.f32.xlu0 %v1212
        %v1214 = vpop.xlane.xlu0 %1213
        %v1215 = vsel %vm1211, %v1206, 0.0
        %1216 = vadd.xlane.f32.xlu0 %v1215
        %v1217 = vpop.xlane.xlu0 %1216
        %v1218 = vsel %vm1211, %v1207, 0.0
        %1219 = vadd.xlane.f32.xlu0 %v1218
        %v1220 = vpop.xlane.xlu0 %1219
        %v1221 = vsel %vm1211, %v1208, 0.0
        %1222 = vadd.xlane.f32.xlu0 %v1221
        %v1223 = vpop.xlane.xlu0 %1222
        %v1224 = vrcp.pop 32.0
        %v1225 = vmul.f32 %v1214, %v1224
        %v1226 = vmul.f32 %v1217, %v1224
        %v1227 = vmul.f32 %v1220, %v1224
        %v1228 = vmul.f32 %v1223, %v1224
        %v1229 = vsub.f32 %v1205, %v1225
        %v1230 = vsub.f32 %v1206, %v1226
        %v1231 = vsub.f32 %v1207, %v1227
        %v1232 = vsub.f32 %v1208, %v1228
        %v1233 = vmul.f32 %v1229, %v1229
        %v1234 = vmul.f32 %v1230, %v1230
        %v1235 = vmul.f32 %v1231, %v1231
        %v1236 = vmul.f32 %v1232, %v1232
        %v1237 = vsel %vm1211, %v1233, 0.0
        %1238 = vadd.xlane.f32.xlu0 %v1237
        %v1239 = vpop.xlane.xlu0 %1238
        %v1240 = vsel %vm1211, %v1234, 0.0
        %1241 = vadd.xlane.f32.xlu0 %v1240
        %v1242 = vpop.xlane.xlu0 %1241
        %v1243 = vsel %vm1211, %v1235, 0.0
        %1244 = vadd.xlane.f32.xlu0 %v1243
        %v1245 = vpop.xlane.xlu0 %1244
        %v1246 = vsel %vm1211, %v1236, 0.0
        %1247 = vadd.xlane.f32.xlu0 %v1246
        %v1248 = vpop.xlane.xlu0 %1247
        %v1249 = vmul.f32 %v1239, %v1224
        %v1250 = vmul.f32 %v1242, %v1224
        %v1251 = vmul.f32 %v1245, %v1224
        %v1252 = vmul.f32 %v1248, %v1224
        %v1253 = vadd.f32 %v1249, 1e-05
        %v1254 = vadd.f32 %v1250, 1e-05
        %v1255 = vadd.f32 %v1251, 1e-05
        %v1256 = vadd.f32 %v1252, 1e-05
        %v1257 = vrsqrt.pop %v1253
        %v1258 = vrsqrt.pop %v1254
        %v1259 = vrsqrt.pop %v1255
        %v1260 = vrsqrt.pop %v1256
        %v1261 = vmul.f32 %v1229, %v1257
        %v1262 = vmul.f32 %v1230, %v1258
        %v1263 = vmul.f32 %v1231, %v1259
        %v1264 = vmul.f32 %v1232, %v1260
        %v1266 = vlaneseq
        %v1267 = vshrl.u32 %v1266, 7
        %v1268 = vsub.s32 0, %v1267
        %v1269 = vrot.slane %v1209, %v1268
        %v1271 = vmul.f32 %v1261, %v1269
        %v1272 = vmul.f32 %v1262, %v1269
        %v1273 = vmul.f32 %v1263, %v1269
        %v1274 = vmul.f32 %v1264, %v1269
        %v1276 = vlaneseq
        %v1277 = vshrl.u32 %v1276, 7
        %v1278 = vsub.s32 0, %v1277
        %v1279 = vrot.slane %v1210, %v1278
        %v1281 = vadd.f32 %v1271, %v1279
        %v1282 = vadd.f32 %v1272, %v1279
        %v1283 = vadd.f32 %v1273, %v1279
        %v1284 = vadd.f32 %v1274, %v1279
        %v1285 = vpack.c.bf16 %v1282, %v1281
        %v1286 = vpack.c.bf16 %v1284, %v1283
        %v1287 = vld [vmem:[%s904] sm:$0xf]
        %v1288 = vld [vmem:[%s904 + $0x4] sm:$0xf]
        %v1289 = vld [vmem:[%s904 + $0x8] sm:$0xf]
        %v1290 = vld [vmem:[%s904 + $0xc] sm:$0xf]
        %v1291 = vld [vmem:[%s907] sm:$0x1]
        %v1293 = vlaneseq
        %v1294 = vshrl.u32 %v1293, 7
        %v1295 = vsub.s32 0, %v1294
        %v1296 = vrot.slane %v1291, %v1295
        %v1302 = vunpack.c.l.b16 %v1287
        %v1303 = vunpack.c.l.b16 %v1288
        %v1304 = vunpack.c.l.b16 %v1289
        %v1305 = vunpack.c.l.b16 %v1290
        %v1306 = vpack.c.b16 %v1303, %v1302
        %v1307 = vpack.c.b16 %v1305, %v1304
        %v1311 = vsel %vm1211, %v1285, 0
        %v1314 = vsel %vm1211, %v1286, 0
        %1316 = vmatprep.subr.bf16.mxu0 0
        %1317 = vmatpush1.bf16.msra.mxu0 0
        %1318 = vmatprep.subr.bf16.mxu0 0
        %1319 = vmatpush1.bf16.msra.mxu0 0
        %1320 = vmatprep.subr.bf16.mxu0 0
        %1321 = vmatpush1.bf16.msra.mxu0 0
        %1322 = vmatprep.subr.bf16.mxu0 0
        %1323 = vmatpush1.bf16.msra.mxu0 0
        %1324 = vmatprep.subr.bf16.mxu0 0
        %1325 = vmatpush1.bf16.msra.mxu0 0
        %1326 = vmatprep.subr.bf16.mxu0 0
        %1327 = vmatpush1.bf16.msra.mxu0 0
        %1328 = vmatprep.subr.bf16.mxu0 0
        %1329 = vmatpush1.bf16.msra.mxu0 %v1307
        %1330 = vmatprep.subr.bf16.mxu0 0
        %1331 = vmatpush1.bf16.msra.mxu0 %v1306
        %1332 = vmatprep.subr.bf16.mxu0 0
        %1333 = vmatpush2.bf16.msra.mxu0 0
        %1334 = vmatprep.subr.bf16.mxu0 0
        %1335 = vmatpush2.bf16.msra.mxu0 0
        %1336 = vmatprep.subr.bf16.mxu0 0
        %1337 = vmatpush2.bf16.msra.mxu0 0
        %1338 = vmatprep.subr.bf16.mxu0 0
        %1339 = vmatpush2.bf16.msra.mxu0 0
        %1340 = vmatprep.subr.bf16.mxu0 0
        %1341 = vmatpush2.bf16.msra.mxu0 0
        %1342 = vmatprep.subr.bf16.mxu0 0
        %1343 = vmatpush2.bf16.msra.mxu0 0
        %1344 = vmatprep.subr.bf16.mxu0 0
        %1345 = vmatpush2.bf16.msra.mxu0 0
        %1346 = vmatprep.subr.bf16.mxu0 0
        %1347 = vmatpush2.bf16.msra.mxu0 0
        %1348 = vmatprep.mubr.bf16.mxu0 0
        %1349 = vmatmul.mubr.bf16.gmra.mxu0 %v1311
        %v1350 = vpop.f32.mrf.mxu0
        %v1351 = vadd.f32 %v1296, %v1350
        %v1352 = vpop.f32.mrf.mxu0
        %v1353 = vpop.f32.mrf.mxu0
        %v1354 = vadd.f32 %v1296, %v1353
        %v1355 = vpop.f32.mrf.mxu0
        %1356 = vmatprep.mubr.bf16.mxu0 0
        %1357 = vmatmul.mubr.bf16.gmra.mxu0 %v1314
        %v1358 = vpop.f32.mrf.mxu0
        %v1359 = vadd.f32 %v1296, %v1358
        %v1360 = vpop.f32.mrf.mxu0
        %v1361 = vpop.f32.mrf.mxu0
        %v1362 = vadd.f32 %v1296, %v1361
        %v1363 = vpop.f32.mrf.mxu0
        %1364 = vdwg.mxu0
        %v1365 = vld [vmem:[%s912] sm:$0xf]
        %v1366 = vld [vmem:[%s912 + $0x4] sm:$0xf]
        %v1367 = vld [vmem:[%s912 + $0x8] sm:$0xf]
        %v1368 = vld [vmem:[%s912 + $0xc] sm:$0xf]
        %v1369 = vmul.f32 %v1351, 0.25
        %v1370 = vmul.f32 %v1354, 0.25
        %v1371 = vpack.c.bf16 %v1370, %v1369
        %v1372 = vpack.c.bf16 %v1354, %v1351
        %1374 = vrot.lane.b32.xlu0 %v1372, 96
        %v1375 = vpop.permute.xlu0 %1374
        %vm1376 = vcmask 130048
        %v1378 = vsel %vm1376, %v1371, 0
        %v1381 = vsel %vm1376, %v1375, 0
        %1383 = vmatprep.subr.bf16.mxu0 0
        %1384 = vmatpush1.bf16.xpose.msra.mxu0 0
        %1385 = vmatprep.subr.bf16.mxu0 0
        %1386 = vmatpush1.bf16.xpose.msra.mxu0 0
        %1387 = vmatprep.subr.bf16.mxu0 0
        %1388 = vmatpush1.bf16.xpose.msra.mxu0 0
        %1389 = vmatprep.subr.bf16.mxu0 0
        %1390 = vmatpush1.bf16.xpose.msra.mxu0 0
        %1391 = vmatprep.subr.bf16.mxu0 0
        %1392 = vmatpush1.bf16.xpose.msra.mxu0 0
        %1393 = vmatprep.subr.bf16.mxu0 0
        %1394 = vmatpush1.bf16.xpose.msra.mxu0 0
        %1395 = vmatprep.subr.bf16.mxu0 0
        %1396 = vmatpush1.bf16.xpose.msra.mxu0 0
        %1397 = vmatprep.subr.bf16.mxu0 0
        %1398 = vmatpush1.bf16.xpose.msra.mxu0 %v1381
        %1399 = vmatprep.subr.bf16.mxu0 0
        %1400 = vmatpush2.bf16.xpose.msra.mxu0 0
        %1401 = vmatprep.subr.bf16.mxu0 0
        %1402 = vmatpush2.bf16.xpose.msra.mxu0 0
        %1403 = vmatprep.subr.bf16.mxu0 0
        %1404 = vmatpush2.bf16.xpose.msra.mxu0 0
        %1405 = vmatprep.subr.bf16.mxu0 0
        %1406 = vmatpush2.bf16.xpose.msra.mxu0 0
        %1407 = vmatprep.subr.bf16.mxu0 0
        %1408 = vmatpush2.bf16.xpose.msra.mxu0 0
        %1409 = vmatprep.subr.bf16.mxu0 0
        %1410 = vmatpush2.bf16.xpose.msra.mxu0 0
        %1411 = vmatprep.subr.bf16.mxu0 0
        %1412 = vmatpush2.bf16.xpose.msra.mxu0 0
        %1413 = vmatprep.subr.bf16.mxu0 0
        %1414 = vmatpush2.bf16.xpose.msra.mxu0 0
        %1415 = vmatprep.mubr.bf16.mxu0 0
        %1416 = vmatmul.mubr.bf16.gmra.mxu0 %v1378
        %v1417 = vpop.f32.mrf.mxu0
        %v1418 = vadd.f32 0.0, %v1417
        %v1419 = vpop.f32.mrf.mxu0
        %v1420 = vpop.f32.mrf.mxu0
        %v1421 = vadd.f32 0.0, %v1420
        %v1422 = vpop.f32.mrf.mxu0
        %1423 = vdwg.mxu0
        %v1424 = vsel %vm1376, %v1418, -inf
        %1425 = vmax.xlane.f32.xlu0 %v1424
        %v1426 = vpop.xlane.xlu0 %1425
        %v1427 = vsel %vm1376, %v1421, -inf
        %1428 = vmax.xlane.f32.xlu0 %v1427
        %v1429 = vpop.xlane.xlu0 %1428
        %v1430 = vsub.f32 %v1418, %v1426
        %v1431 = vsub.f32 %v1421, %v1429
        %v1432 = vmul.f32 %v1430, 1.442695
        %v1433 = vpow.pop %v1432
        %v1434 = vmul.f32 %v1431, 1.442695
        %v1435 = vpow.pop %v1434
        %v1436 = vsel %vm1376, %v1433, 0.0
        %1437 = vadd.xlane.f32.xlu0 %v1436
        %v1438 = vpop.xlane.xlu0 %1437
        %v1439 = vsel %vm1376, %v1435, 0.0
        %1440 = vadd.xlane.f32.xlu0 %v1439
        %v1441 = vpop.xlane.xlu0 %1440
        %v1442 = vrcp.pop %v1438
        %v1443 = vrcp.pop %v1441
        %v1444 = vmul.f32 %v1433, %v1442
        %v1445 = vmul.f32 %v1435, %v1443
        %v1446 = vpack.c.bf16 %v1445, %v1444
        %1447 = vrot.lane.b32.xlu0 %v1372, 64
        %v1448 = vpop.permute.xlu0 %1447
        %v1451 = vsel %vm1376, %v1446, 0
        %1453 = vmatprep.subr.bf16.mxu0 0
        %1454 = vmatpush1.bf16.msra.mxu0 0
        %1455 = vmatprep.subr.bf16.mxu0 0
        %1456 = vmatpush1.bf16.msra.mxu0 0
        %1457 = vmatprep.subr.bf16.mxu0 0
        %1458 = vmatpush1.bf16.msra.mxu0 0
        %1459 = vmatprep.subr.bf16.mxu0 0
        %1460 = vmatpush1.bf16.msra.mxu0 0
        %1461 = vmatprep.subr.bf16.mxu0 0
        %1462 = vmatpush1.bf16.msra.mxu0 0
        %1463 = vmatprep.subr.bf16.mxu0 0
        %1464 = vmatpush1.bf16.msra.mxu0 0
        %1465 = vmatprep.subr.bf16.mxu0 0
        %1466 = vmatpush1.bf16.msra.mxu0 0
        %1467 = vmatprep.subr.bf16.mxu0 0
        %1468 = vmatpush1.bf16.msra.mxu0 %v1448
        %1469 = vmatprep.subr.bf16.mxu0 0
        %1470 = vmatpush2.bf16.msra.mxu0 0
        %1471 = vmatprep.subr.bf16.mxu0 0
        %1472 = vmatpush2.bf16.msra.mxu0 0
        %1473 = vmatprep.subr.bf16.mxu0 0
        %1474 = vmatpush2.bf16.msra.mxu0 0
        %1475 = vmatprep.subr.bf16.mxu0 0
        %1476 = vmatpush2.bf16.msra.mxu0 0
        %1477 = vmatprep.subr.bf16.mxu0 0
        %1478 = vmatpush2.bf16.msra.mxu0 0
        %1479 = vmatprep.subr.bf16.mxu0 0
        %1480 = vmatpush2.bf16.msra.mxu0 0
        %1481 = vmatprep.subr.bf16.mxu0 0
        %1482 = vmatpush2.bf16.msra.mxu0 0
        %1483 = vmatprep.subr.bf16.mxu0 0
        %1484 = vmatpush2.bf16.msra.mxu0 0
        %1485 = vmatprep.mubr.bf16.mxu0 0
        %1486 = vmatmul.mubr.bf16.gmra.mxu0 %v1451
        %v1487 = vpop.f32.mrf.mxu0
        %v1488 = vadd.f32 0.0, %v1487
        %v1489 = vpop.f32.mrf.mxu0
        %v1490 = vpop.f32.mrf.mxu0
        %v1491 = vadd.f32 0.0, %v1490
        %v1492 = vpop.f32.mrf.mxu0
        %1493 = vdwg.mxu0
        %v1494 = vpack.c.bf16 %v1491, %v1488
        %1496 = vrot.lane.b32.xlu0 %v1371, 112
        %v1497 = vpop.permute.xlu0 %1496
        %1498 = vrot.lane.b32.xlu0 %v1372, 80
        %v1499 = vpop.permute.xlu0 %1498
        %v1501 = vsel %vm1376, %v1497, 0
        %v1504 = vsel %vm1376, %v1499, 0
        %1506 = vmatprep.subr.bf16.mxu0 0
        %1507 = vmatpush1.bf16.xpose.msra.mxu0 0
        %1508 = vmatprep.subr.bf16.mxu0 0
        %1509 = vmatpush1.bf16.xpose.msra.mxu0 0
        %1510 = vmatprep.subr.bf16.mxu0 0
        %1511 = vmatpush1.bf16.xpose.msra.mxu0 0
        %1512 = vmatprep.subr.bf16.mxu0 0
        %1513 = vmatpush1.bf16.xpose.msra.mxu0 0
        %1514 = vmatprep.subr.bf16.mxu0 0
        %1515 = vmatpush1.bf16.xpose.msra.mxu0 0
        %1516 = vmatprep.subr.bf16.mxu0 0
        %1517 = vmatpush1.bf16.xpose.msra.mxu0 0
        %1518 = vmatprep.subr.bf16.mxu0 0
        %1519 = vmatpush1.bf16.xpose.msra.mxu0 0
        %1520 = vmatprep.subr.bf16.mxu0 0
        %1521 = vmatpush1.bf16.xpose.msra.mxu0 %v1504
        %1522 = vmatprep.subr.bf16.mxu0 0
        %1523 = vmatpush2.bf16.xpose.msra.mxu0 0
        %1524 = vmatprep.subr.bf16.mxu0 0
        %1525 = vmatpush2.bf16.xpose.msra.mxu0 0
        %1526 = vmatprep.subr.bf16.mxu0 0
        %1527 = vmatpush2.bf16.xpose.msra.mxu0 0
        %1528 = vmatprep.subr.bf16.mxu0 0
        %1529 = vmatpush2.bf16.xpose.msra.mxu0 0
        %1530 = vmatprep.subr.bf16.mxu0 0
        %1531 = vmatpush2.bf16.xpose.msra.mxu0 0
        %1532 = vmatprep.subr.bf16.mxu0 0
        %1533 = vmatpush2.bf16.xpose.msra.mxu0 0
        %1534 = vmatprep.subr.bf16.mxu0 0
        %1535 = vmatpush2.bf16.xpose.msra.mxu0 0
        %1536 = vmatprep.subr.bf16.mxu0 0
        %1537 = vmatpush2.bf16.xpose.msra.mxu0 0
        %1538 = vmatprep.mubr.bf16.mxu0 0
        %1539 = vmatmul.mubr.bf16.gmra.mxu0 %v1501
        %v1540 = vpop.f32.mrf.mxu0
        %v1541 = vadd.f32 0.0, %v1540
        %v1542 = vpop.f32.mrf.mxu0
        %v1543 = vpop.f32.mrf.mxu0
        %v1544 = vadd.f32 0.0, %v1543
        %v1545 = vpop.f32.mrf.mxu0
        %1546 = vdwg.mxu0
        %v1547 = vsel %vm1376, %v1541, -inf
        %1548 = vmax.xlane.f32.xlu0 %v1547
        %v1549 = vpop.xlane.xlu0 %1548
        %v1550 = vsel %vm1376, %v1544, -inf
        %1551 = vmax.xlane.f32.xlu0 %v1550
        %v1552 = vpop.xlane.xlu0 %1551
        %v1553 = vsub.f32 %v1541, %v1549
        %v1554 = vsub.f32 %v1544, %v1552
        %v1555 = vmul.f32 %v1553, 1.442695
        %v1556 = vpow.pop %v1555
        %v1557 = vmul.f32 %v1554, 1.442695
        %v1558 = vpow.pop %v1557
        %v1559 = vsel %vm1376, %v1556, 0.0
        %1560 = vadd.xlane.f32.xlu0 %v1559
        %v1561 = vpop.xlane.xlu0 %1560
        %v1562 = vsel %vm1376, %v1558, 0.0
        %1563 = vadd.xlane.f32.xlu0 %v1562
        %v1564 = vpop.xlane.xlu0 %1563
        %v1565 = vrcp.pop %v1561
        %v1566 = vrcp.pop %v1564
        %v1567 = vmul.f32 %v1556, %v1565
        %v1568 = vmul.f32 %v1558, %v1566
        %v1569 = vpack.c.bf16 %v1568, %v1567
        %1570 = vrot.lane.b32.xlu0 %v1372, 48
        %v1571 = vpop.permute.xlu0 %1570
        %v1574 = vsel %vm1376, %v1569, 0
        %1576 = vmatprep.subr.bf16.mxu0 0
        %1577 = vmatpush1.bf16.msra.mxu0 0
        %1578 = vmatprep.subr.bf16.mxu0 0
        %1579 = vmatpush1.bf16.msra.mxu0 0
        %1580 = vmatprep.subr.bf16.mxu0 0
        %1581 = vmatpush1.bf16.msra.mxu0 0
        %1582 = vmatprep.subr.bf16.mxu0 0
        %1583 = vmatpush1.bf16.msra.mxu0 0
        %1584 = vmatprep.subr.bf16.mxu0 0
        %1585 = vmatpush1.bf16.msra.mxu0 0
        %1586 = vmatprep.subr.bf16.mxu0 0
        %1587 = vmatpush1.bf16.msra.mxu0 0
        %1588 = vmatprep.subr.bf16.mxu0 0
        %1589 = vmatpush1.bf16.msra.mxu0 0
        %1590 = vmatprep.subr.bf16.mxu0 0
        %1591 = vmatpush1.bf16.msra.mxu0 %v1571
        %1592 = vmatprep.subr.bf16.mxu0 0
        %1593 = vmatpush2.bf16.msra.mxu0 0
        %1594 = vmatprep.subr.bf16.mxu0 0
        %1595 = vmatpush2.bf16.msra.mxu0 0
        %1596 = vmatprep.subr.bf16.mxu0 0
        %1597 = vmatpush2.bf16.msra.mxu0 0
        %1598 = vmatprep.subr.bf16.mxu0 0
        %1599 = vmatpush2.bf16.msra.mxu0 0
        %1600 = vmatprep.subr.bf16.mxu0 0
        %1601 = vmatpush2.bf16.msra.mxu0 0
        %1602 = vmatprep.subr.bf16.mxu0 0
        %1603 = vmatpush2.bf16.msra.mxu0 0
        %1604 = vmatprep.subr.bf16.mxu0 0
        %1605 = vmatpush2.bf16.msra.mxu0 0
        %1606 = vmatprep.subr.bf16.mxu0 0
        %1607 = vmatpush2.bf16.msra.mxu0 0
        %1608 = vmatprep.mubr.bf16.mxu0 0
        %1609 = vmatmul.mubr.bf16.gmra.mxu0 %v1574
        %v1610 = vpop.f32.mrf.mxu0
        %v1611 = vadd.f32 0.0, %v1610
        %v1612 = vpop.f32.mrf.mxu0
        %v1613 = vpop.f32.mrf.mxu0
        %v1614 = vadd.f32 0.0, %v1613
        %v1615 = vpop.f32.mrf.mxu0
        %1616 = vdwg.mxu0
        %v1617 = vpack.c.bf16 %v1614, %v1611
        %v1620 = vunpack.c.l.b16 %v1367
        %v1621 = vunpack.c.l.b16 %v1368
        %v1622 = vpack.c.b16 %v1621, %v1620
        %v1625 = vsel %vm1376, %v1617, 0
        %1627 = vmatprep.subr.bf16.mxu0 0
        %1628 = vmatpush1.bf16.msra.mxu0 0
        %1629 = vmatprep.subr.bf16.mxu0 0
        %1630 = vmatpush1.bf16.msra.mxu0 0
        %1631 = vmatprep.subr.bf16.mxu0 0
        %1632 = vmatpush1.bf16.msra.mxu0 0
        %1633 = vmatprep.subr.bf16.mxu0 0
        %1634 = vmatpush1.bf16.msra.mxu0 0
        %1635 = vmatprep.subr.bf16.mxu0 0
        %1636 = vmatpush1.bf16.msra.mxu0 0
        %1637 = vmatprep.subr.bf16.mxu0 0
        %1638 = vmatpush1.bf16.msra.mxu0 0
        %1639 = vmatprep.subr.bf16.mxu0 0
        %1640 = vmatpush1.bf16.msra.mxu0 0
        %1641 = vmatprep.subr.bf16.mxu0 0
        %1642 = vmatpush1.bf16.msra.mxu0 %v1622
        %1643 = vmatprep.subr.bf16.mxu0 0
        %1644 = vmatpush2.bf16.msra.mxu0 0
        %1645 = vmatprep.subr.bf16.mxu0 0
        %1646 = vmatpush2.bf16.msra.mxu0 0
        %1647 = vmatprep.subr.bf16.mxu0 0
        %1648 = vmatpush2.bf16.msra.mxu0 0
        %1649 = vmatprep.subr.bf16.mxu0 0
        %1650 = vmatpush2.bf16.msra.mxu0 0
        %1651 = vmatprep.subr.bf16.mxu0 0
        %1652 = vmatpush2.bf16.msra.mxu0 0
        %1653 = vmatprep.subr.bf16.mxu0 0
        %1654 = vmatpush2.bf16.msra.mxu0 0
        %1655 = vmatprep.subr.bf16.mxu0 0
        %1656 = vmatpush2.bf16.msra.mxu0 0
        %1657 = vmatprep.subr.bf16.mxu0 0
        %1658 = vmatpush2.bf16.msra.mxu0 0
        %1659 = vmatprep.mubr.bf16.mxu0 0
        %1660 = vmatmul.mubr.bf16.gmra.mxu0 %v1625
        %v1661 = vpop.f32.mrf.mxu0
        %v1662 = vadd.f32 0.0, %v1661
        %v1663 = vpop.f32.mrf.mxu0
        %v1664 = vpop.f32.mrf.mxu0
        %v1665 = vadd.f32 0.0, %v1664
        %v1666 = vpop.f32.mrf.mxu0
        %1667 = vdwg.mxu0
        %v1670 = vunpack.c.l.b16 %v1365
        %v1671 = vunpack.c.l.b16 %v1366
        %v1672 = vpack.c.b16 %v1671, %v1670
        %v1675 = vsel %vm1376, %v1494, 0
        %1677 = vmatprep.subr.bf16.mxu0 0
        %1678 = vmatpush1.bf16.msra.mxu0 0
        %1679 = vmatprep.subr.bf16.mxu0 0
        %1680 = vmatpush1.bf16.msra.mxu0 0
        %1681 = vmatprep.subr.bf16.mxu0 0
        %1682 = vmatpush1.bf16.msra.mxu0 0
        %1683 = vmatprep.subr.bf16.mxu0 0
        %1684 = vmatpush1.bf16.msra.mxu0 0
        %1685 = vmatprep.subr.bf16.mxu0 0
        %1686 = vmatpush1.bf16.msra.mxu0 0
        %1687 = vmatprep.subr.bf16.mxu0 0
        %1688 = vmatpush1.bf16.msra.mxu0 0
        %1689 = vmatprep.subr.bf16.mxu0 0
        %1690 = vmatpush1.bf16.msra.mxu0 0
        %1691 = vmatprep.subr.bf16.mxu0 0
        %1692 = vmatpush1.bf16.msra.mxu0 %v1672
        %1693 = vmatprep.subr.bf16.mxu0 0
        %1694 = vmatpush2.bf16.msra.mxu0 0
        %1695 = vmatprep.subr.bf16.mxu0 0
        %1696 = vmatpush2.bf16.msra.mxu0 0
        %1697 = vmatprep.subr.bf16.mxu0 0
        %1698 = vmatpush2.bf16.msra.mxu0 0
        %1699 = vmatprep.subr.bf16.mxu0 0
        %1700 = vmatpush2.bf16.msra.mxu0 0
        %1701 = vmatprep.subr.bf16.mxu0 0
        %1702 = vmatpush2.bf16.msra.mxu0 0
        %1703 = vmatprep.subr.bf16.mxu0 0
        %1704 = vmatpush2.bf16.msra.mxu0 0
        %1705 = vmatprep.subr.bf16.mxu0 0
        %1706 = vmatpush2.bf16.msra.mxu0 0
        %1707 = vmatprep.subr.bf16.mxu0 0
        %1708 = vmatpush2.bf16.msra.mxu0 0
        %1709 = vmatprep.mubr.bf16.mxu0 0
        %1710 = vmatmul.mubr.bf16.gmra.mxu0 %v1675
        %v1711 = vpop.f32.mrf.mxu0
        %v1712 = vadd.f32 %v1662, %v1711
        %v1713 = vpop.f32.mrf.mxu0
        %v1714 = vpop.f32.mrf.mxu0
        %v1715 = vadd.f32 %v1665, %v1714
        %v1716 = vpop.f32.mrf.mxu0
        %1717 = vdwg.mxu0
        %v1718 = vmul.f32 %v1359, 0.25
        %v1719 = vmul.f32 %v1362, 0.25
        %v1720 = vpack.c.bf16 %v1719, %v1718
        %v1721 = vpack.c.bf16 %v1362, %v1359
        %1723 = vrot.lane.b32.xlu0 %v1721, 96
        %v1724 = vpop.permute.xlu0 %1723
        %v1726 = vsel %vm1376, %v1720, 0
        %v1729 = vsel %vm1376, %v1724, 0
        %1731 = vmatprep.subr.bf16.mxu0 0
        %1732 = vmatpush1.bf16.xpose.msra.mxu0 0
        %1733 = vmatprep.subr.bf16.mxu0 0
        %1734 = vmatpush1.bf16.xpose.msra.mxu0 0
        %1735 = vmatprep.subr.bf16.mxu0 0
        %1736 = vmatpush1.bf16.xpose.msra.mxu0 0
        %1737 = vmatprep.subr.bf16.mxu0 0
        %1738 = vmatpush1.bf16.xpose.msra.mxu0 0
        %1739 = vmatprep.subr.bf16.mxu0 0
        %1740 = vmatpush1.bf16.xpose.msra.mxu0 0
        %1741 = vmatprep.subr.bf16.mxu0 0
        %1742 = vmatpush1.bf16.xpose.msra.mxu0 0
        %1743 = vmatprep.subr.bf16.mxu0 0
        %1744 = vmatpush1.bf16.xpose.msra.mxu0 0
        %1745 = vmatprep.subr.bf16.mxu0 0
        %1746 = vmatpush1.bf16.xpose.msra.mxu0 %v1729
        %1747 = vmatprep.subr.bf16.mxu0 0
        %1748 = vmatpush2.bf16.xpose.msra.mxu0 0
        %1749 = vmatprep.subr.bf16.mxu0 0
        %1750 = vmatpush2.bf16.xpose.msra.mxu0 0
        %1751 = vmatprep.subr.bf16.mxu0 0
        %1752 = vmatpush2.bf16.xpose.msra.mxu0 0
        %1753 = vmatprep.subr.bf16.mxu0 0
        %1754 = vmatpush2.bf16.xpose.msra.mxu0 0
        %1755 = vmatprep.subr.bf16.mxu0 0
        %1756 = vmatpush2.bf16.xpose.msra.mxu0 0
        %1757 = vmatprep.subr.bf16.mxu0 0
        %1758 = vmatpush2.bf16.xpose.msra.mxu0 0
        %1759 = vmatprep.subr.bf16.mxu0 0
        %1760 = vmatpush2.bf16.xpose.msra.mxu0 0
        %1761 = vmatprep.subr.bf16.mxu0 0
        %1762 = vmatpush2.bf16.xpose.msra.mxu0 0
        %1763 = vmatprep.mubr.bf16.mxu0 0
        %1764 = vmatmul.mubr.bf16.gmra.mxu0 %v1726
        %v1765 = vpop.f32.mrf.mxu0
        %v1766 = vadd.f32 0.0, %v1765
        %v1767 = vpop.f32.mrf.mxu0
        %v1768 = vpop.f32.mrf.mxu0
        %v1769 = vadd.f32 0.0, %v1768
        %v1770 = vpop.f32.mrf.mxu0
        %1771 = vdwg.mxu0
        %v1772 = vsel %vm1376, %v1766, -inf
        %1773 = vmax.xlane.f32.xlu0 %v1772
        %v1774 = vpop.xlane.xlu0 %1773
        %v1775 = vsel %vm1376, %v1769, -inf
        %1776 = vmax.xlane.f32.xlu0 %v1775
        %v1777 = vpop.xlane.xlu0 %1776
        %v1778 = vsub.f32 %v1766, %v1774
        %v1779 = vsub.f32 %v1769, %v1777
        %v1780 = vmul.f32 %v1778, 1.442695
        %v1781 = vpow.pop %v1780
        %v1782 = vmul.f32 %v1779, 1.442695
        %v1783 = vpow.pop %v1782
        %v1784 = vsel %vm1376, %v1781, 0.0
        %1785 = vadd.xlane.f32.xlu0 %v1784
        %v1786 = vpop.xlane.xlu0 %1785
        %v1787 = vsel %vm1376, %v1783, 0.0
        %1788 = vadd.xlane.f32.xlu0 %v1787
        %v1789 = vpop.xlane.xlu0 %1788
        %v1790 = vrcp.pop %v1786
        %v1791 = vrcp.pop %v1789
        %v1792 = vmul.f32 %v1781, %v1790
        %v1793 = vmul.f32 %v1783, %v1791
        %v1794 = vpack.c.bf16 %v1793, %v1792
        %1795 = vrot.lane.b32.xlu0 %v1721, 64
        %v1796 = vpop.permute.xlu0 %1795
        %v1799 = vsel %vm1376, %v1794, 0
        %1801 = vmatprep.subr.bf16.mxu0 0
        %1802 = vmatpush1.bf16.msra.mxu0 0
        %1803 = vmatprep.subr.bf16.mxu0 0
        %1804 = vmatpush1.bf16.msra.mxu0 0
        %1805 = vmatprep.subr.bf16.mxu0 0
        %1806 = vmatpush1.bf16.msra.mxu0 0
        %1807 = vmatprep.subr.bf16.mxu0 0
        %1808 = vmatpush1.bf16.msra.mxu0 0
        %1809 = vmatprep.subr.bf16.mxu0 0
        %1810 = vmatpush1.bf16.msra.mxu0 0
        %1811 = vmatprep.subr.bf16.mxu0 0
        %1812 = vmatpush1.bf16.msra.mxu0 0
        %1813 = vmatprep.subr.bf16.mxu0 0
        %1814 = vmatpush1.bf16.msra.mxu0 0
        %1815 = vmatprep.subr.bf16.mxu0 0
        %1816 = vmatpush1.bf16.msra.mxu0 %v1796
        %1817 = vmatprep.subr.bf16.mxu0 0
        %1818 = vmatpush2.bf16.msra.mxu0 0
        %1819 = vmatprep.subr.bf16.mxu0 0
        %1820 = vmatpush2.bf16.msra.mxu0 0
        %1821 = vmatprep.subr.bf16.mxu0 0
        %1822 = vmatpush2.bf16.msra.mxu0 0
        %1823 = vmatprep.subr.bf16.mxu0 0
        %1824 = vmatpush2.bf16.msra.mxu0 0
        %1825 = vmatprep.subr.bf16.mxu0 0
        %1826 = vmatpush2.bf16.msra.mxu0 0
        %1827 = vmatprep.subr.bf16.mxu0 0
        %1828 = vmatpush2.bf16.msra.mxu0 0
        %1829 = vmatprep.subr.bf16.mxu0 0
        %1830 = vmatpush2.bf16.msra.mxu0 0
        %1831 = vmatprep.subr.bf16.mxu0 0
        %1832 = vmatpush2.bf16.msra.mxu0 0
        %1833 = vmatprep.mubr.bf16.mxu0 0
        %1834 = vmatmul.mubr.bf16.gmra.mxu0 %v1799
        %v1835 = vpop.f32.mrf.mxu0
        %v1836 = vadd.f32 0.0, %v1835
        %v1837 = vpop.f32.mrf.mxu0
        %v1838 = vpop.f32.mrf.mxu0
        %v1839 = vadd.f32 0.0, %v1838
        %v1840 = vpop.f32.mrf.mxu0
        %1841 = vdwg.mxu0
        %v1842 = vpack.c.bf16 %v1839, %v1836
        %1844 = vrot.lane.b32.xlu0 %v1720, 112
        %v1845 = vpop.permute.xlu0 %1844
        %1846 = vrot.lane.b32.xlu0 %v1721, 80
        %v1847 = vpop.permute.xlu0 %1846
        %v1849 = vsel %vm1376, %v1845, 0
        %v1852 = vsel %vm1376, %v1847, 0
        %1854 = vmatprep.subr.bf16.mxu0 0
        %1855 = vmatpush1.bf16.xpose.msra.mxu0 0
        %1856 = vmatprep.subr.bf16.mxu0 0
        %1857 = vmatpush1.bf16.xpose.msra.mxu0 0
        %1858 = vmatprep.subr.bf16.mxu0 0
        %1859 = vmatpush1.bf16.xpose.msra.mxu0 0
        %1860 = vmatprep.subr.bf16.mxu0 0
        %1861 = vmatpush1.bf16.xpose.msra.mxu0 0
        %1862 = vmatprep.subr.bf16.mxu0 0
        %1863 = vmatpush1.bf16.xpose.msra.mxu0 0
        %1864 = vmatprep.subr.bf16.mxu0 0
        %1865 = vmatpush1.bf16.xpose.msra.mxu0 0
        %1866 = vmatprep.subr.bf16.mxu0 0
        %1867 = vmatpush1.bf16.xpose.msra.mxu0 0
        %1868 = vmatprep.subr.bf16.mxu0 0
        %1869 = vmatpush1.bf16.xpose.msra.mxu0 %v1852
        %1870 = vmatprep.subr.bf16.mxu0 0
        %1871 = vmatpush2.bf16.xpose.msra.mxu0 0
        %1872 = vmatprep.subr.bf16.mxu0 0
        %1873 = vmatpush2.bf16.xpose.msra.mxu0 0
        %1874 = vmatprep.subr.bf16.mxu0 0
        %1875 = vmatpush2.bf16.xpose.msra.mxu0 0
        %1876 = vmatprep.subr.bf16.mxu0 0
        %1877 = vmatpush2.bf16.xpose.msra.mxu0 0
        %1878 = vmatprep.subr.bf16.mxu0 0
        %1879 = vmatpush2.bf16.xpose.msra.mxu0 0
        %1880 = vmatprep.subr.bf16.mxu0 0
        %1881 = vmatpush2.bf16.xpose.msra.mxu0 0
        %1882 = vmatprep.subr.bf16.mxu0 0
        %1883 = vmatpush2.bf16.xpose.msra.mxu0 0
        %1884 = vmatprep.subr.bf16.mxu0 0
        %1885 = vmatpush2.bf16.xpose.msra.mxu0 0
        %1886 = vmatprep.mubr.bf16.mxu0 0
        %1887 = vmatmul.mubr.bf16.gmra.mxu0 %v1849
        %v1888 = vpop.f32.mrf.mxu0
        %v1889 = vadd.f32 0.0, %v1888
        %v1890 = vpop.f32.mrf.mxu0
        %v1891 = vpop.f32.mrf.mxu0
        %v1892 = vadd.f32 0.0, %v1891
        %v1893 = vpop.f32.mrf.mxu0
        %1894 = vdwg.mxu0
        %v1895 = vsel %vm1376, %v1889, -inf
        %1896 = vmax.xlane.f32.xlu0 %v1895
        %v1897 = vpop.xlane.xlu0 %1896
        %v1898 = vsel %vm1376, %v1892, -inf
        %1899 = vmax.xlane.f32.xlu0 %v1898
        %v1900 = vpop.xlane.xlu0 %1899
        %v1901 = vsub.f32 %v1889, %v1897
        %v1902 = vsub.f32 %v1892, %v1900
        %v1903 = vmul.f32 %v1901, 1.442695
        %v1904 = vpow.pop %v1903
        %v1905 = vmul.f32 %v1902, 1.442695
        %v1906 = vpow.pop %v1905
        %v1907 = vsel %vm1376, %v1904, 0.0
        %1908 = vadd.xlane.f32.xlu0 %v1907
        %v1909 = vpop.xlane.xlu0 %1908
        %v1910 = vsel %vm1376, %v1906, 0.0
        %1911 = vadd.xlane.f32.xlu0 %v1910
        %v1912 = vpop.xlane.xlu0 %1911
        %v1913 = vrcp.pop %v1909
        %v1914 = vrcp.pop %v1912
        %v1915 = vmul.f32 %v1904, %v1913
        %v1916 = vmul.f32 %v1906, %v1914
        %v1917 = vpack.c.bf16 %v1916, %v1915
        %1918 = vrot.lane.b32.xlu0 %v1721, 48
        %v1919 = vpop.permute.xlu0 %1918
        %v1922 = vsel %vm1376, %v1917, 0
        %1924 = vmatprep.subr.bf16.mxu0 0
        %1925 = vmatpush1.bf16.msra.mxu0 0
        %1926 = vmatprep.subr.bf16.mxu0 0
        %1927 = vmatpush1.bf16.msra.mxu0 0
        %1928 = vmatprep.subr.bf16.mxu0 0
        %1929 = vmatpush1.bf16.msra.mxu0 0
        %1930 = vmatprep.subr.bf16.mxu0 0
        %1931 = vmatpush1.bf16.msra.mxu0 0
        %1932 = vmatprep.subr.bf16.mxu0 0
        %1933 = vmatpush1.bf16.msra.mxu0 0
        %1934 = vmatprep.subr.bf16.mxu0 0
        %1935 = vmatpush1.bf16.msra.mxu0 0
        %1936 = vmatprep.subr.bf16.mxu0 0
        %1937 = vmatpush1.bf16.msra.mxu0 0
        %1938 = vmatprep.subr.bf16.mxu0 0
        %1939 = vmatpush1.bf16.msra.mxu0 %v1919
        %1940 = vmatprep.subr.bf16.mxu0 0
        %1941 = vmatpush2.bf16.msra.mxu0 0
        %1942 = vmatprep.subr.bf16.mxu0 0
        %1943 = vmatpush2.bf16.msra.mxu0 0
        %1944 = vmatprep.subr.bf16.mxu0 0
        %1945 = vmatpush2.bf16.msra.mxu0 0
        %1946 = vmatprep.subr.bf16.mxu0 0
        %1947 = vmatpush2.bf16.msra.mxu0 0
        %1948 = vmatprep.subr.bf16.mxu0 0
        %1949 = vmatpush2.bf16.msra.mxu0 0
        %1950 = vmatprep.subr.bf16.mxu0 0
        %1951 = vmatpush2.bf16.msra.mxu0 0
        %1952 = vmatprep.subr.bf16.mxu0 0
        %1953 = vmatpush2.bf16.msra.mxu0 0
        %1954 = vmatprep.subr.bf16.mxu0 0
        %1955 = vmatpush2.bf16.msra.mxu0 0
        %1956 = vmatprep.mubr.bf16.mxu0 0
        %1957 = vmatmul.mubr.bf16.gmra.mxu0 %v1922
        %v1958 = vpop.f32.mrf.mxu0
        %v1959 = vadd.f32 0.0, %v1958
        %v1960 = vpop.f32.mrf.mxu0
        %v1961 = vpop.f32.mrf.mxu0
        %v1962 = vadd.f32 0.0, %v1961
        %v1963 = vpop.f32.mrf.mxu0
        %1964 = vdwg.mxu0
        %v1965 = vpack.c.bf16 %v1962, %v1959
        %v1967 = vsel %vm1376, %v1965, 0
        %1969 = vmatprep.subr.bf16.mxu0 0
        %1970 = vmatpush1.bf16.msra.mxu0 0
        %1971 = vmatprep.subr.bf16.mxu0 0
        %1972 = vmatpush1.bf16.msra.mxu0 0
        %1973 = vmatprep.subr.bf16.mxu0 0
        %1974 = vmatpush1.bf16.msra.mxu0 0
        %1975 = vmatprep.subr.bf16.mxu0 0
        %1976 = vmatpush1.bf16.msra.mxu0 0
        %1977 = vmatprep.subr.bf16.mxu0 0
        %1978 = vmatpush1.bf16.msra.mxu0 0
        %1979 = vmatprep.subr.bf16.mxu0 0
        %1980 = vmatpush1.bf16.msra.mxu0 0
        %1981 = vmatprep.subr.bf16.mxu0 0
        %1982 = vmatpush1.bf16.msra.mxu0 0
        %1983 = vmatprep.subr.bf16.mxu0 0
        %1984 = vmatpush1.bf16.msra.mxu0 %v1622
        %1985 = vmatprep.subr.bf16.mxu0 0
        %1986 = vmatpush2.bf16.msra.mxu0 0
        %1987 = vmatprep.subr.bf16.mxu0 0
        %1988 = vmatpush2.bf16.msra.mxu0 0
        %1989 = vmatprep.subr.bf16.mxu0 0
        %1990 = vmatpush2.bf16.msra.mxu0 0
        %1991 = vmatprep.subr.bf16.mxu0 0
        %1992 = vmatpush2.bf16.msra.mxu0 0
        %1993 = vmatprep.subr.bf16.mxu0 0
        %1994 = vmatpush2.bf16.msra.mxu0 0
        %1995 = vmatprep.subr.bf16.mxu0 0
        %1996 = vmatpush2.bf16.msra.mxu0 0
        %1997 = vmatprep.subr.bf16.mxu0 0
        %1998 = vmatpush2.bf16.msra.mxu0 0
        %1999 = vmatprep.subr.bf16.mxu0 0
        %2000 = vmatpush2.bf16.msra.mxu0 0
        %2001 = vmatprep.mubr.bf16.mxu0 0
        %2002 = vmatmul.mubr.bf16.gmra.mxu0 %v1967
        %v2003 = vpop.f32.mrf.mxu0
        %v2004 = vadd.f32 0.0, %v2003
        %v2005 = vpop.f32.mrf.mxu0
        %v2006 = vpop.f32.mrf.mxu0
        %v2007 = vadd.f32 0.0, %v2006
        %v2008 = vpop.f32.mrf.mxu0
        %2009 = vdwg.mxu0
        %v2011 = vsel %vm1376, %v1842, 0
        %2013 = vmatprep.subr.bf16.mxu0 0
        %2014 = vmatpush1.bf16.msra.mxu0 0
        %2015 = vmatprep.subr.bf16.mxu0 0
        %2016 = vmatpush1.bf16.msra.mxu0 0
        %2017 = vmatprep.subr.bf16.mxu0 0
        %2018 = vmatpush1.bf16.msra.mxu0 0
        %2019 = vmatprep.subr.bf16.mxu0 0
        %2020 = vmatpush1.bf16.msra.mxu0 0
        %2021 = vmatprep.subr.bf16.mxu0 0
        %2022 = vmatpush1.bf16.msra.mxu0 0
        %2023 = vmatprep.subr.bf16.mxu0 0
        %2024 = vmatpush1.bf16.msra.mxu0 0
        %2025 = vmatprep.subr.bf16.mxu0 0
        %2026 = vmatpush1.bf16.msra.mxu0 0
        %2027 = vmatprep.subr.bf16.mxu0 0
        %2028 = vmatpush1.bf16.msra.mxu0 %v1672
        %2029 = vmatprep.subr.bf16.mxu0 0
        %2030 = vmatpush2.bf16.msra.mxu0 0
        %2031 = vmatprep.subr.bf16.mxu0 0
        %2032 = vmatpush2.bf16.msra.mxu0 0
        %2033 = vmatprep.subr.bf16.mxu0 0
        %2034 = vmatpush2.bf16.msra.mxu0 0
        %2035 = vmatprep.subr.bf16.mxu0 0
        %2036 = vmatpush2.bf16.msra.mxu0 0
        %2037 = vmatprep.subr.bf16.mxu0 0
        %2038 = vmatpush2.bf16.msra.mxu0 0
        %2039 = vmatprep.subr.bf16.mxu0 0
        %2040 = vmatpush2.bf16.msra.mxu0 0
        %2041 = vmatprep.subr.bf16.mxu0 0
        %2042 = vmatpush2.bf16.msra.mxu0 0
        %2043 = vmatprep.subr.bf16.mxu0 0
        %2044 = vmatpush2.bf16.msra.mxu0 0
        %2045 = vmatprep.mubr.bf16.mxu0 0
        %2046 = vmatmul.mubr.bf16.gmra.mxu0 %v2011
        %v2047 = vpop.f32.mrf.mxu0
        %v2048 = vadd.f32 %v2004, %v2047
        %v2049 = vpop.f32.mrf.mxu0
        %v2050 = vpop.f32.mrf.mxu0
        %v2051 = vadd.f32 %v2007, %v2050
        %v2052 = vpop.f32.mrf.mxu0
        %2053 = vdwg.mxu0
        %v2054 = vadd.f32 %v1205, %v1712
        %v2055 = vadd.f32 %v1206, %v1715
        %v2056 = vadd.f32 %v1207, %v2048
        %v2057 = vadd.f32 %v1208, %v2051
        %v2058 = vld [vmem:[%s915] sm:$0x1]
        %v2060 = vlaneseq
        %v2061 = vshrl.u32 %v2060, 7
        %v2062 = vsub.s32 0, %v2061
        %v2063 = vrot.slane %v2058, %v2062
        %v2065 = vadd.f32 %v2054, %v2063
        %v2066 = vadd.f32 %v2055, %v2063
        %v2067 = vadd.f32 %v2056, %v2063
        %v2068 = vadd.f32 %v2057, %v2063
        %v2069 = vld [vmem:[%s918] sm:$0x1]
        %v2070 = vld [vmem:[%s921] sm:$0x1]
        %v2071 = vsel %vm1211, %v2065, 0.0
        %2072 = vadd.xlane.f32.xlu0 %v2071
        %v2073 = vpop.xlane.xlu0 %2072
        %v2074 = vsel %vm1211, %v2066, 0.0
        %2075 = vadd.xlane.f32.xlu0 %v2074
        %v2076 = vpop.xlane.xlu0 %2075
        %v2077 = vsel %vm1211, %v2067, 0.0
        %2078 = vadd.xlane.f32.xlu0 %v2077
        %v2079 = vpop.xlane.xlu0 %2078
        %v2080 = vsel %vm1211, %v2068, 0.0
        %2081 = vadd.xlane.f32.xlu0 %v2080
        %v2082 = vpop.xlane.xlu0 %2081
        %v2083 = vmul.f32 %v2073, %v1224
        %v2084 = vmul.f32 %v2076, %v1224
        %v2085 = vmul.f32 %v2079, %v1224
        %v2086 = vmul.f32 %v2082, %v1224
        %v2087 = vsub.f32 %v2065, %v2083
        %v2088 = vsub.f32 %v2066, %v2084
        %v2089 = vsub.f32 %v2067, %v2085
        %v2090 = vsub.f32 %v2068, %v2086
        %v2091 = vmul.f32 %v2087, %v2087
        %v2092 = vmul.f32 %v2088, %v2088
        %v2093 = vmul.f32 %v2089, %v2089
        %v2094 = vmul.f32 %v2090, %v2090
        %v2095 = vsel %vm1211, %v2091, 0.0
        %2096 = vadd.xlane.f32.xlu0 %v2095
        %v2097 = vpop.xlane.xlu0 %2096
        %v2098 = vsel %vm1211, %v2092, 0.0
        %2099 = vadd.xlane.f32.xlu0 %v2098
        %v2100 = vpop.xlane.xlu0 %2099
        %v2101 = vsel %vm1211, %v2093, 0.0
        %2102 = vadd.xlane.f32.xlu0 %v2101
        %v2103 = vpop.xlane.xlu0 %2102
        %v2104 = vsel %vm1211, %v2094, 0.0
        %2105 = vadd.xlane.f32.xlu0 %v2104
        %v2106 = vpop.xlane.xlu0 %2105
        %v2107 = vmul.f32 %v2097, %v1224
        %v2108 = vmul.f32 %v2100, %v1224
        %v2109 = vmul.f32 %v2103, %v1224
        %v2110 = vmul.f32 %v2106, %v1224
        %v2111 = vadd.f32 %v2107, 1e-05
        %v2112 = vadd.f32 %v2108, 1e-05
        %v2113 = vadd.f32 %v2109, 1e-05
        %v2114 = vadd.f32 %v2110, 1e-05
        %v2115 = vrsqrt.pop %v2111
        %v2116 = vrsqrt.pop %v2112
        %v2117 = vrsqrt.pop %v2113
        %v2118 = vrsqrt.pop %v2114
        %v2119 = vmul.f32 %v2087, %v2115
        %v2120 = vmul.f32 %v2088, %v2116
        %v2121 = vmul.f32 %v2089, %v2117
        %v2122 = vmul.f32 %v2090, %v2118
        %v2124 = vlaneseq
        %v2125 = vshrl.u32 %v2124, 7
        %v2126 = vsub.s32 0, %v2125
        %v2127 = vrot.slane %v2069, %v2126
        %v2129 = vmul.f32 %v2119, %v2127
        %v2130 = vmul.f32 %v2120, %v2127
        %v2131 = vmul.f32 %v2121, %v2127
        %v2132 = vmul.f32 %v2122, %v2127
        %v2134 = vlaneseq
        %v2135 = vshrl.u32 %v2134, 7
        %v2136 = vsub.s32 0, %v2135
        %v2137 = vrot.slane %v2070, %v2136
        %v2139 = vadd.f32 %v2129, %v2137
        %v2140 = vadd.f32 %v2130, %v2137
        %v2141 = vadd.f32 %v2131, %v2137
        %v2142 = vadd.f32 %v2132, %v2137
        %v2143 = vpack.c.bf16 %v2140, %v2139
        %v2144 = vpack.c.bf16 %v2142, %v2141
        %v2145 = vld [vmem:[%s926] sm:$0xf]
        %v2146 = vld [vmem:[%s926 + $0x4] sm:$0xf]
        %v2147 = vld [vmem:[%s926 + $0x8] sm:$0xf]
        %v2148 = vld [vmem:[%s926 + $0xc] sm:$0xf]
        %v2149 = vld [vmem:[%s929] sm:$0x1]
        %v2151 = vlaneseq
        %v2152 = vshrl.u32 %v2151, 7
        %v2153 = vsub.s32 0, %v2152
        %v2154 = vrot.slane %v2149, %v2153
        %v2160 = vunpack.c.l.b16 %v2145
        %v2161 = vunpack.c.l.b16 %v2146
        %v2162 = vunpack.c.l.b16 %v2147
        %v2163 = vunpack.c.l.b16 %v2148
        %v2164 = vpack.c.b16 %v2161, %v2160
        %v2165 = vpack.c.b16 %v2163, %v2162
        %v2169 = vsel %vm1211, %v2143, 0
        %v2172 = vsel %vm1211, %v2144, 0
        %2174 = vmatprep.subr.bf16.mxu0 0
        %2175 = vmatpush1.bf16.msra.mxu0 0
        %2176 = vmatprep.subr.bf16.mxu0 0
        %2177 = vmatpush1.bf16.msra.mxu0 0
        %2178 = vmatprep.subr.bf16.mxu0 0
        %2179 = vmatpush1.bf16.msra.mxu0 0
        %2180 = vmatprep.subr.bf16.mxu0 0
        %2181 = vmatpush1.bf16.msra.mxu0 0
        %2182 = vmatprep.subr.bf16.mxu0 0
        %2183 = vmatpush1.bf16.msra.mxu0 0
        %2184 = vmatprep.subr.bf16.mxu0 0
        %2185 = vmatpush1.bf16.msra.mxu0 0
        %2186 = vmatprep.subr.bf16.mxu0 0
        %2187 = vmatpush1.bf16.msra.mxu0 %v2165
        %2188 = vmatprep.subr.bf16.mxu0 0
        %2189 = vmatpush1.bf16.msra.mxu0 %v2164
        %2190 = vmatprep.subr.bf16.mxu0 0
        %2191 = vmatpush2.bf16.msra.mxu0 0
        %2192 = vmatprep.subr.bf16.mxu0 0
        %2193 = vmatpush2.bf16.msra.mxu0 0
        %2194 = vmatprep.subr.bf16.mxu0 0
        %2195 = vmatpush2.bf16.msra.mxu0 0
        %2196 = vmatprep.subr.bf16.mxu0 0
        %2197 = vmatpush2.bf16.msra.mxu0 0
        %2198 = vmatprep.subr.bf16.mxu0 0
        %2199 = vmatpush2.bf16.msra.mxu0 0
        %2200 = vmatprep.subr.bf16.mxu0 0
        %2201 = vmatpush2.bf16.msra.mxu0 0
        %2202 = vmatprep.subr.bf16.mxu0 0
        %2203 = vmatpush2.bf16.msra.mxu0 0
        %2204 = vmatprep.subr.bf16.mxu0 0
        %2205 = vmatpush2.bf16.msra.mxu0 0
        %2206 = vmatprep.mubr.bf16.mxu0 0
        %2207 = vmatmul.mubr.bf16.gmra.mxu0 %v2169
        %v2208 = vpop.f32.mrf.mxu0
        %v2209 = vadd.f32 %v2154, %v2208
        %v2210 = vpop.f32.mrf.mxu0
        %v2211 = vpop.f32.mrf.mxu0
        %v2212 = vadd.f32 %v2154, %v2211
        %v2213 = vpop.f32.mrf.mxu0
        %2214 = vmatprep.mubr.bf16.mxu0 0
        %2215 = vmatmul.mubr.bf16.gmra.mxu0 %v2172
        %v2216 = vpop.f32.mrf.mxu0
        %v2217 = vadd.f32 %v2154, %v2216
        %v2218 = vpop.f32.mrf.mxu0
        %v2219 = vpop.f32.mrf.mxu0
        %v2220 = vadd.f32 %v2154, %v2219
        %v2221 = vpop.f32.mrf.mxu0
        %2222 = vdwg.mxu0
        %v2223 = vmul.f32 %v2209, %v2209
        %v2224 = vmul.f32 %v2212, %v2212
        %v2225 = vmul.f32 %v2217, %v2217
        %v2226 = vmul.f32 %v2220, %v2220
        %v2227 = vmul.f32 %v2209, %v2223
        %v2228 = vmul.f32 %v2212, %v2224
        %v2229 = vmul.f32 %v2217, %v2225
        %v2230 = vmul.f32 %v2220, %v2226
        %v2231 = vmul.f32 %v2227, 0.044715
        %v2232 = vmul.f32 %v2228, 0.044715
        %v2233 = vmul.f32 %v2229, 0.044715
        %v2234 = vmul.f32 %v2230, 0.044715
        %v2235 = vadd.f32 %v2209, %v2231
        %v2236 = vadd.f32 %v2212, %v2232
        %v2237 = vadd.f32 %v2217, %v2233
        %v2238 = vadd.f32 %v2220, %v2234
        %v2239 = vmul.f32 %v2235, 0.7978846
        %v2240 = vmul.f32 %v2236, 0.7978846
        %v2241 = vmul.f32 %v2237, 0.7978846
        %v2242 = vmul.f32 %v2238, 0.7978846
        %v2243 = vtanh.pop %v2239
        %v2244 = vtanh.pop %v2240
        %v2245 = vtanh.pop %v2241
        %v2246 = vtanh.pop %v2242
        %v2247 = vadd.f32 %v2243, 1.0
        %v2248 = vadd.f32 %v2244, 1.0
        %v2249 = vadd.f32 %v2245, 1.0
        %v2250 = vadd.f32 %v2246, 1.0
        %v2251 = vmul.f32 %v2247, 0.5
        %v2252 = vmul.f32 %v2248, 0.5
        %v2253 = vmul.f32 %v2249, 0.5
        %v2254 = vmul.f32 %v2250, 0.5
        %v2255 = vmul.f32 %v2209, %v2251
        %v2256 = vmul.f32 %v2212, %v2252
        %v2257 = vmul.f32 %v2217, %v2253
        %v2258 = vmul.f32 %v2220, %v2254
        %v2259 = vpack.c.bf16 %v2256, %v2255
        %v2260 = vpack.c.bf16 %v2258, %v2257
        %v2261 = vld [vmem:[%s934] sm:$0xf]
        %v2262 = vld [vmem:[%s934 + $0x4] sm:$0xf]
        %v2263 = vld [vmem:[%s934 + $0x8] sm:$0xf]
        %v2264 = vld [vmem:[%s934 + $0xc] sm:$0xf]
        %v2265 = vld [vmem:[%s934 + $0x10] sm:$0xf]
        %v2266 = vld [vmem:[%s934 + $0x14] sm:$0xf]
        %v2267 = vld [vmem:[%s934 + $0x18] sm:$0xf]
        %v2268 = vld [vmem:[%s934 + $0x1c] sm:$0xf]
        %v2269 = vld [vmem:[%s937] sm:$0x1]
        %v2271 = vlaneseq
        %v2272 = vshrl.u32 %v2271, 7
        %v2273 = vsub.s32 0, %v2272
        %v2274 = vrot.slane %v2269, %v2273
        %v2284 = vunpack.c.l.b16 %v2261
        %v2285 = vunpack.c.l.b16 %v2262
        %v2286 = vunpack.c.l.b16 %v2263
        %v2287 = vunpack.c.l.b16 %v2264
        %v2288 = vunpack.c.l.b16 %v2265
        %v2289 = vunpack.c.l.b16 %v2266
        %v2290 = vunpack.c.l.b16 %v2267
        %v2291 = vunpack.c.l.b16 %v2268
        %v2292 = vpack.c.b16 %v2285, %v2284
        %v2293 = vpack.c.b16 %v2287, %v2286
        %v2294 = vpack.c.b16 %v2289, %v2288
        %v2295 = vpack.c.b16 %v2291, %v2290
        %vm2300 = vcmask 523264
        %v2302 = vsel %vm2300, %v2259, 0
        %v2305 = vsel %vm2300, %v2260, 0
        %2307 = vmatprep.subr.bf16.mxu0 0
        %2308 = vmatpush1.bf16.msra.mxu0 0
        %2309 = vmatprep.subr.bf16.mxu0 0
        %2310 = vmatpush1.bf16.msra.mxu0 0
        %2311 = vmatprep.subr.bf16.mxu0 0
        %2312 = vmatpush1.bf16.msra.mxu0 0
        %2313 = vmatprep.subr.bf16.mxu0 0
        %2314 = vmatpush1.bf16.msra.mxu0 0
        %2315 = vmatprep.subr.bf16.mxu0 0
        %2316 = vmatpush1.bf16.msra.mxu0 %v2295
        %2317 = vmatprep.subr.bf16.mxu0 0
        %2318 = vmatpush1.bf16.msra.mxu0 %v2294
        %2319 = vmatprep.subr.bf16.mxu0 0
        %2320 = vmatpush1.bf16.msra.mxu0 %v2293
        %2321 = vmatprep.subr.bf16.mxu0 0
        %2322 = vmatpush1.bf16.msra.mxu0 %v2292
        %2323 = vmatprep.subr.bf16.mxu0 0
        %2324 = vmatpush2.bf16.msra.mxu0 0
        %2325 = vmatprep.subr.bf16.mxu0 0
        %2326 = vmatpush2.bf16.msra.mxu0 0
        %2327 = vmatprep.subr.bf16.mxu0 0
        %2328 = vmatpush2.bf16.msra.mxu0 0
        %2329 = vmatprep.subr.bf16.mxu0 0
        %2330 = vmatpush2.bf16.msra.mxu0 0
        %2331 = vmatprep.subr.bf16.mxu0 0
        %2332 = vmatpush2.bf16.msra.mxu0 0
        %2333 = vmatprep.subr.bf16.mxu0 0
        %2334 = vmatpush2.bf16.msra.mxu0 0
        %2335 = vmatprep.subr.bf16.mxu0 0
        %2336 = vmatpush2.bf16.msra.mxu0 0
        %2337 = vmatprep.subr.bf16.mxu0 0
        %2338 = vmatpush2.bf16.msra.mxu0 0
        %2339 = vmatprep.mubr.bf16.mxu0 0
        %2340 = vmatmul.mubr.bf16.gmra.mxu0 %v2302
        %v2341 = vpop.f32.mrf.mxu0
        %v2342 = vadd.f32 %v2274, %v2341
        %v2343 = vpop.f32.mrf.mxu0
        %v2344 = vpop.f32.mrf.mxu0
        %v2345 = vadd.f32 %v2274, %v2344
        %v2346 = vpop.f32.mrf.mxu0
        %2347 = vmatprep.mubr.bf16.mxu0 0
        %2348 = vmatmul.mubr.bf16.gmra.mxu0 %v2305
        %v2349 = vpop.f32.mrf.mxu0
        %v2350 = vadd.f32 %v2274, %v2349
        %v2351 = vpop.f32.mrf.mxu0
        %v2352 = vpop.f32.mrf.mxu0
        %v2353 = vadd.f32 %v2274, %v2352
        %v2354 = vpop.f32.mrf.mxu0
        %2355 = vdwg.mxu0
        %v2356 = vadd.f32 %v2065, %v2342
        %v2357 = vadd.f32 %v2066, %v2345
        %v2358 = vadd.f32 %v2067, %v2350
        %v2359 = vadd.f32 %v2068, %v2353
        %2360 = vst.msk [vmem:[#allocation2] sm:$0xff] %vm1211, %v2356
        %2361 = vst.msk [vmem:[#allocation2 + $0x8] sm:$0xff] %vm1211, %v2357
        %2362 = vst.msk [vmem:[#allocation2 + $0x10] sm:$0xff] %vm1211, %v2358
        %2363 = vst.msk [vmem:[#allocation2 + $0x18] sm:$0xff] %vm1211, %v2359
        %p2364 = scmp.eq.s32.totalorder %s41, 1
        // Predicated region
        $region121: #{vit_forward.1} parent=115 // pred_check
          %p2365 = pneg %p2364
        $region122: #{vit_forward.1} parent=115 // pred_check_branch
          %2367 = sbr.rel (%p2365) target = $region124
        $region123: #{vit_forward.1} parent=115 // pred_region
          %v2368 = vld [vmem:[%s20] sm:$0x1]
          %v2369 = vld [vmem:[%s21] sm:$0x1]
          %v2370 = vsel %vm1211, %v2356, 0.0
          %2371 = vadd.xlane.f32.xlu0 %v2370
          %v2372 = vpop.xlane.xlu0 %2371
          %v2373 = vsel %vm1211, %v2357, 0.0
          %2374 = vadd.xlane.f32.xlu0 %v2373
          %v2375 = vpop.xlane.xlu0 %2374
          %v2376 = vsel %vm1211, %v2358, 0.0
          %2377 = vadd.xlane.f32.xlu0 %v2376
          %v2378 = vpop.xlane.xlu0 %2377
          %v2379 = vsel %vm1211, %v2359, 0.0
          %2380 = vadd.xlane.f32.xlu0 %v2379
          %v2381 = vpop.xlane.xlu0 %2380
          %v2382 = vmul.f32 %v2372, %v1224
          %v2383 = vmul.f32 %v2375, %v1224
          %v2384 = vmul.f32 %v2378, %v1224
          %v2385 = vmul.f32 %v2381, %v1224
          %v2386 = vsub.f32 %v2356, %v2382
          %v2387 = vsub.f32 %v2357, %v2383
          %v2388 = vsub.f32 %v2358, %v2384
          %v2389 = vsub.f32 %v2359, %v2385
          %v2390 = vmul.f32 %v2386, %v2386
          %v2391 = vmul.f32 %v2387, %v2387
          %v2392 = vmul.f32 %v2388, %v2388
          %v2393 = vmul.f32 %v2389, %v2389
          %v2394 = vsel %vm1211, %v2390, 0.0
          %2395 = vadd.xlane.f32.xlu0 %v2394
          %v2396 = vpop.xlane.xlu0 %2395
          %v2397 = vsel %vm1211, %v2391, 0.0
          %2398 = vadd.xlane.f32.xlu0 %v2397
          %v2399 = vpop.xlane.xlu0 %2398
          %v2400 = vsel %vm1211, %v2392, 0.0
          %2401 = vadd.xlane.f32.xlu0 %v2400
          %v2402 = vpop.xlane.xlu0 %2401
          %v2403 = vsel %vm1211, %v2393, 0.0
          %2404 = vadd.xlane.f32.xlu0 %v2403
          %v2405 = vpop.xlane.xlu0 %2404
          %v2406 = vmul.f32 %v2396, %v1224
          %v2407 = vmul.f32 %v2399, %v1224
          %v2408 = vmul.f32 %v2402, %v1224
          %v2409 = vmul.f32 %v2405, %v1224
          %v2410 = vadd.f32 %v2406, 1e-05
          %v2411 = vadd.f32 %v2407, 1e-05
          %v2412 = vadd.f32 %v2408, 1e-05
          %v2413 = vadd.f32 %v2409, 1e-05
          %v2414 = vrsqrt.pop %v2410
          %v2415 = vrsqrt.pop %v2411
          %v2416 = vrsqrt.pop %v2412
          %v2417 = vrsqrt.pop %v2413
          %v2418 = vmul.f32 %v2386, %v2414
          %v2419 = vmul.f32 %v2387, %v2415
          %v2420 = vmul.f32 %v2388, %v2416
          %v2421 = vmul.f32 %v2389, %v2417
          %v2423 = vlaneseq
          %v2424 = vshrl.u32 %v2423, 7
          %v2425 = vsub.s32 0, %v2424
          %v2426 = vrot.slane %v2368, %v2425
          %v2428 = vmul.f32 %v2418, %v2426
          %v2429 = vmul.f32 %v2419, %v2426
          %v2430 = vmul.f32 %v2420, %v2426
          %v2431 = vmul.f32 %v2421, %v2426
          %v2433 = vlaneseq
          %v2434 = vshrl.u32 %v2433, 7
          %v2435 = vsub.s32 0, %v2434
          %v2436 = vrot.slane %v2369, %v2435
          %v2438 = vadd.f32 %v2428, %v2436
          %v2439 = vadd.f32 %v2429, %v2436
          %v2440 = vadd.f32 %v2430, %v2436
          %v2441 = vadd.f32 %v2431, %v2436
          %v2442 = vsel %vm1211, %v2438, 0.0
          %v2443 = vsel %vm1211, %v2439, 0.0
          %v2444 = vadd.f32 %v2442, %v2443
          %v2445 = vrot.slane %v2444, 4
          %v2446 = vadd.f32 %v2444, %v2445
          %v2447 = vrot.slane %v2446, 2
          %v2448 = vadd.f32 %v2446, %v2447
          %v2449 = vrot.slane %v2448, 1
          %v2450 = vadd.f32 %v2448, %v2449
          %v2451 = vsel %vm1211, %v2440, 0.0
          %v2452 = vsel %vm1211, %v2441, 0.0
          %v2453 = vadd.f32 %v2451, %v2452
          %v2454 = vrot.slane %v2453, 4
          %v2455 = vadd.f32 %v2453, %v2454
          %v2456 = vrot.slane %v2455, 2
          %v2457 = vadd.f32 %v2455, %v2456
          %v2458 = vrot.slane %v2457, 1
          %v2459 = vadd.f32 %v2457, %v2458
          %v2460 = vrcp.pop 16.0
          %v2461 = vmul.f32 %v2450, %v2460
          %v2462 = vmul.f32 %v2459, %v2460
          %v2463 = vpack.c.bf16 %v2461, %v2461
          %v2464 = vpack.c.bf16 %v2462, %v2462
          %v2465 = vld [vmem:[%s22] sm:$0xf]
          %v2466 = vld [vmem:[%s22 + $0x4] sm:$0xf]
          %v2467 = vld [vmem:[%s22 + $0x8] sm:$0xf]
          %v2468 = vld [vmem:[%s22 + $0xc] sm:$0xf]
          %v2469 = vld [vmem:[%s23] sm:$0x1]
          %v2471 = vlaneseq
          %v2472 = vshrl.u32 %v2471, 7
          %v2473 = vsub.s32 0, %v2472
          %v2474 = vrot.slane %v2469, %v2473
          %v2478 = vunpack.c.l.b16 %v2463
          %v2479 = vunpack.c.l.b16 %v2464
          %vm2480 = vcmask 1041409
          %v2481 = vsel %vm2480, %v2479, %v2478
          %v2482 = vpack.c.b16 %v2481, %v2481
          %v2487 = vunpack.c.l.b16 %v2465
          %v2488 = vunpack.c.l.b16 %v2466
          %v2489 = vunpack.c.l.b16 %v2467
          %v2490 = vunpack.c.l.b16 %v2468
          %v2491 = vpack.c.b16 %v2488, %v2487
          %v2492 = vpack.c.b16 %v2490, %v2489
          %v2496 = vsel %vm1211, %v2482, 0
          %2498 = vmatprep.subr.bf16.mxu0 0
          %2499 = vmatpush1.bf16.msra.mxu0 0
          %2500 = vmatprep.subr.bf16.mxu0 0
          %2501 = vmatpush1.bf16.msra.mxu0 0
          %2502 = vmatprep.subr.bf16.mxu0 0
          %2503 = vmatpush1.bf16.msra.mxu0 0
          %2504 = vmatprep.subr.bf16.mxu0 0
          %2505 = vmatpush1.bf16.msra.mxu0 0
          %2506 = vmatprep.subr.bf16.mxu0 0
          %2507 = vmatpush1.bf16.msra.mxu0 0
          %2508 = vmatprep.subr.bf16.mxu0 0
          %2509 = vmatpush1.bf16.msra.mxu0 0
          %2510 = vmatprep.subr.bf16.mxu0 0
          %2511 = vmatpush1.bf16.msra.mxu0 %v2492
          %2512 = vmatprep.subr.bf16.mxu0 0
          %2513 = vmatpush1.bf16.msra.mxu0 %v2491
          %2514 = vmatprep.subr.bf16.mxu0 0
          %2515 = vmatpush2.bf16.msra.mxu0 0
          %2516 = vmatprep.subr.bf16.mxu0 0
          %2517 = vmatpush2.bf16.msra.mxu0 0
          %2518 = vmatprep.subr.bf16.mxu0 0
          %2519 = vmatpush2.bf16.msra.mxu0 0
          %2520 = vmatprep.subr.bf16.mxu0 0
          %2521 = vmatpush2.bf16.msra.mxu0 0
          %2522 = vmatprep.subr.bf16.mxu0 0
          %2523 = vmatpush2.bf16.msra.mxu0 0
          %2524 = vmatprep.subr.bf16.mxu0 0
          %2525 = vmatpush2.bf16.msra.mxu0 0
          %2526 = vmatprep.subr.bf16.mxu0 0
          %2527 = vmatpush2.bf16.msra.mxu0 0
          %2528 = vmatprep.subr.bf16.mxu0 0
          %2529 = vmatpush2.bf16.msra.mxu0 0
          %2530 = vmatprep.mubr.bf16.mxu0 0
          %2531 = vmatmul.mubr.bf16.gmra.mxu0 %v2496
          %v2532 = vpop.f32.mrf.mxu0
          %v2533 = vadd.f32 %v2474, %v2532
          %v2534 = vpop.f32.mrf.mxu0
          %v2535 = vpop.f32.mrf.mxu0
          %v2536 = vpop.f32.mrf.mxu0
          %2537 = vdwg.mxu0
          %2538 = vst [vmem:[#allocation3] sm:$0x3] %v2533
        $region124: #{vit_forward.1} parent=115 // pred_fallthru
          _
        // Predicated region
        $region125: #{vit_forward.1} parent=115 // pred_check
          %p2539 = pneg %p635
        $region126: #{vit_forward.1} parent=115 // pred_check_branch
          %2541 = sbr.rel (%p2539) target = $region128
        $region127: #{vit_forward.1} parent=115 // pred_region
          %s2543 = ssub.s32 32, 32
          %2544 = vsyncadd [#allocation4], %s2543
          %s2545 = smul.addr %s40, 32
          %s2546 = scalar_lea.hbm %s24, %s2545
          %s2548 = sshll.u32 [#allocation3], 4
          %s2549 = int_to_ptr.vmem [resolvable:$true] %s2548
          %2551 = dma.vmem_to_hbm [thread:$0]  %s2549, 32, %s2546, [#allocation4]
        $region128: #{vit_forward.1} parent=115 // pred_fallthru
          _
        // Predicated region
        $region129: #{vit_forward.1} parent=115 // pred_check
          %p2552 = pneg %p635
        $region130: #{vit_forward.1} parent=115 // pred_check_branch
          %2554 = sbr.rel (%p2552) target = $region132
        $region131: #{vit_forward.1} parent=115 // pred_region
          %2555 = dma.done [#allocation4], 32
        $region132: #{vit_forward.1} parent=115 // pred_fallthru
          _
      $region116: #{vit_forward.1} parent=5 // pred_fallthru
        _
      %p2556 = scmp.le.s32.totalorder 2, %s31
      // Predicated region
      $region133: #{vit_forward.1} parent=5 // pred_check
        %p2557 = pneg %p2556
      $region134: #{vit_forward.1} parent=5 // pred_check_branch
        %2559 = sbr.rel (%p2557) target = $region136
      $region135: #{vit_forward.1} parent=5 // pred_region
        %s2560 = ssub.s32 %s31, 2
      $region136: #{vit_forward.1} parent=5 // pred_fallthru
        _
    $region6: #{vit_forward.1} parent=1 // loop_footer
      %s35 = sadd.s32 1, %s31
    $region7: #{vit_forward.1} parent=1 // loop_footer_branch
      %30 = sbr.rel target = $region3
    $region8: #{vit_forward.1} parent=1 // loop_exit
      _
    %2561 = vsyncpa [#allocation4], 1
    %s2562 = scalar_lea.sflag [#allocation4], 1
    %2563 = vsyncpa %s2562, 1

</llo_original>
